<compile_context>
chip_gen: v5e
topology: v5e:2x2
jax: 0.10.0
libtpu: 0.0.40
codegen_flags: <defaults>
</compile_context>

<pallas_src>
import jax
import jax.numpy as jnp
from jax import lax
from jax.experimental import pallas as pl
from jax.experimental.pallas import tpu as pltpu


# ----------------------------------------------------------------------------
# Tiling helpers (generation-aware VMEM budget, no padding).
# ----------------------------------------------------------------------------

_MAX_BLOCK_ROWS = 4096   # hard cap on batch-tile rows
_NUM_CORES = 2           # leading "parallel" grid axis: both TCs on v7x,
                         # serial (and nearly free) on 1-TC v5e/v6e


def _vmem_capacity_bytes():
    """Physical VMEM of the local chip (fallback: v7x's 64 MiB, the smallest)."""
    try:
        return int(pltpu.get_tpu_info().vmem_capacity_bytes)
    except Exception:
        return 64 * 1024 * 1024


def _per_copy_input_budget():
    # Single-buffered per-step input bytes.  Double-buffering doubles it, so
    # keep ~3/16 of physical VMEM for comfortable headroom on every chip:
    #   v7x     (64 MiB physical)  -> 12 MiB/step, 24 MiB double-buffered
    #   v5e/v6e (128 MiB physical) -> 24 MiB/step, 48 MiB double-buffered
    return max(4 * 1024 * 1024, _vmem_capacity_bytes() * 3 // 16)


def _choose_tile_rows(batch, row_bytes, sub_mult, tile_cap):
    """Batch-tile rows: either the full batch (single tile, block == array dim)
    or a sub_mult multiple fitting the VMEM budget (ragged last tile masked)."""
    cap = _per_copy_input_budget() // max(int(row_bytes), 1)
    cap = min(cap, _MAX_BLOCK_ROWS)
    if tile_cap is not None:
        cap = min(cap, int(tile_cap))
    cap = max(sub_mult, (cap // sub_mult) * sub_mult)
    b = int(batch)
    if cap >= b:
        return b            # one tile covering the whole batch exactly
    return cap              # multiple of sub_mult; last tile masked in-kernel


# ----------------------------------------------------------------------------
# Per-tile value functions (return per-element / per-row f32 values to sum).
# ----------------------------------------------------------------------------

def _mse_tile(a, b):
    d = a.astype(jnp.float32) - b.astype(jnp.float32)
    return d * d                                   # (tb, D)


def _l1_tile(a, b):
    d = a.astype(jnp.float32) - b.astype(jnp.float32)
    return jnp.abs(d)                              # (tb, D)


def _ce_tile(logits, picked):
    # picked = logits[row, class] gathered in the wrapper; identical numerics
    # to log-softmax CE:  logsumexp(x) - x[class].
    x = logits.astype(jnp.float32)
    xmax = jnp.max(x, axis=-1, keepdims=True)
    lse = xmax + jnp.log(jnp.sum(jnp.exp(x - xmax), axis=-1, keepdims=True))
    return lse - picked.astype(jnp.float32)        # (tb, 1)


# ----------------------------------------------------------------------------
# Generic fused multi-task sum-reduction kernel.
# ----------------------------------------------------------------------------

def _build_sum_kernel(n_rows, tile_rows, tiles_per_core, tile_fns):
    n_tasks = len(tile_fns)

    def kernel(*refs):
        in_refs = refs[:2 * n_tasks]
        sums_ref = refs[2 * n_tasks]
        accs = refs[2 * n_tasks + 1:]

        core = pl.program_id(0)
        step = pl.program_id(1)
        row0 = (core * tiles_per_core + step) * tile_rows

        @pl.when(step == 0)
        def _init():
            for acc in accs:
                acc[...] = jnp.zeros_like(acc)

        def accumulate(mask):
            for t in range(n_tasks):
                vals = tile_fns[t](in_refs[2 * t][...], in_refs[2 * t + 1][...])
                if mask is not None:
                    vals = jnp.where(mask, vals, 0.0)
                # Lane-parallel accumulation: VALU adds + one sublane reduce
                # per step; the cross-lane reduce happens once, in finalize.
                accs[t][...] += jnp.sum(vals, axis=0, keepdims=True)

        is_full = row0 + tile_rows <= n_rows

        @pl.when(is_full)
        def _full_tile():                           # full tiles pay no mask work
            accumulate(None)

        @pl.when(jnp.logical_not(is_full))
        def _ragged_tile():                         # ragged / surplus-core tile
            rows = lax.broadcasted_iota(jnp.int32, (tile_rows, 1), 0)
            accumulate((row0 + rows) < n_rows)

        @pl.when(step == tiles_per_core - 1)
        def _finalize():
            lane = lax.broadcasted_iota(jnp.int32, (8, 128), 1)
            slab = jnp.zeros((8, 128), jnp.float32)
            for t in range(n_tasks):
                total_t = jnp.sum(accs[t][...], keepdims=True)   # (1, 1)
                slab = jnp.where(lane == t, total_t, slab)
            sums_ref[0] = slab                      # lane-dense (8,128) write

    return kernel


def _tiled_task_sums(tasks, tile_cap=None):
    """tasks: list of (a_2d, b_2d, tile_fn, acc_width).  Returns (n_tasks,) sums."""
    n_tasks = len(tasks)
    arrays = []
    for a, b, _, _ in tasks:
        arrays.extend((a, b))
    n_rows = int(arrays[0].shape[0])

    row_bytes = sum(int(x.shape[1]) * x.dtype.itemsize for x in arrays)
    # Sub-32-bit dtypes pack along sublanes: round tiles to the packing factor.
    sub_mult = max(8, 32 // min(int(x.dtype.itemsize) for x in arrays))
    tile_rows = _choose_tile_rows(n_rows, row_bytes, sub_mult, tile_cap)

    n_tiles = -(-n_rows // tile_rows)
    num_cores = min(_NUM_CORES, n_tiles)
    tiles_per_core = -(-n_tiles // num_cores)
    # If num_cores does not divide n_tiles, surplus steps on the last core clamp
    # to the final tile and are fully row-masked (contribute zero); on a 1-TC
    # chip that costs at most one redundant tile re-read.

    def batch_map(c, s):
        return (jnp.minimum(c * tiles_per_core + s, n_tiles - 1), 0)

    in_specs = [pl.BlockSpec((tile_rows, int(x.shape[1])), batch_map)
                for x in arrays]
    scratch = [pltpu.VMEM((1, int(w)), jnp.float32) for (_, _, _, w) in tasks]

    step_bytes = tile_rows * row_bytes
    vmem_limit = int(min(_vmem_capacity_bytes() * 7 // 8,
                         max(32 * 1024 * 1024, 2 * step_bytes + (8 << 20))))

    sums = pl.pallas_call(
        _build_sum_kernel(n_rows, tile_rows, tiles_per_core,
                          [t[2] for t in tasks]),
        out_shape=jax.ShapeDtypeStruct((num_cores, 8, 128), jnp.float32),
        grid_spec=pltpu.PrefetchScalarGridSpec(
            num_scalar_prefetch=0,
            grid=(num_cores, tiles_per_core),
            in_specs=in_specs,
            out_specs=pl.BlockSpec((1, 8, 128), lambda c, s: (c, 0, 0)),
            scratch_shapes=scratch,
        ),
        # Batch tiles are a reduction into resident accumulators ("arbitrary");
        # the leading axis splits tiles across TensorCores on v7x ("parallel").
        compiler_params=pltpu.CompilerParams(
            dimension_semantics=("parallel", "arbitrary"),
            vmem_limit_bytes=vmem_limit),
    )(*arrays)

    return jnp.sum(sums[:, 0, :n_tasks], axis=0)    # (n_tasks,) per-task sums


# ----------------------------------------------------------------------------
# Loss implementations (fused three-task path + standalone per-task kernels).
# ----------------------------------------------------------------------------

def _fused_losses_impl(out0, tgt0, logits, cls_idx, out2, tgt2, tile_cap=None):
    b = out0.shape[0]
    o0 = out0.reshape(b, -1)
    t0 = tgt0.reshape(b, -1)
    x = logits.reshape(b, -1)
    o2 = out2.reshape(b, -1)
    t2 = tgt2.reshape(b, -1)
    cls = cls_idx.reshape(b, 1).astype(jnp.int32)
    # TODO(synk): out-of-range class indices clamp (XLA gather semantics)
    # instead of raising like PyTorch's CrossEntropyLoss.
    picked = jnp.take_along_axis(x, cls, axis=-1).astype(jnp.float32)  # (B, 1)

    sums = _tiled_task_sums(
        [(o0, t0, _mse_tile, o0.shape[1]),
         (x, picked, _ce_tile, 1),
         (o2, t2, _l1_tile, o2.shape[1])],
        tile_cap=tile_cap)
    mse = sums[0] / jnp.float32(o0.size)
    ce = sums[1] / jnp.float32(b)
    l1 = sums[2] / jnp.float32(o2.size)
    return jnp.stack([mse, ce, l1])


_fused_losses = jax.jit(_fused_losses_impl, static_argnames=("tile_cap",))


def _mse_loss_impl(output, target, tile_cap=None):
    o = output.reshape(output.shape[0], -1)
    t = target.reshape(target.shape[0], -1)
    s = _tiled_task_sums([(o, t, _mse_tile, o.shape[1])], tile_cap=tile_cap)
    return s[0] / jnp.float32(o.size)


def _l1_loss_impl(output, target, tile_cap=None):
    o = output.reshape(output.shape[0], -1)
    t = target.reshape(target.shape[0], -1)
    s = _tiled_task_sums([(o, t, _l1_tile, o.shape[1])], tile_cap=tile_cap)
    return s[0] / jnp.float32(o.size)


def _ce_loss_impl(logits, target_idx, tile_cap=None):
    b = logits.shape[0]
    x = logits.reshape(b, -1)
    cls = target_idx.reshape(b, 1).astype(jnp.int32)
    picked = jnp.take_along_axis(x, cls, axis=-1).astype(jnp.float32)
    s = _tiled_task_sums([(x, picked, _ce_tile, 1)], tile_cap=tile_cap)
    return s[0] / jnp.float32(b)


_mse_jit = jax.jit(_mse_loss_impl, static_argnames=("tile_cap",))
_l1_jit = jax.jit(_l1_loss_impl, static_argnames=("tile_cap",))
_ce_jit = jax.jit(_ce_loss_impl, static_argnames=("tile_cap",))


def mse_loss(output, target, tile_cap=None):
    return _mse_jit(output, target, tile_cap=tile_cap)


def cross_entropy_loss(logits, target_idx, tile_cap=None):
    return _ce_jit(logits, target_idx, tile_cap=tile_cap)


def l1_loss(output, target, tile_cap=None):
    return _l1_jit(output, target, tile_cap=tile_cap)


mse_loss.kind = "mse"
cross_entropy_loss.kind = "cross_entropy"
l1_loss.kind = "l1"


# ----------------------------------------------------------------------------
# MultiTaskLoss: faithful port of the PyTorch forward loop, dispatching a
# single fused pallas_call when the (mse, cross_entropy, l1) config allows it.
# ----------------------------------------------------------------------------

class MultiTaskLoss:
    def __init__(self, task_configs):
        # TODO(synk): arbitrary torch nn.Module loss_funcs have no Pallas
        # equivalent; loss_funcs must be JAX callables (the ones above fuse).
        self.loss_funcs = [cfg["loss_func"] for cfg in task_configs]
        self.loss_weights = [cfg.get("weight", 1.0) for cfg in task_configs]
        self.loss_names = [cfg.get("name", f"task_{i}_loss")
                           for i, cfg in enumerate(task_configs)]
        kinds = tuple(getattr(f, "kind", None) for f in self.loss_funcs)
        self._fusable = kinds == ("mse", "cross_entropy", "l1")

    def _can_fuse(self, outputs, targets):
        if not self._fusable or len(outputs) != 3:
            return False
        b = outputs[0].shape[0]
        return (all(o.shape[0] == b for o in outputs)
                and all(t.shape[0] == b for t in targets))

    def __call__(self, outputs, targets, get_loss_dict=False):
        if len(outputs) != len(targets):
            raise ValueError("The number of outputs and targets must be the same.")

        if self._can_fuse(outputs, targets):
            # Single fused pallas_call for all three tasks (one pass over HBM).
            losses = _fused_losses(outputs[0], targets[0],
                                   outputs[1], targets[1],
                                   outputs[2], targets[2])
            per_task = [losses[0], losses[1], losses[2]]
        else:
            per_task = [f(o, t) for f, o, t in
                        zip(self.loss_funcs, outputs, targets)]

        total_loss = 0.0
        for loss, weight in zip(per_task, self.loss_weights):
            if weight != 1.0:
                loss = loss * weight
            total_loss = total_loss + loss

        if get_loss_dict:
            # One device->host sync for all per-task scalars (mirrors .item()).
            host = jax.device_get(jnp.stack(per_task))
            loss_dict = {name: float(v)
                         for name, v in zip(self.loss_names, host)}
            return total_loss, loss_dict
        return total_loss


# ----------------------------------------------------------------------------
# Demo / smoke test.
# ----------------------------------------------------------------------------

if __name__ == "__main__":
    key = jax.random.PRNGKey(0)
    kx1, kt1, kx2, kt2, kx3, kt3 = jax.random.split(key, 6)

    # Small data, but B=600 (not 8-aligned) so masking / ragged paths run.
    B, D0, C, D2 = 600, 96, 40, 64

    out0 = jax.random.normal(kx1, (B, D0), dtype=jnp.float32)   # MSE task
    tgt0 = jax.random.normal(kt1, (B, D0), dtype=jnp.float32)
    out1 = jax.random.normal(kx2, (B, C), dtype=jnp.float32)    # CE task
    tgt1 = jax.random.randint(kt2, (B,), 0, C, dtype=jnp.int32)
    out2 = jax.random.normal(kx3, (B, D2), dtype=jnp.float32)   # L1 task
    tgt2 = jax.random.normal(kt3, (B, D2), dtype=jnp.float32)

    task_configs = [
        {"loss_func": mse_loss, "weight": 1.0, "name": "mse_loss"},
        {"loss_func": cross_entropy_loss, "weight": 0.5, "name": "ce_loss"},
        {"loss_func": l1_loss, "weight": 2.0, "name": "l1_loss"},
    ]
    multi_loss = MultiTaskLoss(task_configs)

    total, loss_dict = multi_loss([out0, out1, out2], [tgt0, tgt1, tgt2],
                                  get_loss_dict=True)
    total = jax.block_until_ready(total)

    # Pure-JAX reference.
    ref_mse = jnp.mean((out0 - tgt0) ** 2)
    ref_ce = jnp.mean(jax.nn.logsumexp(out1, axis=-1) - out1[jnp.arange(B), tgt1])
    ref_l1 = jnp.mean(jnp.abs(out2 - tgt2))
    ref_total = ref_mse + 0.5 * ref_ce + 2.0 * ref_l1

    assert jnp.allclose(total, ref_total, rtol=1e-4, atol=1e-4), (total, ref_total)
    assert abs(loss_dict["mse_loss"] - float(ref_mse)) < 2e-4
    assert abs(loss_dict["ce_loss"] - float(ref_ce)) < 2e-4
    assert abs(loss_dict["l1_loss"] - float(ref_l1)) < 2e-4

    # Multi-tile + ragged-last-tile + dual-core-clamp path (tiny forced tile).
    losses_small_tiles = jax.block_until_ready(
        _fused_losses(out0, tgt0, out1, tgt1, out2, tgt2, tile_cap=64))
    ref_vec = jnp.stack([ref_mse, ref_ce, ref_l1])
    assert jnp.allclose(losses_small_tiles, ref_vec, rtol=1e-4, atol=1e-4)

    # Standalone per-task kernels (generic fallback path).
    assert jnp.allclose(mse_loss(out0, tgt0), ref_mse, rtol=1e-4, atol=1e-4)
    assert jnp.allclose(cross_entropy_loss(out1, tgt1), ref_ce, rtol=1e-4, atol=1e-4)
    assert jnp.allclose(l1_loss(out2, tgt2), ref_l1, rtol=1e-4, atol=1e-4)
    assert jnp.allclose(l1_loss(out2, tgt2, tile_cap=64), ref_l1,
                        rtol=1e-4, atol=1e-4)

    # Total-only path (no loss dict, no host sync).
    total_only = jax.block_until_ready(
        multi_loss([out0, out1, out2], [tgt0, tgt1, tgt2]))
    assert jnp.allclose(total_only, ref_total, rtol=1e-4, atol=1e-4)

    print("KERNEL_OK")
</pallas_src>

<mosaic_0001>
module attributes {stable_mosaic.version = 11 : i64} {
  func.func @kernel(%arg0: i32, %arg1: i32, %arg2: memref<600x96xf32, #tpu.memory_space<vmem>>, %arg3: memref<600x96xf32, #tpu.memory_space<vmem>>, %arg4: memref<600x40xf32, #tpu.memory_space<vmem>>, %arg5: memref<600x1xf32, #tpu.memory_space<vmem>>, %arg6: memref<600x64xf32, #tpu.memory_space<vmem>>, %arg7: memref<600x64xf32, #tpu.memory_space<vmem>>, %arg8: memref<1x8x128xf32, #tpu.memory_space<vmem>>, %arg9: memref<1x96xf32, #tpu.memory_space<vmem>>, %arg10: memref<1x1xf32, #tpu.memory_space<vmem>>, %arg11: memref<1x64xf32, #tpu.memory_space<vmem>>) attributes {dimension_semantics = [#tpu.dimension_semantics<parallel>, #tpu.dimension_semantics<arbitrary>], iteration_bounds = array<i64: 1, 1>, scalar_prefetch = 0 : i64, scratch_operands = 3 : i64, tpu.core_type = #tpu.core_type<tc>, window_params = [{transform_indices = @transform_0, window_bounds = array<i64: 600, 96>}, {transform_indices = @transform_1, window_bounds = array<i64: 600, 96>}, {transform_indices = @transform_2, window_bounds = array<i64: 600, 40>}, {transform_indices = @transform_3, window_bounds = array<i64: 600, 1>}, {transform_indices = @transform_4, window_bounds = array<i64: 600, 64>}, {transform_indices = @transform_5, window_bounds = array<i64: 600, 64>}, {transform_indices = @transform_6, window_bounds = array<i64: 1, 8, 128>}]} {
    %c1_i32 = arith.constant 1 : i32
    %0 = arith.muli %arg0, %c1_i32 : i32
    %1 = arith.addi %0, %arg1 : i32
    %c600_i32 = arith.constant 600 : i32
    %2 = arith.muli %1, %c600_i32 : i32
    %c0_i32 = arith.constant 0 : i32
    %3 = arith.cmpi eq, %arg1, %c0_i32 : i32
    %4 = arith.extui %3 : i1 to i32
    %c0_i32_0 = arith.constant 0 : i32
    %5 = arith.cmpi ne, %4, %c0_i32_0 : i32
    scf.if %5 {
      %cst = arith.constant 0.000000e+00 : f32
      %16 = vector.broadcast %cst : f32 to vector<1x96xf32>
      %c0 = arith.constant 0 : index
      %c0_7 = arith.constant 0 : index
      %17 = vector.load %arg9[%c0, %c0_7] : memref<1x96xf32, #tpu.memory_space<vmem>>, vector<1x96xf32>
      tpu.vector_store %arg9[%c0, %c0_7], %16 {strides = array<i32>} : memref<1x96xf32, #tpu.memory_space<vmem>>, vector<1x96xf32>,
      %cst_8 = arith.constant 0.000000e+00 : f32
      %18 = vector.broadcast %cst_8 : f32 to vector<1x1xf32>
      %c0_9 = arith.constant 0 : index
      %c0_10 = arith.constant 0 : index
      %19 = vector.load %arg10[%c0_9, %c0_10] : memref<1x1xf32, #tpu.memory_space<vmem>>, vector<1x1xf32>
      tpu.vector_store %arg10[%c0_9, %c0_10], %18 {strides = array<i32>} : memref<1x1xf32, #tpu.memory_space<vmem>>, vector<1x1xf32>,
      %cst_11 = arith.constant 0.000000e+00 : f32
      %20 = vector.broadcast %cst_11 : f32 to vector<1x64xf32>
      %c0_12 = arith.constant 0 : index
      %c0_13 = arith.constant 0 : index
      %21 = vector.load %arg11[%c0_12, %c0_13] : memref<1x64xf32, #tpu.memory_space<vmem>>, vector<1x64xf32>
      tpu.vector_store %arg11[%c0_12, %c0_13], %20 {strides = array<i32>} : memref<1x64xf32, #tpu.memory_space<vmem>>, vector<1x64xf32>,
    } else {
    }
    %c600_i32_1 = arith.constant 600 : i32
    %6 = arith.addi %2, %c600_i32_1 : i32
    %c600_i32_2 = arith.constant 600 : i32
    %7 = arith.cmpi sle, %6, %c600_i32_2 : i32
    %8 = arith.extui %7 : i1 to i32
    %c0_i32_3 = arith.constant 0 : i32
    %9 = arith.cmpi ne, %8, %c0_i32_3 : i32
    scf.if %9 {
      %c0 = arith.constant 0 : index
      %c0_7 = arith.constant 0 : index
      %16 = vector.load %arg2[%c0, %c0_7] : memref<600x96xf32, #tpu.memory_space<vmem>>, vector<600x96xf32>
      %c0_8 = arith.constant 0 : index
      %c0_9 = arith.constant 0 : index
      %17 = vector.load %arg3[%c0_8, %c0_9] : memref<600x96xf32, #tpu.memory_space<vmem>>, vector<600x96xf32>
      %18 = arith.subf %16, %17 : vector<600x96xf32>
      %19 = arith.mulf %18, %18 : vector<600x96xf32>
      %c0_10 = arith.constant 0 : index
      %c0_11 = arith.constant 0 : index
      %20 = vector.load %arg9[%c0_10, %c0_11] : memref<1x96xf32, #tpu.memory_space<vmem>>, vector<1x96xf32>
      %cst = arith.constant dense<0.000000e+00> : vector<96xf32>
      %21 = vector.multi_reduction <add>, %19, %cst [0] : vector<600x96xf32> to vector<96xf32>
      %22 = vector.shape_cast %21 : vector<96xf32> to vector<1x96xf32>
      %23 = arith.addf %20, %22 : vector<1x96xf32>
      %c0_12 = arith.constant 0 : index
      %c0_13 = arith.constant 0 : index
      %24 = vector.load %arg9[%c0_12, %c0_13] : memref<1x96xf32, #tpu.memory_space<vmem>>, vector<1x96xf32>
      tpu.vector_store %arg9[%c0_12, %c0_13], %23 {strides = array<i32>} : memref<1x96xf32, #tpu.memory_space<vmem>>, vector<1x96xf32>,
      %c0_14 = arith.constant 0 : index
      %c0_15 = arith.constant 0 : index
      %25 = vector.load %arg4[%c0_14, %c0_15] : memref<600x40xf32, #tpu.memory_space<vmem>>, vector<600x40xf32>
      %c0_16 = arith.constant 0 : index
      %c0_17 = arith.constant 0 : index
      %26 = vector.load %arg5[%c0_16, %c0_17] : memref<600x1xf32, #tpu.memory_space<vmem>>, vector<600x1xf32>
      %cst_18 = arith.constant dense<0xFF800000> : vector<600xf32>
      %27 = vector.multi_reduction <maximumf>, %25, %cst_18 [1] : vector<600x40xf32> to vector<600xf32>
      %28 = vector.shape_cast %27 : vector<600xf32> to vector<600x1xf32>
      %29 = vector.broadcast %28 : vector<600x1xf32> to vector<600x40xf32>
      %30 = arith.subf %25, %29 : vector<600x40xf32>
      %31 = math.exp %30 : vector<600x40xf32>
      %cst_19 = arith.constant dense<0.000000e+00> : vector<600xf32>
      %32 = vector.multi_reduction <add>, %31, %cst_19 [1] : vector<600x40xf32> to vector<600xf32>
      %33 = vector.shape_cast %32 : vector<600xf32> to vector<600x1xf32>
      %34 = math.log %33 : vector<600x1xf32>
      %35 = arith.addf %28, %34 : vector<600x1xf32>
      %36 = arith.subf %35, %26 : vector<600x1xf32>
      %c0_20 = arith.constant 0 : index
      %c0_21 = arith.constant 0 : index
      %37 = vector.load %arg10[%c0_20, %c0_21] : memref<1x1xf32, #tpu.memory_space<vmem>>, vector<1x1xf32>
      %cst_22 = arith.constant dense<0.000000e+00> : vector<1xf32>
      %38 = vector.multi_reduction <add>, %36, %cst_22 [0] : vector<600x1xf32> to vector<1xf32>
      %39 = vector.shape_cast %38 : vector<1xf32> to vector<1x1xf32>
      %40 = arith.addf %37, %39 : vector<1x1xf32>
      %c0_23 = arith.constant 0 : index
      %c0_24 = arith.constant 0 : index
      %41 = vector.load %arg10[%c0_23, %c0_24] : memref<1x1xf32, #tpu.memory_space<vmem>>, vector<1x1xf32>
      tpu.vector_store %arg10[%c0_23, %c0_24], %40 {strides = array<i32>} : memref<1x1xf32, #tpu.memory_space<vmem>>, vector<1x1xf32>,
      %c0_25 = arith.constant 0 : index
      %c0_26 = arith.constant 0 : index
      %42 = vector.load %arg6[%c0_25, %c0_26] : memref<600x64xf32, #tpu.memory_space<vmem>>, vector<600x64xf32>
      %c0_27 = arith.constant 0 : index
      %c0_28 = arith.constant 0 : index
      %43 = vector.load %arg7[%c0_27, %c0_28] : memref<600x64xf32, #tpu.memory_space<vmem>>, vector<600x64xf32>
      %44 = arith.subf %42, %43 : vector<600x64xf32>
      %45 = math.absf %44 : vector<600x64xf32>
      %c0_29 = arith.constant 0 : index
      %c0_30 = arith.constant 0 : index
      %46 = vector.load %arg11[%c0_29, %c0_30] : memref<1x64xf32, #tpu.memory_space<vmem>>, vector<1x64xf32>
      %cst_31 = arith.constant dense<0.000000e+00> : vector<64xf32>
      %47 = vector.multi_reduction <add>, %45, %cst_31 [0] : vector<600x64xf32> to vector<64xf32>
      %48 = vector.shape_cast %47 : vector<64xf32> to vector<1x64xf32>
      %49 = arith.addf %46, %48 : vector<1x64xf32>
      %c0_32 = arith.constant 0 : index
      %c0_33 = arith.constant 0 : index
      %50 = vector.load %arg11[%c0_32, %c0_33] : memref<1x64xf32, #tpu.memory_space<vmem>>, vector<1x64xf32>
      tpu.vector_store %arg11[%c0_32, %c0_33], %49 {strides = array<i32>} : memref<1x64xf32, #tpu.memory_space<vmem>>, vector<1x64xf32>,
    } else {
    }
    %true = arith.constant true
    %10 = arith.xori %7, %true : i1
    %11 = arith.extui %10 : i1 to i32
    %c0_i32_4 = arith.constant 0 : i32
    %12 = arith.cmpi ne, %11, %c0_i32_4 : i32
    scf.if %12 {
      %16 = tpu.iota {dimensions = array<i32: 0>} : vector<600x1xi32>
      %17 = vector.broadcast %2 : i32 to vector<600x1xi32>
      %18 = arith.addi %17, %16 : vector<600x1xi32>
      %c600_i32_7 = arith.constant 600 : i32
      %19 = vector.broadcast %c600_i32_7 : i32 to vector<600x1xi32>
      %20 = arith.cmpi slt, %18, %19 : vector<600x1xi32>
      %c0 = arith.constant 0 : index
      %c0_8 = arith.constant 0 : index
      %21 = vector.load %arg2[%c0, %c0_8] : memref<600x96xf32, #tpu.memory_space<vmem>>, vector<600x96xf32>
      %c0_9 = arith.constant 0 : index
      %c0_10 = arith.constant 0 : index
      %22 = vector.load %arg3[%c0_9, %c0_10] : memref<600x96xf32, #tpu.memory_space<vmem>>, vector<600x96xf32>
      %23 = arith.subf %21, %22 : vector<600x96xf32>
      %24 = arith.mulf %23, %23 : vector<600x96xf32>
      %cst = arith.constant 0.000000e+00 : f32
      %25 = vector.shape_cast %20 : vector<600x1xi1> to vector<600x1xi1>
      %26 = vector.broadcast %25 : vector<600x1xi1> to vector<600x96xi1>
      %27 = vector.broadcast %cst : f32 to vector<600x96xf32>
      %28 = arith.select %26, %24, %27 : vector<600x96xi1>, vector<600x96xf32>
      %c0_11 = arith.constant 0 : index
      %c0_12 = arith.constant 0 : index
      %29 = vector.load %arg9[%c0_11, %c0_12] : memref<1x96xf32, #tpu.memory_space<vmem>>, vector<1x96xf32>
      %cst_13 = arith.constant dense<0.000000e+00> : vector<96xf32>
      %30 = vector.multi_reduction <add>, %28, %cst_13 [0] : vector<600x96xf32> to vector<96xf32>
      %31 = vector.shape_cast %30 : vector<96xf32> to vector<1x96xf32>
      %32 = arith.addf %29, %31 : vector<1x96xf32>
      %c0_14 = arith.constant 0 : index
      %c0_15 = arith.constant 0 : index
      %33 = vector.load %arg9[%c0_14, %c0_15] : memref<1x96xf32, #tpu.memory_space<vmem>>, vector<1x96xf32>
      tpu.vector_store %arg9[%c0_14, %c0_15], %32 {strides = array<i32>} : memref<1x96xf32, #tpu.memory_space<vmem>>, vector<1x96xf32>,
      %c0_16 = arith.constant 0 : index
      %c0_17 = arith.constant 0 : index
      %34 = vector.load %arg4[%c0_16, %c0_17] : memref<600x40xf32, #tpu.memory_space<vmem>>, vector<600x40xf32>
      %c0_18 = arith.constant 0 : index
      %c0_19 = arith.constant 0 : index
      %35 = vector.load %arg5[%c0_18, %c0_19] : memref<600x1xf32, #tpu.memory_space<vmem>>, vector<600x1xf32>
      %cst_20 = arith.constant dense<0xFF800000> : vector<600xf32>
      %36 = vector.multi_reduction <maximumf>, %34, %cst_20 [1] : vector<600x40xf32> to vector<600xf32>
      %37 = vector.shape_cast %36 : vector<600xf32> to vector<600x1xf32>
      %38 = vector.broadcast %37 : vector<600x1xf32> to vector<600x40xf32>
      %39 = arith.subf %34, %38 : vector<600x40xf32>
      %40 = math.exp %39 : vector<600x40xf32>
      %cst_21 = arith.constant dense<0.000000e+00> : vector<600xf32>
      %41 = vector.multi_reduction <add>, %40, %cst_21 [1] : vector<600x40xf32> to vector<600xf32>
      %42 = vector.shape_cast %41 : vector<600xf32> to vector<600x1xf32>
      %43 = math.log %42 : vector<600x1xf32>
      %44 = arith.addf %37, %43 : vector<600x1xf32>
      %45 = arith.subf %44, %35 : vector<600x1xf32>
      %cst_22 = arith.constant 0.000000e+00 : f32
      %46 = vector.broadcast %cst_22 : f32 to vector<600x1xf32>
      %47 = arith.select %20, %45, %46 : vector<600x1xi1>, vector<600x1xf32>
      %c0_23 = arith.constant 0 : index
      %c0_24 = arith.constant 0 : index
      %48 = vector.load %arg10[%c0_23, %c0_24] : memref<1x1xf32, #tpu.memory_space<vmem>>, vector<1x1xf32>
      %cst_25 = arith.constant dense<0.000000e+00> : vector<1xf32>
      %49 = vector.multi_reduction <add>, %47, %cst_25 [0] : vector<600x1xf32> to vector<1xf32>
      %50 = vector.shape_cast %49 : vector<1xf32> to vector<1x1xf32>
      %51 = arith.addf %48, %50 : vector<1x1xf32>
      %c0_26 = arith.constant 0 : index
      %c0_27 = arith.constant 0 : index
      %52 = vector.load %arg10[%c0_26, %c0_27] : memref<1x1xf32, #tpu.memory_space<vmem>>, vector<1x1xf32>
      tpu.vector_store %arg10[%c0_26, %c0_27], %51 {strides = array<i32>} : memref<1x1xf32, #tpu.memory_space<vmem>>, vector<1x1xf32>,
      %c0_28 = arith.constant 0 : index
      %c0_29 = arith.constant 0 : index
      %53 = vector.load %arg6[%c0_28, %c0_29] : memref<600x64xf32, #tpu.memory_space<vmem>>, vector<600x64xf32>
      %c0_30 = arith.constant 0 : index
      %c0_31 = arith.constant 0 : index
      %54 = vector.load %arg7[%c0_30, %c0_31] : memref<600x64xf32, #tpu.memory_space<vmem>>, vector<600x64xf32>
      %55 = arith.subf %53, %54 : vector<600x64xf32>
      %56 = math.absf %55 : vector<600x64xf32>
      %cst_32 = arith.constant 0.000000e+00 : f32
      %57 = vector.shape_cast %20 : vector<600x1xi1> to vector<600x1xi1>
      %58 = vector.broadcast %57 : vector<600x1xi1> to vector<600x64xi1>
      %59 = vector.broadcast %cst_32 : f32 to vector<600x64xf32>
      %60 = arith.select %58, %56, %59 : vector<600x64xi1>, vector<600x64xf32>
      %c0_33 = arith.constant 0 : index
      %c0_34 = arith.constant 0 : index
      %61 = vector.load %arg11[%c0_33, %c0_34] : memref<1x64xf32, #tpu.memory_space<vmem>>, vector<1x64xf32>
      %cst_35 = arith.constant dense<0.000000e+00> : vector<64xf32>
      %62 = vector.multi_reduction <add>, %60, %cst_35 [0] : vector<600x64xf32> to vector<64xf32>
      %63 = vector.shape_cast %62 : vector<64xf32> to vector<1x64xf32>
      %64 = arith.addf %61, %63 : vector<1x64xf32>
      %c0_36 = arith.constant 0 : index
      %c0_37 = arith.constant 0 : index
      %65 = vector.load %arg11[%c0_36, %c0_37] : memref<1x64xf32, #tpu.memory_space<vmem>>, vector<1x64xf32>
      tpu.vector_store %arg11[%c0_36, %c0_37], %64 {strides = array<i32>} : memref<1x64xf32, #tpu.memory_space<vmem>>, vector<1x64xf32>,
    } else {
    }
    %c0_i32_5 = arith.constant 0 : i32
    %13 = arith.cmpi eq, %arg1, %c0_i32_5 : i32
    %14 = arith.extui %13 : i1 to i32
    %c0_i32_6 = arith.constant 0 : i32
    %15 = arith.cmpi ne, %14, %c0_i32_6 : i32
    scf.if %15 {
      %16 = tpu.iota {dimensions = array<i32: 1>} : vector<8x128xi32>
      %cst = arith.constant 0.000000e+00 : f32
      %17 = vector.broadcast %cst : f32 to vector<8x128xf32>
      %c0 = arith.constant 0 : index
      %c0_7 = arith.constant 0 : index
      %18 = vector.load %arg9[%c0, %c0_7] : memref<1x96xf32, #tpu.memory_space<vmem>>, vector<1x96xf32>
      %19 = vector.shape_cast %18 : vector<1x96xf32> to vector<1x1x96xf32>
      %cst_8 = arith.constant dense<0.000000e+00> : vector<1xf32>
      %20 = vector.multi_reduction <add>, %19, %cst_8 [1, 2] : vector<1x1x96xf32> to vector<1xf32>
      %21 = vector.shape_cast %20 : vector<1xf32> to vector<1x1x1xf32>
      %22 = vector.extract %21[0, 0, 0] : f32 from vector<1x1x1xf32>
      %23 = vector.broadcast %22 : f32 to vector<1x1xf32>
      %c0_i32_9 = arith.constant 0 : i32
      %24 = vector.broadcast %c0_i32_9 : i32 to vector<8x128xi32>
      %25 = arith.cmpi eq, %16, %24 : vector<8x128xi32>
      %26 = vector.shape_cast %23 : vector<1x1xf32> to vector<1x1xf32>
      %27 = vector.broadcast %26 : vector<1x1xf32> to vector<8x128xf32>
      %28 = arith.select %25, %27, %17 : vector<8x128xi1>, vector<8x128xf32>
      %c0_10 = arith.constant 0 : index
      %c0_11 = arith.constant 0 : index
      %29 = vector.load %arg10[%c0_10, %c0_11] : memref<1x1xf32, #tpu.memory_space<vmem>>, vector<1x1xf32>
      %30 = vector.shape_cast %29 : vector<1x1xf32> to vector<1x1x1xf32>
      %cst_12 = arith.constant dense<0.000000e+00> : vector<1xf32>
      %31 = vector.multi_reduction <add>, %30, %cst_12 [1, 2] : vector<1x1x1xf32> to vector<1xf32>
      %32 = vector.shape_cast %31 : vector<1xf32> to vector<1x1x1xf32>
      %33 = vector.extract %32[0, 0, 0] : f32 from vector<1x1x1xf32>
      %34 = vector.broadcast %33 : f32 to vector<1x1xf32>
      %c1_i32_13 = arith.constant 1 : i32
      %35 = vector.broadcast %c1_i32_13 : i32 to vector<8x128xi32>
      %36 = arith.cmpi eq, %16, %35 : vector<8x128xi32>
      %37 = vector.shape_cast %34 : vector<1x1xf32> to vector<1x1xf32>
      %38 = vector.broadcast %37 : vector<1x1xf32> to vector<8x128xf32>
      %39 = arith.select %36, %38, %28 : vector<8x128xi1>, vector<8x128xf32>
      %c0_14 = arith.constant 0 : index
      %c0_15 = arith.constant 0 : index
      %40 = vector.load %arg11[%c0_14, %c0_15] : memref<1x64xf32, #tpu.memory_space<vmem>>, vector<1x64xf32>
      %41 = vector.shape_cast %40 : vector<1x64xf32> to vector<1x1x64xf32>
      %cst_16 = arith.constant dense<0.000000e+00> : vector<1xf32>
      %42 = vector.multi_reduction <add>, %41, %cst_16 [1, 2] : vector<1x1x64xf32> to vector<1xf32>
      %43 = vector.shape_cast %42 : vector<1xf32> to vector<1x1x1xf32>
      %44 = vector.extract %43[0, 0, 0] : f32 from vector<1x1x1xf32>
      %45 = vector.broadcast %44 : f32 to vector<1x1xf32>
      %c2_i32 = arith.constant 2 : i32
      %46 = vector.broadcast %c2_i32 : i32 to vector<8x128xi32>
      %47 = arith.cmpi eq, %16, %46 : vector<8x128xi32>
      %48 = vector.shape_cast %45 : vector<1x1xf32> to vector<1x1xf32>
      %49 = vector.broadcast %48 : vector<1x1xf32> to vector<8x128xf32>
      %50 = arith.select %47, %49, %39 : vector<8x128xi1>, vector<8x128xf32>
      %c0_17 = arith.constant 0 : index
      %c0_18 = arith.constant 0 : index
      %c0_19 = arith.constant 0 : index
      %51 = vector.load %arg8[%c0_17, %c0_18, %c0_19] : memref<1x8x128xf32, #tpu.memory_space<vmem>>, vector<1x8x128xf32>
      %52 = vector.shape_cast %51 : vector<1x8x128xf32> to vector<8x128xf32>
      %53 = vector.shape_cast %50 : vector<8x128xf32> to vector<1x8x128xf32>
      tpu.vector_store %arg8[%c0_17, %c0_18, %c0_19], %53 {strides = array<i32>} : memref<1x8x128xf32, #tpu.memory_space<vmem>>, vector<1x8x128xf32>,
    } else {
    }
    return
  }
  func.func @transform_0(%arg0: i32, %arg1: i32) -> (i32, i32) {
    %c1_i32 = arith.constant 1 : i32
    %0 = arith.muli %arg0, %c1_i32 : i32
    %1 = arith.addi %0, %arg1 : i32
    %c0_i32 = arith.constant 0 : i32
    %2 = arith.minsi %1, %c0_i32 : i32
    %c0_i32_0 = arith.constant 0 : i32
    %c0_i32_1 = arith.constant 0 : i32
    return %2, %c0_i32_0 : i32, i32
  }
  func.func @transform_1(%arg0: i32, %arg1: i32) -> (i32, i32) {
    %c1_i32 = arith.constant 1 : i32
    %0 = arith.muli %arg0, %c1_i32 : i32
    %1 = arith.addi %0, %arg1 : i32
    %c0_i32 = arith.constant 0 : i32
    %2 = arith.minsi %1, %c0_i32 : i32
    %c0_i32_0 = arith.constant 0 : i32
    %c0_i32_1 = arith.constant 0 : i32
    return %2, %c0_i32_0 : i32, i32
  }
  func.func @transform_2(%arg0: i32, %arg1: i32) -> (i32, i32) {
    %c1_i32 = arith.constant 1 : i32
    %0 = arith.muli %arg0, %c1_i32 : i32
    %1 = arith.addi %0, %arg1 : i32
    %c0_i32 = arith.constant 0 : i32
    %2 = arith.minsi %1, %c0_i32 : i32
    %c0_i32_0 = arith.constant 0 : i32
    %c0_i32_1 = arith.constant 0 : i32
    return %2, %c0_i32_0 : i32, i32
  }
  func.func @transform_3(%arg0: i32, %arg1: i32) -> (i32, i32) {
    %c1_i32 = arith.constant 1 : i32
    %0 = arith.muli %arg0, %c1_i32 : i32
    %1 = arith.addi %0, %arg1 : i32
    %c0_i32 = arith.constant 0 : i32
    %2 = arith.minsi %1, %c0_i32 : i32
    %c0_i32_0 = arith.constant 0 : i32
    %c0_i32_1 = arith.constant 0 : i32
    return %2, %c0_i32_0 : i32, i32
  }
  func.func @transform_4(%arg0: i32, %arg1: i32) -> (i32, i32) {
    %c1_i32 = arith.constant 1 : i32
    %0 = arith.muli %arg0, %c1_i32 : i32
    %1 = arith.addi %0, %arg1 : i32
    %c0_i32 = arith.constant 0 : i32
    %2 = arith.minsi %1, %c0_i32 : i32
    %c0_i32_0 = arith.constant 0 : i32
    %c0_i32_1 = arith.constant 0 : i32
    return %2, %c0_i32_0 : i32, i32
  }
  func.func @transform_5(%arg0: i32, %arg1: i32) -> (i32, i32) {
    %c1_i32 = arith.constant 1 : i32
    %0 = arith.muli %arg0, %c1_i32 : i32
    %1 = arith.addi %0, %arg1 : i32
    %c0_i32 = arith.constant 0 : i32
    %2 = arith.minsi %1, %c0_i32 : i32
    %c0_i32_0 = arith.constant 0 : i32
    %c0_i32_1 = arith.constant 0 : i32
    return %2, %c0_i32_0 : i32, i32
  }
  func.func @transform_6(%arg0: i32, %arg1: i32) -> (i32, i32, i32) {
    %c0_i32 = arith.constant 0 : i32
    %c0_i32_0 = arith.constant 0 : i32
    %c0_i32_1 = arith.constant 0 : i32
    return %arg0, %c0_i32, %c0_i32_0 : i32, i32, i32
  }
}

</mosaic_0001>

<llo_original>
// kernel: _fused_losses_impl.1
$region0: #{_fused_losses_impl.1}
  #allocation0 [shape = 'u32[]', space=smem, size = 0x4, offset = 0x4, fixed_abs, tag = 'smem constant byte address 0x4 - core index']
  #allocation1 [shape = 'u32[72,128]{1,0:T(1,128)}', space=vmem, size = 0x9000, scoped, tag = 'internal scratch']
  #allocation2 [shape = 'f32[1,96]{1,0:T(1,128)}', space=vmem, size = 0x200, scoped, tag = 'scratch operand']
  #allocation3 [shape = 'f32[1,1]{1,0:T(1,128)}', space=vmem, size = 0x200, scoped, tag = 'scratch operand']
  #allocation4 [shape = 'f32[1,64]{1,0:T(1,128)}', space=vmem, size = 0x200, scoped, tag = 'scratch operand']
  %s0 = inlined_call_operand.vmem [shape: f32[600,96], index: 0, kind: input, shape index: {}]
  %s1 = inlined_call_operand.vmem [shape: f32[600,96], index: 1, kind: input, shape index: {}]
  %s2 = inlined_call_operand.vmem [shape: f32[600,40], index: 2, kind: input, shape index: {}]
  %s3 = inlined_call_operand.vmem [shape: f32[600,1], index: 3, kind: input, shape index: {}]
  %s4 = inlined_call_operand.vmem [shape: f32[600,64], index: 4, kind: input, shape index: {}]
  %s5 = inlined_call_operand.vmem [shape: f32[600,64], index: 5, kind: input, shape index: {}]
  %s6 = inlined_call_operand.vmem [shape: f32[1,8,128], index: 6, kind: output, shape index: {}]
  %s7 = sld [smem:[#allocation0]]
  $region50: #{_fused_losses_impl.1} parent=0
    _
  %s9 = ssub.s32 1, %s7
  %s10 = scalar_select 0, %s9, %s7
  // Predicated region
  $region2: #{_fused_losses_impl.1} parent=0 // pred_check
    _
  $region3: #{_fused_losses_impl.1} parent=0 // pred_check_branch
    %12 = sbr.rel (0) target = $region5
  $region4: #{_fused_losses_impl.1} parent=0 // pred_region
    %s13 = sadd.s32 0, 0
    %p14 = scmp.lt.s32.totalorder %s13, 0
    %s15 = scalar_select %p14, %s13, 0
    %s16 = smul.u32 75, %s15
    %p17 = scmp.lt.s32.totalorder %s16, 74
    %s18 = scalar_select %p17, %s16, 74
    %s19 = smul.addr %s18, 8
    %s20 = scalar_lea.vmem %s0, %s19
    %s21 = sadd.s32 0, 0
    %p22 = scmp.lt.s32.totalorder %s21, 0
    %s23 = scalar_select %p22, %s21, 0
    %s24 = smul.u32 75, %s23
  $region5: #{_fused_losses_impl.1} parent=0 // pred_fallthru
    _
  // Predicated region
  $region6: #{_fused_losses_impl.1} parent=0 // pred_check
    _
  $region7: #{_fused_losses_impl.1} parent=0 // pred_check_branch
    %26 = sbr.rel (0) target = $region9
  $region8: #{_fused_losses_impl.1} parent=0 // pred_region
    %s27 = sadd.s32 0, 0
    %p28 = scmp.lt.s32.totalorder %s27, 0
    %s29 = scalar_select %p28, %s27, 0
    %s30 = smul.u32 75, %s29
    %p31 = scmp.lt.s32.totalorder %s30, 74
    %s32 = scalar_select %p31, %s30, 74
    %s33 = smul.addr %s32, 8
    %s34 = scalar_lea.vmem %s1, %s33
    %s35 = sadd.s32 0, 0
    %p36 = scmp.lt.s32.totalorder %s35, 0
    %s37 = scalar_select %p36, %s35, 0
    %s38 = smul.u32 75, %s37
  $region9: #{_fused_losses_impl.1} parent=0 // pred_fallthru
    _
  // Predicated region
  $region10: #{_fused_losses_impl.1} parent=0 // pred_check
    _
  $region11: #{_fused_losses_impl.1} parent=0 // pred_check_branch
    %40 = sbr.rel (0) target = $region13
  $region12: #{_fused_losses_impl.1} parent=0 // pred_region
    %s41 = sadd.s32 0, 0
    %p42 = scmp.lt.s32.totalorder %s41, 0
    %s43 = scalar_select %p42, %s41, 0
    %s44 = smul.u32 75, %s43
    %p45 = scmp.lt.s32.totalorder %s44, 74
    %s46 = scalar_select %p45, %s44, 74
    %s47 = smul.addr %s46, 8
    %s48 = scalar_lea.vmem %s2, %s47
    %s49 = sadd.s32 0, 0
    %p50 = scmp.lt.s32.totalorder %s49, 0
    %s51 = scalar_select %p50, %s49, 0
    %s52 = smul.u32 75, %s51
  $region13: #{_fused_losses_impl.1} parent=0 // pred_fallthru
    _
  // Predicated region
  $region14: #{_fused_losses_impl.1} parent=0 // pred_check
    _
  $region15: #{_fused_losses_impl.1} parent=0 // pred_check_branch
    %54 = sbr.rel (0) target = $region17
  $region16: #{_fused_losses_impl.1} parent=0 // pred_region
    %s55 = sadd.s32 0, 0
    %p56 = scmp.lt.s32.totalorder %s55, 0
    %s57 = scalar_select %p56, %s55, 0
    %s58 = smul.u32 75, %s57
    %p59 = scmp.lt.s32.totalorder %s58, 74
    %s60 = scalar_select %p59, %s58, 74
    %s61 = smul.addr %s60, 8
    %s62 = scalar_lea.vmem %s3, %s61
    %s63 = sadd.s32 0, 0
    %p64 = scmp.lt.s32.totalorder %s63, 0
    %s65 = scalar_select %p64, %s63, 0
    %s66 = smul.u32 75, %s65
  $region17: #{_fused_losses_impl.1} parent=0 // pred_fallthru
    _
  // Predicated region
  $region18: #{_fused_losses_impl.1} parent=0 // pred_check
    _
  $region19: #{_fused_losses_impl.1} parent=0 // pred_check_branch
    %68 = sbr.rel (0) target = $region21
  $region20: #{_fused_losses_impl.1} parent=0 // pred_region
    %s69 = sadd.s32 0, 0
    %p70 = scmp.lt.s32.totalorder %s69, 0
    %s71 = scalar_select %p70, %s69, 0
    %s72 = smul.u32 75, %s71
    %p73 = scmp.lt.s32.totalorder %s72, 74
    %s74 = scalar_select %p73, %s72, 74
    %s75 = smul.addr %s74, 8
    %s76 = scalar_lea.vmem %s4, %s75
    %s77 = sadd.s32 0, 0
    %p78 = scmp.lt.s32.totalorder %s77, 0
    %s79 = scalar_select %p78, %s77, 0
    %s80 = smul.u32 75, %s79
  $region21: #{_fused_losses_impl.1} parent=0 // pred_fallthru
    _
  // Predicated region
  $region22: #{_fused_losses_impl.1} parent=0 // pred_check
    _
  $region23: #{_fused_losses_impl.1} parent=0 // pred_check_branch
    %82 = sbr.rel (0) target = $region25
  $region24: #{_fused_losses_impl.1} parent=0 // pred_region
    %s83 = sadd.s32 0, 0
    %p84 = scmp.lt.s32.totalorder %s83, 0
    %s85 = scalar_select %p84, %s83, 0
    %s86 = smul.u32 75, %s85
    %p87 = scmp.lt.s32.totalorder %s86, 74
    %s88 = scalar_select %p87, %s86, 74
    %s89 = smul.addr %s88, 8
    %s90 = scalar_lea.vmem %s5, %s89
    %s91 = sadd.s32 0, 0
    %p92 = scmp.lt.s32.totalorder %s91, 0
    %s93 = scalar_select %p92, %s91, 0
    %s94 = smul.u32 75, %s93
  $region25: #{_fused_losses_impl.1} parent=0 // pred_fallthru
    _
  %s95 = sadd.s32 0, 0
  %p96 = scmp.lt.s32.totalorder %s95, 0
  %s97 = scalar_select %p96, %s95, 0
  %s98 = smul.u32 75, %s97
  %p99 = scmp.lt.s32.totalorder %s98, 74
  %s100 = scalar_select %p99, %s98, 74
  %s101 = smul.addr %s100, 8
  %s102 = scalar_lea.vmem %s0, %s101
  %s103 = sadd.s32 0, 0
  %p104 = scmp.lt.s32.totalorder %s103, 0
  %s105 = scalar_select %p104, %s103, 0
  %s106 = smul.u32 75, %s105
  %p107 = scmp.lt.s32.totalorder %s106, 74
  %s108 = scalar_select %p107, %s106, 74
  %s109 = smul.addr %s108, 8
  %s110 = scalar_lea.vmem %s1, %s109
  %s111 = sadd.s32 0, 0
  %p112 = scmp.lt.s32.totalorder %s111, 0
  %s113 = scalar_select %p112, %s111, 0
  %s114 = smul.u32 75, %s113
  %p115 = scmp.lt.s32.totalorder %s114, 74
  %s116 = scalar_select %p115, %s114, 74
  %s117 = smul.addr %s116, 8
  %s118 = scalar_lea.vmem %s2, %s117
  %s119 = sadd.s32 0, 0
  %p120 = scmp.lt.s32.totalorder %s119, 0
  %s121 = scalar_select %p120, %s119, 0
  %s122 = smul.u32 75, %s121
  %p123 = scmp.lt.s32.totalorder %s122, 74
  %s124 = scalar_select %p123, %s122, 74
  %s125 = smul.addr %s124, 8
  %s126 = scalar_lea.vmem %s3, %s125
  %s127 = sadd.s32 0, 0
  %p128 = scmp.lt.s32.totalorder %s127, 0
  %s129 = scalar_select %p128, %s127, 0
  %s130 = smul.u32 75, %s129
  %p131 = scmp.lt.s32.totalorder %s130, 74
  %s132 = scalar_select %p131, %s130, 74
  %s133 = smul.addr %s132, 8
  %s134 = scalar_lea.vmem %s4, %s133
  %s135 = sadd.s32 0, 0
  %p136 = scmp.lt.s32.totalorder %s135, 0
  %s137 = scalar_select %p136, %s135, 0
  %s138 = smul.u32 75, %s137
  %p139 = scmp.lt.s32.totalorder %s138, 74
  %s140 = scalar_select %p139, %s138, 74
  %s141 = smul.addr %s140, 8
  %s142 = scalar_lea.vmem %s5, %s141
  %s143 = sadd.s32 0, 0
  %p144 = scmp.lt.s32.totalorder %s143, 0
  %s145 = scalar_select %p144, %s143, 0
  %s146 = smul.u32 75, %s145
  %p147 = scmp.lt.s32.totalorder %s146, 74
  %s148 = scalar_select %p147, %s146, 74
  %s149 = smul.addr %s148, 8
  %s150 = scalar_lea.vmem %s0, %s149
  %s151 = sadd.s32 0, 0
  %p152 = scmp.lt.s32.totalorder %s151, 0
  %s153 = scalar_select %p152, %s151, 0
  %s154 = smul.u32 75, %s153
  %s155 = sadd.s32 0, 0
  %p156 = scmp.lt.s32.totalorder %s155, 0
  %s157 = scalar_select %p156, %s155, 0
  %s158 = smul.u32 75, %s157
  %p159 = scmp.lt.s32.totalorder %s158, 74
  %s160 = scalar_select %p159, %s158, 74
  %s161 = smul.addr %s160, 8
  %s162 = scalar_lea.vmem %s1, %s161
  %s163 = sadd.s32 0, 0
  %p164 = scmp.lt.s32.totalorder %s163, 0
  %s165 = scalar_select %p164, %s163, 0
  %s166 = smul.u32 75, %s165
  %s167 = sadd.s32 0, 0
  %p168 = scmp.lt.s32.totalorder %s167, 0
  %s169 = scalar_select %p168, %s167, 0
  %s170 = smul.u32 75, %s169
  %p171 = scmp.lt.s32.totalorder %s170, 74
  %s172 = scalar_select %p171, %s170, 74
  %s173 = smul.addr %s172, 8
  %s174 = scalar_lea.vmem %s2, %s173
  %s175 = sadd.s32 0, 0
  %p176 = scmp.lt.s32.totalorder %s175, 0
  %s177 = scalar_select %p176, %s175, 0
  %s178 = smul.u32 75, %s177
  %s179 = sadd.s32 0, 0
  %p180 = scmp.lt.s32.totalorder %s179, 0
  %s181 = scalar_select %p180, %s179, 0
  %s182 = smul.u32 75, %s181
  %p183 = scmp.lt.s32.totalorder %s182, 74
  %s184 = scalar_select %p183, %s182, 74
  %s185 = smul.addr %s184, 8
  %s186 = scalar_lea.vmem %s3, %s185
  %s187 = sadd.s32 0, 0
  %p188 = scmp.lt.s32.totalorder %s187, 0
  %s189 = scalar_select %p188, %s187, 0
  %s190 = smul.u32 75, %s189
  %s191 = sadd.s32 0, 0
  %p192 = scmp.lt.s32.totalorder %s191, 0
  %s193 = scalar_select %p192, %s191, 0
  %s194 = smul.u32 75, %s193
  %p195 = scmp.lt.s32.totalorder %s194, 74
  %s196 = scalar_select %p195, %s194, 74
  %s197 = smul.addr %s196, 8
  %s198 = scalar_lea.vmem %s4, %s197
  %s199 = sadd.s32 0, 0
  %p200 = scmp.lt.s32.totalorder %s199, 0
  %s201 = scalar_select %p200, %s199, 0
  %s202 = smul.u32 75, %s201
  %s203 = sadd.s32 0, 0
  %p204 = scmp.lt.s32.totalorder %s203, 0
  %s205 = scalar_select %p204, %s203, 0
  %s206 = smul.u32 75, %s205
  %p207 = scmp.lt.s32.totalorder %s206, 74
  %s208 = scalar_select %p207, %s206, 74
  %s209 = smul.addr %s208, 8
  %s210 = scalar_lea.vmem %s5, %s209
  %s211 = sadd.s32 0, 0
  %p212 = scmp.lt.s32.totalorder %s211, 0
  %s213 = scalar_select %p212, %s211, 0
  %s214 = smul.u32 75, %s213
  %s215 = sadd.s32 0, 0
  %s216 = smul.u32 %s215, 600
  %p217 = scmp.eq.s32.totalorder 0, 0
  // Predicated region
  $region26: #{_fused_losses_impl.1} parent=0 // pred_check
    %p218 = pneg %p217
  $region27: #{_fused_losses_impl.1} parent=0 // pred_check_branch
    %220 = sbr.rel (%p218) target = $region29
  $region28: #{_fused_losses_impl.1} parent=0 // pred_region
    %vm221 = vcmask 778240
    %222 = vst.msk [vmem:[#allocation2] sm:$0x1] %vm221, 0.0
    %vm223 = vcmask 0
    %224 = vst.msk [vmem:[#allocation3] sm:$0x1] %vm223, 0.0
    %vm225 = vcmask 516096
    %226 = vst.msk [vmem:[#allocation4] sm:$0x1] %vm225, 0.0
  $region29: #{_fused_losses_impl.1} parent=0 // pred_fallthru
    _
  %s227 = sadd.s32 %s216, 600
  %p228 = scmp.le.s32.totalorder %s227, 600
  // Predicated region
  $region30: #{_fused_losses_impl.1} parent=0 // pred_check
    %p229 = pneg %p228
  $region31: #{_fused_losses_impl.1} parent=0 // pred_check_branch
    %231 = sbr.rel (%p229) target = $region33
  $region32: #{_fused_losses_impl.1} parent=0 // pred_region
    %v232 = vld [vmem:[%s150] sm:$0xff]
    %v233 = vld [vmem:[%s150 + $0x8] sm:$0xff]
    %v234 = vld [vmem:[%s150 + $0x10] sm:$0xff]
    %v235 = vld [vmem:[%s150 + $0x18] sm:$0xff]
    %v236 = vld [vmem:[%s150 + $0x20] sm:$0xff]
    %v237 = vld [vmem:[%s150 + $0x28] sm:$0xff]
    %v238 = vld [vmem:[%s150 + $0x30] sm:$0xff]
    %v239 = vld [vmem:[%s150 + $0x38] sm:$0xff]
    %v240 = vld [vmem:[%s150 + $0x40] sm:$0xff]
    %v241 = vld [vmem:[%s150 + $0x48] sm:$0xff]
    %v242 = vld [vmem:[%s150 + $0x50] sm:$0xff]
    %v243 = vld [vmem:[%s150 + $0x58] sm:$0xff]
    %v244 = vld [vmem:[%s150 + $0x60] sm:$0xff]
    %v245 = vld [vmem:[%s150 + $0x68] sm:$0xff]
    %v246 = vld [vmem:[%s150 + $0x70] sm:$0xff]
    %v247 = vld [vmem:[%s150 + $0x78] sm:$0xff]
    %v248 = vld [vmem:[%s150 + $0x80] sm:$0xff]
    %v249 = vld [vmem:[%s150 + $0x88] sm:$0xff]
    %v250 = vld [vmem:[%s150 + $0x90] sm:$0xff]
    %v251 = vld [vmem:[%s150 + $0x98] sm:$0xff]
    %v252 = vld [vmem:[%s150 + $0xa0] sm:$0xff]
    %v253 = vld [vmem:[%s150 + $0xa8] sm:$0xff]
    %v254 = vld [vmem:[%s150 + $0xb0] sm:$0xff]
    %v255 = vld [vmem:[%s150 + $0xb8] sm:$0xff]
    %v256 = vld [vmem:[%s150 + $0xc0] sm:$0xff]
    %v257 = vld [vmem:[%s150 + $0xc8] sm:$0xff]
    %v258 = vld [vmem:[%s150 + $0xd0] sm:$0xff]
    %v259 = vld [vmem:[%s150 + $0xd8] sm:$0xff]
    %v260 = vld [vmem:[%s150 + $0xe0] sm:$0xff]
    %v261 = vld [vmem:[%s150 + $0xe8] sm:$0xff]
    %v262 = vld [vmem:[%s150 + $0xf0] sm:$0xff]
    %v263 = vld [vmem:[%s150 + $0xf8] sm:$0xff]
    %v264 = vld [vmem:[%s150 + $0x100] sm:$0xff]
    %v265 = vld [vmem:[%s150 + $0x108] sm:$0xff]
    %v266 = vld [vmem:[%s150 + $0x110] sm:$0xff]
    %v267 = vld [vmem:[%s150 + $0x118] sm:$0xff]
    %v268 = vld [vmem:[%s150 + $0x120] sm:$0xff]
    %v269 = vld [vmem:[%s150 + $0x128] sm:$0xff]
    %v270 = vld [vmem:[%s150 + $0x130] sm:$0xff]
    %v271 = vld [vmem:[%s150 + $0x138] sm:$0xff]
    %v272 = vld [vmem:[%s150 + $0x140] sm:$0xff]
    %v273 = vld [vmem:[%s150 + $0x148] sm:$0xff]
    %v274 = vld [vmem:[%s150 + $0x150] sm:$0xff]
    %v275 = vld [vmem:[%s150 + $0x158] sm:$0xff]
    %v276 = vld [vmem:[%s150 + $0x160] sm:$0xff]
    %v277 = vld [vmem:[%s150 + $0x168] sm:$0xff]
    %v278 = vld [vmem:[%s150 + $0x170] sm:$0xff]
    %v279 = vld [vmem:[%s150 + $0x178] sm:$0xff]
    %v280 = vld [vmem:[%s150 + $0x180] sm:$0xff]
    %v281 = vld [vmem:[%s150 + $0x188] sm:$0xff]
    %v282 = vld [vmem:[%s150 + $0x190] sm:$0xff]
    %v283 = vld [vmem:[%s150 + $0x198] sm:$0xff]
    %v284 = vld [vmem:[%s150 + $0x1a0] sm:$0xff]
    %v285 = vld [vmem:[%s150 + $0x1a8] sm:$0xff]
    %v286 = vld [vmem:[%s150 + $0x1b0] sm:$0xff]
    %v287 = vld [vmem:[%s150 + $0x1b8] sm:$0xff]
    %v288 = vld [vmem:[%s150 + $0x1c0] sm:$0xff]
    %v289 = vld [vmem:[%s150 + $0x1c8] sm:$0xff]
    %v290 = vld [vmem:[%s150 + $0x1d0] sm:$0xff]
    %v291 = vld [vmem:[%s150 + $0x1d8] sm:$0xff]
    %v292 = vld [vmem:[%s150 + $0x1e0] sm:$0xff]
    %v293 = vld [vmem:[%s150 + $0x1e8] sm:$0xff]
    %v294 = vld [vmem:[%s150 + $0x1f0] sm:$0xff]
    %v295 = vld [vmem:[%s150 + $0x1f8] sm:$0xff]
    %v296 = vld [vmem:[%s150 + $0x200] sm:$0xff]
    %v297 = vld [vmem:[%s150 + $0x208] sm:$0xff]
    %v298 = vld [vmem:[%s150 + $0x210] sm:$0xff]
    %v299 = vld [vmem:[%s150 + $0x218] sm:$0xff]
    %v300 = vld [vmem:[%s150 + $0x220] sm:$0xff]
    %v301 = vld [vmem:[%s150 + $0x228] sm:$0xff]
    %v302 = vld [vmem:[%s150 + $0x230] sm:$0xff]
    %v303 = vld [vmem:[%s150 + $0x238] sm:$0xff]
    %v304 = vld [vmem:[%s150 + $0x240] sm:$0xff]
    %v305 = vld [vmem:[%s150 + $0x248] sm:$0xff]
    %v306 = vld [vmem:[%s150 + $0x250] sm:$0xff]
    %v307 = vld [vmem:[%s162] sm:$0xff]
    %v308 = vld [vmem:[%s162 + $0x8] sm:$0xff]
    %v309 = vld [vmem:[%s162 + $0x10] sm:$0xff]
    %v310 = vld [vmem:[%s162 + $0x18] sm:$0xff]
    %v311 = vld [vmem:[%s162 + $0x20] sm:$0xff]
    %v312 = vld [vmem:[%s162 + $0x28] sm:$0xff]
    %v313 = vld [vmem:[%s162 + $0x30] sm:$0xff]
    %v314 = vld [vmem:[%s162 + $0x38] sm:$0xff]
    %v315 = vld [vmem:[%s162 + $0x40] sm:$0xff]
    %v316 = vld [vmem:[%s162 + $0x48] sm:$0xff]
    %v317 = vld [vmem:[%s162 + $0x50] sm:$0xff]
    %v318 = vld [vmem:[%s162 + $0x58] sm:$0xff]
    %v319 = vld [vmem:[%s162 + $0x60] sm:$0xff]
    %v320 = vld [vmem:[%s162 + $0x68] sm:$0xff]
    %v321 = vld [vmem:[%s162 + $0x70] sm:$0xff]
    %v322 = vld [vmem:[%s162 + $0x78] sm:$0xff]
    %v323 = vld [vmem:[%s162 + $0x80] sm:$0xff]
    %v324 = vld [vmem:[%s162 + $0x88] sm:$0xff]
    %v325 = vld [vmem:[%s162 + $0x90] sm:$0xff]
    %v326 = vld [vmem:[%s162 + $0x98] sm:$0xff]
    %v327 = vld [vmem:[%s162 + $0xa0] sm:$0xff]
    %v328 = vld [vmem:[%s162 + $0xa8] sm:$0xff]
    %v329 = vld [vmem:[%s162 + $0xb0] sm:$0xff]
    %v330 = vld [vmem:[%s162 + $0xb8] sm:$0xff]
    %v331 = vld [vmem:[%s162 + $0xc0] sm:$0xff]
    %v332 = vld [vmem:[%s162 + $0xc8] sm:$0xff]
    %v333 = vld [vmem:[%s162 + $0xd0] sm:$0xff]
    %v334 = vld [vmem:[%s162 + $0xd8] sm:$0xff]
    %v335 = vld [vmem:[%s162 + $0xe0] sm:$0xff]
    %v336 = vld [vmem:[%s162 + $0xe8] sm:$0xff]
    %v337 = vld [vmem:[%s162 + $0xf0] sm:$0xff]
    %v338 = vld [vmem:[%s162 + $0xf8] sm:$0xff]
    %v339 = vld [vmem:[%s162 + $0x100] sm:$0xff]
    %v340 = vld [vmem:[%s162 + $0x108] sm:$0xff]
    %v341 = vld [vmem:[%s162 + $0x110] sm:$0xff]
    %v342 = vld [vmem:[%s162 + $0x118] sm:$0xff]
    %v343 = vld [vmem:[%s162 + $0x120] sm:$0xff]
    %v344 = vld [vmem:[%s162 + $0x128] sm:$0xff]
    %v345 = vld [vmem:[%s162 + $0x130] sm:$0xff]
    %v346 = vld [vmem:[%s162 + $0x138] sm:$0xff]
    %v347 = vld [vmem:[%s162 + $0x140] sm:$0xff]
    %v348 = vld [vmem:[%s162 + $0x148] sm:$0xff]
    %v349 = vld [vmem:[%s162 + $0x150] sm:$0xff]
    %v350 = vld [vmem:[%s162 + $0x158] sm:$0xff]
    %v351 = vld [vmem:[%s162 + $0x160] sm:$0xff]
    %v352 = vld [vmem:[%s162 + $0x168] sm:$0xff]
    %v353 = vld [vmem:[%s162 + $0x170] sm:$0xff]
    %v354 = vld [vmem:[%s162 + $0x178] sm:$0xff]
    %v355 = vld [vmem:[%s162 + $0x180] sm:$0xff]
    %v356 = vld [vmem:[%s162 + $0x188] sm:$0xff]
    %v357 = vld [vmem:[%s162 + $0x190] sm:$0xff]
    %v358 = vld [vmem:[%s162 + $0x198] sm:$0xff]
    %v359 = vld [vmem:[%s162 + $0x1a0] sm:$0xff]
    %v360 = vld [vmem:[%s162 + $0x1a8] sm:$0xff]
    %v361 = vld [vmem:[%s162 + $0x1b0] sm:$0xff]
    %v362 = vld [vmem:[%s162 + $0x1b8] sm:$0xff]
    %v363 = vld [vmem:[%s162 + $0x1c0] sm:$0xff]
    %v364 = vld [vmem:[%s162 + $0x1c8] sm:$0xff]
    %v365 = vld [vmem:[%s162 + $0x1d0] sm:$0xff]
    %v366 = vld [vmem:[%s162 + $0x1d8] sm:$0xff]
    %v367 = vld [vmem:[%s162 + $0x1e0] sm:$0xff]
    %v368 = vld [vmem:[%s162 + $0x1e8] sm:$0xff]
    %v369 = vld [vmem:[%s162 + $0x1f0] sm:$0xff]
    %v370 = vld [vmem:[%s162 + $0x1f8] sm:$0xff]
    %v371 = vld [vmem:[%s162 + $0x200] sm:$0xff]
    %v372 = vld [vmem:[%s162 + $0x208] sm:$0xff]
    %v373 = vld [vmem:[%s162 + $0x210] sm:$0xff]
    %v374 = vld [vmem:[%s162 + $0x218] sm:$0xff]
    %v375 = vld [vmem:[%s162 + $0x220] sm:$0xff]
    %v376 = vld [vmem:[%s162 + $0x228] sm:$0xff]
    %v377 = vld [vmem:[%s162 + $0x230] sm:$0xff]
    %v378 = vld [vmem:[%s162 + $0x238] sm:$0xff]
    %v379 = vld [vmem:[%s162 + $0x240] sm:$0xff]
    %v380 = vld [vmem:[%s162 + $0x248] sm:$0xff]
    %v381 = vld [vmem:[%s162 + $0x250] sm:$0xff]
    %v382 = vsub.f32 %v232, %v307
    %v383 = vsub.f32 %v233, %v308
    %v384 = vsub.f32 %v234, %v309
    %v385 = vsub.f32 %v235, %v310
    %v386 = vsub.f32 %v236, %v311
    %v387 = vsub.f32 %v237, %v312
    %v388 = vsub.f32 %v238, %v313
    %v389 = vsub.f32 %v239, %v314
    %v390 = vsub.f32 %v240, %v315
    %v391 = vsub.f32 %v241, %v316
    %v392 = vsub.f32 %v242, %v317
    %v393 = vsub.f32 %v243, %v318
    %v394 = vsub.f32 %v244, %v319
    %v395 = vsub.f32 %v245, %v320
    %v396 = vsub.f32 %v246, %v321
    %v397 = vsub.f32 %v247, %v322
    %v398 = vsub.f32 %v248, %v323
    %v399 = vsub.f32 %v249, %v324
    %v400 = vsub.f32 %v250, %v325
    %v401 = vsub.f32 %v251, %v326
    %v402 = vsub.f32 %v252, %v327
    %v403 = vsub.f32 %v253, %v328
    %v404 = vsub.f32 %v254, %v329
    %v405 = vsub.f32 %v255, %v330
    %v406 = vsub.f32 %v256, %v331
    %v407 = vsub.f32 %v257, %v332
    %v408 = vsub.f32 %v258, %v333
    %v409 = vsub.f32 %v259, %v334
    %v410 = vsub.f32 %v260, %v335
    %v411 = vsub.f32 %v261, %v336
    %v412 = vsub.f32 %v262, %v337
    %v413 = vsub.f32 %v263, %v338
    %v414 = vsub.f32 %v264, %v339
    %v415 = vsub.f32 %v265, %v340
    %v416 = vsub.f32 %v266, %v341
    %v417 = vsub.f32 %v267, %v342
    %v418 = vsub.f32 %v268, %v343
    %v419 = vsub.f32 %v269, %v344
    %v420 = vsub.f32 %v270, %v345
    %v421 = vsub.f32 %v271, %v346
    %v422 = vsub.f32 %v272, %v347
    %v423 = vsub.f32 %v273, %v348
    %v424 = vsub.f32 %v274, %v349
    %v425 = vsub.f32 %v275, %v350
    %v426 = vsub.f32 %v276, %v351
    %v427 = vsub.f32 %v277, %v352
    %v428 = vsub.f32 %v278, %v353
    %v429 = vsub.f32 %v279, %v354
    %v430 = vsub.f32 %v280, %v355
    %v431 = vsub.f32 %v281, %v356
    %v432 = vsub.f32 %v282, %v357
    %v433 = vsub.f32 %v283, %v358
    %v434 = vsub.f32 %v284, %v359
    %v435 = vsub.f32 %v285, %v360
    %v436 = vsub.f32 %v286, %v361
    %v437 = vsub.f32 %v287, %v362
    %v438 = vsub.f32 %v288, %v363
    %v439 = vsub.f32 %v289, %v364
    %v440 = vsub.f32 %v290, %v365
    %v441 = vsub.f32 %v291, %v366
    %v442 = vsub.f32 %v292, %v367
    %v443 = vsub.f32 %v293, %v368
    %v444 = vsub.f32 %v294, %v369
    %v445 = vsub.f32 %v295, %v370
    %v446 = vsub.f32 %v296, %v371
    %v447 = vsub.f32 %v297, %v372
    %v448 = vsub.f32 %v298, %v373
    %v449 = vsub.f32 %v299, %v374
    %v450 = vsub.f32 %v300, %v375
    %v451 = vsub.f32 %v301, %v376
    %v452 = vsub.f32 %v302, %v377
    %v453 = vsub.f32 %v303, %v378
    %v454 = vsub.f32 %v304, %v379
    %v455 = vsub.f32 %v305, %v380
    %v456 = vsub.f32 %v306, %v381
    %v457 = vmul.f32 %v382, %v382
    %v458 = vmul.f32 %v383, %v383
    %v459 = vmul.f32 %v384, %v384
    %v460 = vmul.f32 %v385, %v385
    %v461 = vmul.f32 %v386, %v386
    %v462 = vmul.f32 %v387, %v387
    %v463 = vmul.f32 %v388, %v388
    %v464 = vmul.f32 %v389, %v389
    %v465 = vmul.f32 %v390, %v390
    %v466 = vmul.f32 %v391, %v391
    %v467 = vmul.f32 %v392, %v392
    %v468 = vmul.f32 %v393, %v393
    %v469 = vmul.f32 %v394, %v394
    %v470 = vmul.f32 %v395, %v395
    %v471 = vmul.f32 %v396, %v396
    %v472 = vmul.f32 %v397, %v397
    %v473 = vmul.f32 %v398, %v398
    %v474 = vmul.f32 %v399, %v399
    %v475 = vmul.f32 %v400, %v400
    %v476 = vmul.f32 %v401, %v401
    %v477 = vmul.f32 %v402, %v402
    %v478 = vmul.f32 %v403, %v403
    %v479 = vmul.f32 %v404, %v404
    %v480 = vmul.f32 %v405, %v405
    %v481 = vmul.f32 %v406, %v406
    %v482 = vmul.f32 %v407, %v407
    %v483 = vmul.f32 %v408, %v408
    %v484 = vmul.f32 %v409, %v409
    %v485 = vmul.f32 %v410, %v410
    %v486 = vmul.f32 %v411, %v411
    %v487 = vmul.f32 %v412, %v412
    %v488 = vmul.f32 %v413, %v413
    %v489 = vmul.f32 %v414, %v414
    %v490 = vmul.f32 %v415, %v415
    %v491 = vmul.f32 %v416, %v416
    %v492 = vmul.f32 %v417, %v417
    %v493 = vmul.f32 %v418, %v418
    %v494 = vmul.f32 %v419, %v419
    %v495 = vmul.f32 %v420, %v420
    %v496 = vmul.f32 %v421, %v421
    %v497 = vmul.f32 %v422, %v422
    %v498 = vmul.f32 %v423, %v423
    %v499 = vmul.f32 %v424, %v424
    %v500 = vmul.f32 %v425, %v425
    %v501 = vmul.f32 %v426, %v426
    %v502 = vmul.f32 %v427, %v427
    %v503 = vmul.f32 %v428, %v428
    %v504 = vmul.f32 %v429, %v429
    %v505 = vmul.f32 %v430, %v430
    %v506 = vmul.f32 %v431, %v431
    %v507 = vmul.f32 %v432, %v432
    %v508 = vmul.f32 %v433, %v433
    %v509 = vmul.f32 %v434, %v434
    %v510 = vmul.f32 %v435, %v435
    %v511 = vmul.f32 %v436, %v436
    %v512 = vmul.f32 %v437, %v437
    %v513 = vmul.f32 %v438, %v438
    %v514 = vmul.f32 %v439, %v439
    %v515 = vmul.f32 %v440, %v440
    %v516 = vmul.f32 %v441, %v441
    %v517 = vmul.f32 %v442, %v442
    %v518 = vmul.f32 %v443, %v443
    %v519 = vmul.f32 %v444, %v444
    %v520 = vmul.f32 %v445, %v445
    %v521 = vmul.f32 %v446, %v446
    %v522 = vmul.f32 %v447, %v447
    %v523 = vmul.f32 %v448, %v448
    %v524 = vmul.f32 %v449, %v449
    %v525 = vmul.f32 %v450, %v450
    %v526 = vmul.f32 %v451, %v451
    %v527 = vmul.f32 %v452, %v452
    %v528 = vmul.f32 %v453, %v453
    %v529 = vmul.f32 %v454, %v454
    %v530 = vmul.f32 %v455, %v455
    %v531 = vmul.f32 %v456, %v456
    %v532 = vld [vmem:[#allocation2] sm:$0x1]
    %vm533 = vcmask 785408
    %v534 = vsel %vm533, %v457, 0.0
    %v535 = vsel %vm533, %v458, 0.0
    %v536 = vadd.f32 %v534, %v535
    %v537 = vsel %vm533, %v459, 0.0
    %v538 = vadd.f32 %v536, %v537
    %v539 = vsel %vm533, %v460, 0.0
    %v540 = vadd.f32 %v538, %v539
    %v541 = vsel %vm533, %v461, 0.0
    %v542 = vadd.f32 %v540, %v541
    %v543 = vsel %vm533, %v462, 0.0
    %v544 = vadd.f32 %v542, %v543
    %v545 = vsel %vm533, %v463, 0.0
    %v546 = vadd.f32 %v544, %v545
    %v547 = vsel %vm533, %v464, 0.0
    %v548 = vadd.f32 %v546, %v547
    %v549 = vsel %vm533, %v465, 0.0
    %v550 = vadd.f32 %v548, %v549
    %v551 = vsel %vm533, %v466, 0.0
    %v552 = vadd.f32 %v550, %v551
    %v553 = vsel %vm533, %v467, 0.0
    %v554 = vadd.f32 %v552, %v553
    %v555 = vsel %vm533, %v468, 0.0
    %v556 = vadd.f32 %v554, %v555
    %v557 = vsel %vm533, %v469, 0.0
    %v558 = vadd.f32 %v556, %v557
    %v559 = vsel %vm533, %v470, 0.0
    %v560 = vadd.f32 %v558, %v559
    %v561 = vsel %vm533, %v471, 0.0
    %v562 = vadd.f32 %v560, %v561
    %v563 = vsel %vm533, %v472, 0.0
    %v564 = vadd.f32 %v562, %v563
    %v565 = vsel %vm533, %v473, 0.0
    %v566 = vadd.f32 %v564, %v565
    %v567 = vsel %vm533, %v474, 0.0
    %v568 = vadd.f32 %v566, %v567
    %v569 = vsel %vm533, %v475, 0.0
    %v570 = vadd.f32 %v568, %v569
    %v571 = vsel %vm533, %v476, 0.0
    %v572 = vadd.f32 %v570, %v571
    %v573 = vsel %vm533, %v477, 0.0
    %v574 = vadd.f32 %v572, %v573
    %v575 = vsel %vm533, %v478, 0.0
    %v576 = vadd.f32 %v574, %v575
    %v577 = vsel %vm533, %v479, 0.0
    %v578 = vadd.f32 %v576, %v577
    %v579 = vsel %vm533, %v480, 0.0
    %v580 = vadd.f32 %v578, %v579
    %v581 = vsel %vm533, %v481, 0.0
    %v582 = vadd.f32 %v580, %v581
    %v583 = vsel %vm533, %v482, 0.0
    %v584 = vadd.f32 %v582, %v583
    %v585 = vsel %vm533, %v483, 0.0
    %v586 = vadd.f32 %v584, %v585
    %v587 = vsel %vm533, %v484, 0.0
    %v588 = vadd.f32 %v586, %v587
    %v589 = vsel %vm533, %v485, 0.0
    %v590 = vadd.f32 %v588, %v589
    %v591 = vsel %vm533, %v486, 0.0
    %v592 = vadd.f32 %v590, %v591
    %v593 = vsel %vm533, %v487, 0.0
    %v594 = vadd.f32 %v592, %v593
    %v595 = vsel %vm533, %v488, 0.0
    %v596 = vadd.f32 %v594, %v595
    %v597 = vsel %vm533, %v489, 0.0
    %v598 = vadd.f32 %v596, %v597
    %v599 = vsel %vm533, %v490, 0.0
    %v600 = vadd.f32 %v598, %v599
    %v601 = vsel %vm533, %v491, 0.0
    %v602 = vadd.f32 %v600, %v601
    %v603 = vsel %vm533, %v492, 0.0
    %v604 = vadd.f32 %v602, %v603
    %v605 = vsel %vm533, %v493, 0.0
    %v606 = vadd.f32 %v604, %v605
    %v607 = vsel %vm533, %v494, 0.0
    %v608 = vadd.f32 %v606, %v607
    %v609 = vsel %vm533, %v495, 0.0
    %v610 = vadd.f32 %v608, %v609
    %v611 = vsel %vm533, %v496, 0.0
    %v612 = vadd.f32 %v610, %v611
    %v613 = vsel %vm533, %v497, 0.0
    %v614 = vadd.f32 %v612, %v613
    %v615 = vsel %vm533, %v498, 0.0
    %v616 = vadd.f32 %v614, %v615
    %v617 = vsel %vm533, %v499, 0.0
    %v618 = vadd.f32 %v616, %v617
    %v619 = vsel %vm533, %v500, 0.0
    %v620 = vadd.f32 %v618, %v619
    %v621 = vsel %vm533, %v501, 0.0
    %v622 = vadd.f32 %v620, %v621
    %v623 = vsel %vm533, %v502, 0.0
    %v624 = vadd.f32 %v622, %v623
    %v625 = vsel %vm533, %v503, 0.0
    %v626 = vadd.f32 %v624, %v625
    %v627 = vsel %vm533, %v504, 0.0
    %v628 = vadd.f32 %v626, %v627
    %v629 = vsel %vm533, %v505, 0.0
    %v630 = vadd.f32 %v628, %v629
    %v631 = vsel %vm533, %v506, 0.0
    %v632 = vadd.f32 %v630, %v631
    %v633 = vsel %vm533, %v507, 0.0
    %v634 = vadd.f32 %v632, %v633
    %v635 = vsel %vm533, %v508, 0.0
    %v636 = vadd.f32 %v634, %v635
    %v637 = vsel %vm533, %v509, 0.0
    %v638 = vadd.f32 %v636, %v637
    %v639 = vsel %vm533, %v510, 0.0
    %v640 = vadd.f32 %v638, %v639
    %v641 = vsel %vm533, %v511, 0.0
    %v642 = vadd.f32 %v640, %v641
    %v643 = vsel %vm533, %v512, 0.0
    %v644 = vadd.f32 %v642, %v643
    %v645 = vsel %vm533, %v513, 0.0
    %v646 = vadd.f32 %v644, %v645
    %v647 = vsel %vm533, %v514, 0.0
    %v648 = vadd.f32 %v646, %v647
    %v649 = vsel %vm533, %v515, 0.0
    %v650 = vadd.f32 %v648, %v649
    %v651 = vsel %vm533, %v516, 0.0
    %v652 = vadd.f32 %v650, %v651
    %v653 = vsel %vm533, %v517, 0.0
    %v654 = vadd.f32 %v652, %v653
    %v655 = vsel %vm533, %v518, 0.0
    %v656 = vadd.f32 %v654, %v655
    %v657 = vsel %vm533, %v519, 0.0
    %v658 = vadd.f32 %v656, %v657
    %v659 = vsel %vm533, %v520, 0.0
    %v660 = vadd.f32 %v658, %v659
    %v661 = vsel %vm533, %v521, 0.0
    %v662 = vadd.f32 %v660, %v661
    %v663 = vsel %vm533, %v522, 0.0
    %v664 = vadd.f32 %v662, %v663
    %v665 = vsel %vm533, %v523, 0.0
    %v666 = vadd.f32 %v664, %v665
    %v667 = vsel %vm533, %v524, 0.0
    %v668 = vadd.f32 %v666, %v667
    %v669 = vsel %vm533, %v525, 0.0
    %v670 = vadd.f32 %v668, %v669
    %v671 = vsel %vm533, %v526, 0.0
    %v672 = vadd.f32 %v670, %v671
    %v673 = vsel %vm533, %v527, 0.0
    %v674 = vadd.f32 %v672, %v673
    %v675 = vsel %vm533, %v528, 0.0
    %v676 = vadd.f32 %v674, %v675
    %v677 = vsel %vm533, %v529, 0.0
    %v678 = vadd.f32 %v676, %v677
    %v679 = vsel %vm533, %v530, 0.0
    %v680 = vadd.f32 %v678, %v679
    %v681 = vsel %vm533, %v531, 0.0
    %v682 = vadd.f32 %v680, %v681
    %v683 = vrot.slane %v682, 4
    %v684 = vadd.f32 %v682, %v683
    %v685 = vrot.slane %v684, 2
    %v686 = vadd.f32 %v684, %v685
    %v687 = vrot.slane %v686, 1
    %v688 = vadd.f32 %v686, %v687
    %v689 = vadd.f32 %v532, %v688
    %vm690 = vcmask 778240
    %691 = vst.msk [vmem:[#allocation2] sm:$0x1] %vm690, %v689
    %v692 = vld [vmem:[%s174] sm:$0xff]
    %v693 = vld [vmem:[%s174 + $0x8] sm:$0xff]
    %v694 = vld [vmem:[%s174 + $0x10] sm:$0xff]
    %v695 = vld [vmem:[%s174 + $0x18] sm:$0xff]
    %v696 = vld [vmem:[%s174 + $0x20] sm:$0xff]
    %v697 = vld [vmem:[%s174 + $0x28] sm:$0xff]
    %v698 = vld [vmem:[%s174 + $0x30] sm:$0xff]
    %v699 = vld [vmem:[%s174 + $0x38] sm:$0xff]
    %v700 = vld [vmem:[%s174 + $0x40] sm:$0xff]
    %v701 = vld [vmem:[%s174 + $0x48] sm:$0xff]
    %v702 = vld [vmem:[%s174 + $0x50] sm:$0xff]
    %v703 = vld [vmem:[%s174 + $0x58] sm:$0xff]
    %v704 = vld [vmem:[%s174 + $0x60] sm:$0xff]
    %v705 = vld [vmem:[%s174 + $0x68] sm:$0xff]
    %v706 = vld [vmem:[%s174 + $0x70] sm:$0xff]
    %v707 = vld [vmem:[%s174 + $0x78] sm:$0xff]
    %v708 = vld [vmem:[%s174 + $0x80] sm:$0xff]
    %v709 = vld [vmem:[%s174 + $0x88] sm:$0xff]
    %v710 = vld [vmem:[%s174 + $0x90] sm:$0xff]
    %v711 = vld [vmem:[%s174 + $0x98] sm:$0xff]
    %v712 = vld [vmem:[%s174 + $0xa0] sm:$0xff]
    %v713 = vld [vmem:[%s174 + $0xa8] sm:$0xff]
    %v714 = vld [vmem:[%s174 + $0xb0] sm:$0xff]
    %v715 = vld [vmem:[%s174 + $0xb8] sm:$0xff]
    %v716 = vld [vmem:[%s174 + $0xc0] sm:$0xff]
    %v717 = vld [vmem:[%s174 + $0xc8] sm:$0xff]
    %v718 = vld [vmem:[%s174 + $0xd0] sm:$0xff]
    %v719 = vld [vmem:[%s174 + $0xd8] sm:$0xff]
    %v720 = vld [vmem:[%s174 + $0xe0] sm:$0xff]
    %v721 = vld [vmem:[%s174 + $0xe8] sm:$0xff]
    %v722 = vld [vmem:[%s174 + $0xf0] sm:$0xff]
    %v723 = vld [vmem:[%s174 + $0xf8] sm:$0xff]
    %v724 = vld [vmem:[%s174 + $0x100] sm:$0xff]
    %v725 = vld [vmem:[%s174 + $0x108] sm:$0xff]
    %v726 = vld [vmem:[%s174 + $0x110] sm:$0xff]
    %v727 = vld [vmem:[%s174 + $0x118] sm:$0xff]
    %v728 = vld [vmem:[%s174 + $0x120] sm:$0xff]
    %v729 = vld [vmem:[%s174 + $0x128] sm:$0xff]
    %v730 = vld [vmem:[%s174 + $0x130] sm:$0xff]
    %v731 = vld [vmem:[%s174 + $0x138] sm:$0xff]
    %v732 = vld [vmem:[%s174 + $0x140] sm:$0xff]
    %v733 = vld [vmem:[%s174 + $0x148] sm:$0xff]
    %v734 = vld [vmem:[%s174 + $0x150] sm:$0xff]
    %v735 = vld [vmem:[%s174 + $0x158] sm:$0xff]
    %v736 = vld [vmem:[%s174 + $0x160] sm:$0xff]
    %v737 = vld [vmem:[%s174 + $0x168] sm:$0xff]
    %v738 = vld [vmem:[%s174 + $0x170] sm:$0xff]
    %v739 = vld [vmem:[%s174 + $0x178] sm:$0xff]
    %v740 = vld [vmem:[%s174 + $0x180] sm:$0xff]
    %v741 = vld [vmem:[%s174 + $0x188] sm:$0xff]
    %v742 = vld [vmem:[%s174 + $0x190] sm:$0xff]
    %v743 = vld [vmem:[%s174 + $0x198] sm:$0xff]
    %v744 = vld [vmem:[%s174 + $0x1a0] sm:$0xff]
    %v745 = vld [vmem:[%s174 + $0x1a8] sm:$0xff]
    %v746 = vld [vmem:[%s174 + $0x1b0] sm:$0xff]
    %v747 = vld [vmem:[%s174 + $0x1b8] sm:$0xff]
    %v748 = vld [vmem:[%s174 + $0x1c0] sm:$0xff]
    %v749 = vld [vmem:[%s174 + $0x1c8] sm:$0xff]
    %v750 = vld [vmem:[%s174 + $0x1d0] sm:$0xff]
    %v751 = vld [vmem:[%s174 + $0x1d8] sm:$0xff]
    %v752 = vld [vmem:[%s174 + $0x1e0] sm:$0xff]
    %v753 = vld [vmem:[%s174 + $0x1e8] sm:$0xff]
    %v754 = vld [vmem:[%s174 + $0x1f0] sm:$0xff]
    %v755 = vld [vmem:[%s174 + $0x1f8] sm:$0xff]
    %v756 = vld [vmem:[%s174 + $0x200] sm:$0xff]
    %v757 = vld [vmem:[%s174 + $0x208] sm:$0xff]
    %v758 = vld [vmem:[%s174 + $0x210] sm:$0xff]
    %v759 = vld [vmem:[%s174 + $0x218] sm:$0xff]
    %v760 = vld [vmem:[%s174 + $0x220] sm:$0xff]
    %v761 = vld [vmem:[%s174 + $0x228] sm:$0xff]
    %v762 = vld [vmem:[%s174 + $0x230] sm:$0xff]
    %v763 = vld [vmem:[%s174 + $0x238] sm:$0xff]
    %v764 = vld [vmem:[%s174 + $0x240] sm:$0xff]
    %v765 = vld [vmem:[%s174 + $0x248] sm:$0xff]
    %v766 = vld [vmem:[%s174 + $0x250] sm:$0xff]
    %v767 = vld [vmem:[%s186] sm:$0xff]
    %v768 = vld [vmem:[%s186 + $0x8] sm:$0xff]
    %v769 = vld [vmem:[%s186 + $0x10] sm:$0xff]
    %v770 = vld [vmem:[%s186 + $0x18] sm:$0xff]
    %v771 = vld [vmem:[%s186 + $0x20] sm:$0xff]
    %v772 = vld [vmem:[%s186 + $0x28] sm:$0xff]
    %v773 = vld [vmem:[%s186 + $0x30] sm:$0xff]
    %v774 = vld [vmem:[%s186 + $0x38] sm:$0xff]
    %v775 = vld [vmem:[%s186 + $0x40] sm:$0xff]
    %v776 = vld [vmem:[%s186 + $0x48] sm:$0xff]
    %v777 = vld [vmem:[%s186 + $0x50] sm:$0xff]
    %v778 = vld [vmem:[%s186 + $0x58] sm:$0xff]
    %v779 = vld [vmem:[%s186 + $0x60] sm:$0xff]
    %v780 = vld [vmem:[%s186 + $0x68] sm:$0xff]
    %v781 = vld [vmem:[%s186 + $0x70] sm:$0xff]
    %v782 = vld [vmem:[%s186 + $0x78] sm:$0xff]
    %v783 = vld [vmem:[%s186 + $0x80] sm:$0xff]
    %v784 = vld [vmem:[%s186 + $0x88] sm:$0xff]
    %v785 = vld [vmem:[%s186 + $0x90] sm:$0xff]
    %v786 = vld [vmem:[%s186 + $0x98] sm:$0xff]
    %v787 = vld [vmem:[%s186 + $0xa0] sm:$0xff]
    %v788 = vld [vmem:[%s186 + $0xa8] sm:$0xff]
    %v789 = vld [vmem:[%s186 + $0xb0] sm:$0xff]
    %v790 = vld [vmem:[%s186 + $0xb8] sm:$0xff]
    %v791 = vld [vmem:[%s186 + $0xc0] sm:$0xff]
    %v792 = vld [vmem:[%s186 + $0xc8] sm:$0xff]
    %v793 = vld [vmem:[%s186 + $0xd0] sm:$0xff]
    %v794 = vld [vmem:[%s186 + $0xd8] sm:$0xff]
    %v795 = vld [vmem:[%s186 + $0xe0] sm:$0xff]
    %v796 = vld [vmem:[%s186 + $0xe8] sm:$0xff]
    %v797 = vld [vmem:[%s186 + $0xf0] sm:$0xff]
    %v798 = vld [vmem:[%s186 + $0xf8] sm:$0xff]
    %v799 = vld [vmem:[%s186 + $0x100] sm:$0xff]
    %v800 = vld [vmem:[%s186 + $0x108] sm:$0xff]
    %v801 = vld [vmem:[%s186 + $0x110] sm:$0xff]
    %v802 = vld [vmem:[%s186 + $0x118] sm:$0xff]
    %v803 = vld [vmem:[%s186 + $0x120] sm:$0xff]
    %v804 = vld [vmem:[%s186 + $0x128] sm:$0xff]
    %v805 = vld [vmem:[%s186 + $0x130] sm:$0xff]
    %v806 = vld [vmem:[%s186 + $0x138] sm:$0xff]
    %v807 = vld [vmem:[%s186 + $0x140] sm:$0xff]
    %v808 = vld [vmem:[%s186 + $0x148] sm:$0xff]
    %v809 = vld [vmem:[%s186 + $0x150] sm:$0xff]
    %v810 = vld [vmem:[%s186 + $0x158] sm:$0xff]
    %v811 = vld [vmem:[%s186 + $0x160] sm:$0xff]
    %v812 = vld [vmem:[%s186 + $0x168] sm:$0xff]
    %v813 = vld [vmem:[%s186 + $0x170] sm:$0xff]
    %v814 = vld [vmem:[%s186 + $0x178] sm:$0xff]
    %v815 = vld [vmem:[%s186 + $0x180] sm:$0xff]
    %v816 = vld [vmem:[%s186 + $0x188] sm:$0xff]
    %v817 = vld [vmem:[%s186 + $0x190] sm:$0xff]
    %v818 = vld [vmem:[%s186 + $0x198] sm:$0xff]
    %v819 = vld [vmem:[%s186 + $0x1a0] sm:$0xff]
    %v820 = vld [vmem:[%s186 + $0x1a8] sm:$0xff]
    %v821 = vld [vmem:[%s186 + $0x1b0] sm:$0xff]
    %v822 = vld [vmem:[%s186 + $0x1b8] sm:$0xff]
    %v823 = vld [vmem:[%s186 + $0x1c0] sm:$0xff]
    %v824 = vld [vmem:[%s186 + $0x1c8] sm:$0xff]
    %v825 = vld [vmem:[%s186 + $0x1d0] sm:$0xff]
    %v826 = vld [vmem:[%s186 + $0x1d8] sm:$0xff]
    %v827 = vld [vmem:[%s186 + $0x1e0] sm:$0xff]
    %v828 = vld [vmem:[%s186 + $0x1e8] sm:$0xff]
    %v829 = vld [vmem:[%s186 + $0x1f0] sm:$0xff]
    %v830 = vld [vmem:[%s186 + $0x1f8] sm:$0xff]
    %v831 = vld [vmem:[%s186 + $0x200] sm:$0xff]
    %v832 = vld [vmem:[%s186 + $0x208] sm:$0xff]
    %v833 = vld [vmem:[%s186 + $0x210] sm:$0xff]
    %v834 = vld [vmem:[%s186 + $0x218] sm:$0xff]
    %v835 = vld [vmem:[%s186 + $0x220] sm:$0xff]
    %v836 = vld [vmem:[%s186 + $0x228] sm:$0xff]
    %v837 = vld [vmem:[%s186 + $0x230] sm:$0xff]
    %v838 = vld [vmem:[%s186 + $0x238] sm:$0xff]
    %v839 = vld [vmem:[%s186 + $0x240] sm:$0xff]
    %v840 = vld [vmem:[%s186 + $0x248] sm:$0xff]
    %v841 = vld [vmem:[%s186 + $0x250] sm:$0xff]
    %vm842 = vcmask 326656
    %v843 = vsel %vm842, %v692, -inf
    %844 = vmax.xlane.f32.xlu0 %v843
    %v845 = vpop.xlane.xlu0 %844
    %v846 = vsel %vm842, %v693, -inf
    %847 = vmax.xlane.f32.xlu0 %v846
    %v848 = vpop.xlane.xlu0 %847
    %v849 = vsel %vm842, %v694, -inf
    %850 = vmax.xlane.f32.xlu0 %v849
    %v851 = vpop.xlane.xlu0 %850
    %v852 = vsel %vm842, %v695, -inf
    %853 = vmax.xlane.f32.xlu0 %v852
    %v854 = vpop.xlane.xlu0 %853
    %v855 = vsel %vm842, %v696, -inf
    %856 = vmax.xlane.f32.xlu0 %v855
    %v857 = vpop.xlane.xlu0 %856
    %v858 = vsel %vm842, %v697, -inf
    %859 = vmax.xlane.f32.xlu0 %v858
    %v860 = vpop.xlane.xlu0 %859
    %v861 = vsel %vm842, %v698, -inf
    %862 = vmax.xlane.f32.xlu0 %v861
    %v863 = vpop.xlane.xlu0 %862
    %v864 = vsel %vm842, %v699, -inf
    %865 = vmax.xlane.f32.xlu0 %v864
    %v866 = vpop.xlane.xlu0 %865
    %v867 = vsel %vm842, %v700, -inf
    %868 = vmax.xlane.f32.xlu0 %v867
    %v869 = vpop.xlane.xlu0 %868
    %v870 = vsel %vm842, %v701, -inf
    %871 = vmax.xlane.f32.xlu0 %v870
    %v872 = vpop.xlane.xlu0 %871
    %v873 = vsel %vm842, %v702, -inf
    %874 = vmax.xlane.f32.xlu0 %v873
    %v875 = vpop.xlane.xlu0 %874
    %v876 = vsel %vm842, %v703, -inf
    %877 = vmax.xlane.f32.xlu0 %v876
    %v878 = vpop.xlane.xlu0 %877
    %v879 = vsel %vm842, %v704, -inf
    %880 = vmax.xlane.f32.xlu0 %v879
    %v881 = vpop.xlane.xlu0 %880
    %v882 = vsel %vm842, %v705, -inf
    %883 = vmax.xlane.f32.xlu0 %v882
    %v884 = vpop.xlane.xlu0 %883
    %v885 = vsel %vm842, %v706, -inf
    %886 = vmax.xlane.f32.xlu0 %v885
    %v887 = vpop.xlane.xlu0 %886
    %v888 = vsel %vm842, %v707, -inf
    %889 = vmax.xlane.f32.xlu0 %v888
    %v890 = vpop.xlane.xlu0 %889
    %v891 = vsel %vm842, %v708, -inf
    %892 = vmax.xlane.f32.xlu0 %v891
    %v893 = vpop.xlane.xlu0 %892
    %v894 = vsel %vm842, %v709, -inf
    %895 = vmax.xlane.f32.xlu0 %v894
    %v896 = vpop.xlane.xlu0 %895
    %v897 = vsel %vm842, %v710, -inf
    %898 = vmax.xlane.f32.xlu0 %v897
    %v899 = vpop.xlane.xlu0 %898
    %v900 = vsel %vm842, %v711, -inf
    %901 = vmax.xlane.f32.xlu0 %v900
    %v902 = vpop.xlane.xlu0 %901
    %v903 = vsel %vm842, %v712, -inf
    %904 = vmax.xlane.f32.xlu0 %v903
    %v905 = vpop.xlane.xlu0 %904
    %v906 = vsel %vm842, %v713, -inf
    %907 = vmax.xlane.f32.xlu0 %v906
    %v908 = vpop.xlane.xlu0 %907
    %v909 = vsel %vm842, %v714, -inf
    %910 = vmax.xlane.f32.xlu0 %v909
    %v911 = vpop.xlane.xlu0 %910
    %v912 = vsel %vm842, %v715, -inf
    %913 = vmax.xlane.f32.xlu0 %v912
    %v914 = vpop.xlane.xlu0 %913
    %v915 = vsel %vm842, %v716, -inf
    %916 = vmax.xlane.f32.xlu0 %v915
    %v917 = vpop.xlane.xlu0 %916
    %v918 = vsel %vm842, %v717, -inf
    %919 = vmax.xlane.f32.xlu0 %v918
    %v920 = vpop.xlane.xlu0 %919
    %v921 = vsel %vm842, %v718, -inf
    %922 = vmax.xlane.f32.xlu0 %v921
    %v923 = vpop.xlane.xlu0 %922
    %v924 = vsel %vm842, %v719, -inf
    %925 = vmax.xlane.f32.xlu0 %v924
    %v926 = vpop.xlane.xlu0 %925
    %v927 = vsel %vm842, %v720, -inf
    %928 = vmax.xlane.f32.xlu0 %v927
    %v929 = vpop.xlane.xlu0 %928
    %v930 = vsel %vm842, %v721, -inf
    %931 = vmax.xlane.f32.xlu0 %v930
    %v932 = vpop.xlane.xlu0 %931
    %v933 = vsel %vm842, %v722, -inf
    %934 = vmax.xlane.f32.xlu0 %v933
    %v935 = vpop.xlane.xlu0 %934
    %v936 = vsel %vm842, %v723, -inf
    %937 = vmax.xlane.f32.xlu0 %v936
    %v938 = vpop.xlane.xlu0 %937
    %v939 = vsel %vm842, %v724, -inf
    %940 = vmax.xlane.f32.xlu0 %v939
    %v941 = vpop.xlane.xlu0 %940
    %v942 = vsel %vm842, %v725, -inf
    %943 = vmax.xlane.f32.xlu0 %v942
    %v944 = vpop.xlane.xlu0 %943
    %v945 = vsel %vm842, %v726, -inf
    %946 = vmax.xlane.f32.xlu0 %v945
    %v947 = vpop.xlane.xlu0 %946
    %v948 = vsel %vm842, %v727, -inf
    %949 = vmax.xlane.f32.xlu0 %v948
    %v950 = vpop.xlane.xlu0 %949
    %v951 = vsel %vm842, %v728, -inf
    %952 = vmax.xlane.f32.xlu0 %v951
    %v953 = vpop.xlane.xlu0 %952
    %v954 = vsel %vm842, %v729, -inf
    %955 = vmax.xlane.f32.xlu0 %v954
    %v956 = vpop.xlane.xlu0 %955
    %v957 = vsel %vm842, %v730, -inf
    %958 = vmax.xlane.f32.xlu0 %v957
    %v959 = vpop.xlane.xlu0 %958
    %v960 = vsel %vm842, %v731, -inf
    %961 = vmax.xlane.f32.xlu0 %v960
    %v962 = vpop.xlane.xlu0 %961
    %v963 = vsel %vm842, %v732, -inf
    %964 = vmax.xlane.f32.xlu0 %v963
    %v965 = vpop.xlane.xlu0 %964
    %v966 = vsel %vm842, %v733, -inf
    %967 = vmax.xlane.f32.xlu0 %v966
    %v968 = vpop.xlane.xlu0 %967
    %v969 = vsel %vm842, %v734, -inf
    %970 = vmax.xlane.f32.xlu0 %v969
    %v971 = vpop.xlane.xlu0 %970
    %v972 = vsel %vm842, %v735, -inf
    %973 = vmax.xlane.f32.xlu0 %v972
    %v974 = vpop.xlane.xlu0 %973
    %v975 = vsel %vm842, %v736, -inf
    %976 = vmax.xlane.f32.xlu0 %v975
    %v977 = vpop.xlane.xlu0 %976
    %v978 = vsel %vm842, %v737, -inf
    %979 = vmax.xlane.f32.xlu0 %v978
    %v980 = vpop.xlane.xlu0 %979
    %v981 = vsel %vm842, %v738, -inf
    %982 = vmax.xlane.f32.xlu0 %v981
    %v983 = vpop.xlane.xlu0 %982
    %v984 = vsel %vm842, %v739, -inf
    %985 = vmax.xlane.f32.xlu0 %v984
    %v986 = vpop.xlane.xlu0 %985
    %v987 = vsel %vm842, %v740, -inf
    %988 = vmax.xlane.f32.xlu0 %v987
    %v989 = vpop.xlane.xlu0 %988
    %v990 = vsel %vm842, %v741, -inf
    %991 = vmax.xlane.f32.xlu0 %v990
    %v992 = vpop.xlane.xlu0 %991
    %v993 = vsel %vm842, %v742, -inf
    %994 = vmax.xlane.f32.xlu0 %v993
    %v995 = vpop.xlane.xlu0 %994
    %v996 = vsel %vm842, %v743, -inf
    %997 = vmax.xlane.f32.xlu0 %v996
    %v998 = vpop.xlane.xlu0 %997
    %v999 = vsel %vm842, %v744, -inf
    %1000 = vmax.xlane.f32.xlu0 %v999
    %v1001 = vpop.xlane.xlu0 %1000
    %v1002 = vsel %vm842, %v745, -inf
    %1003 = vmax.xlane.f32.xlu0 %v1002
    %v1004 = vpop.xlane.xlu0 %1003
    %v1005 = vsel %vm842, %v746, -inf
    %1006 = vmax.xlane.f32.xlu0 %v1005
    %v1007 = vpop.xlane.xlu0 %1006
    %v1008 = vsel %vm842, %v747, -inf
    %1009 = vmax.xlane.f32.xlu0 %v1008
    %v1010 = vpop.xlane.xlu0 %1009
    %v1011 = vsel %vm842, %v748, -inf
    %1012 = vmax.xlane.f32.xlu0 %v1011
    %v1013 = vpop.xlane.xlu0 %1012
    %v1014 = vsel %vm842, %v749, -inf
    %1015 = vmax.xlane.f32.xlu0 %v1014
    %v1016 = vpop.xlane.xlu0 %1015
    %v1017 = vsel %vm842, %v750, -inf
    %1018 = vmax.xlane.f32.xlu0 %v1017
    %v1019 = vpop.xlane.xlu0 %1018
    %v1020 = vsel %vm842, %v751, -inf
    %1021 = vmax.xlane.f32.xlu0 %v1020
    %v1022 = vpop.xlane.xlu0 %1021
    %v1023 = vsel %vm842, %v752, -inf
    %1024 = vmax.xlane.f32.xlu0 %v1023
    %v1025 = vpop.xlane.xlu0 %1024
    %v1026 = vsel %vm842, %v753, -inf
    %1027 = vmax.xlane.f32.xlu0 %v1026
    %v1028 = vpop.xlane.xlu0 %1027
    %v1029 = vsel %vm842, %v754, -inf
    %1030 = vmax.xlane.f32.xlu0 %v1029
    %v1031 = vpop.xlane.xlu0 %1030
    %v1032 = vsel %vm842, %v755, -inf
    %1033 = vmax.xlane.f32.xlu0 %v1032
    %v1034 = vpop.xlane.xlu0 %1033
    %v1035 = vsel %vm842, %v756, -inf
    %1036 = vmax.xlane.f32.xlu0 %v1035
    %v1037 = vpop.xlane.xlu0 %1036
    %v1038 = vsel %vm842, %v757, -inf
    %1039 = vmax.xlane.f32.xlu0 %v1038
    %v1040 = vpop.xlane.xlu0 %1039
    %v1041 = vsel %vm842, %v758, -inf
    %1042 = vmax.xlane.f32.xlu0 %v1041
    %v1043 = vpop.xlane.xlu0 %1042
    %v1044 = vsel %vm842, %v759, -inf
    %1045 = vmax.xlane.f32.xlu0 %v1044
    %v1046 = vpop.xlane.xlu0 %1045
    %v1047 = vsel %vm842, %v760, -inf
    %1048 = vmax.xlane.f32.xlu0 %v1047
    %v1049 = vpop.xlane.xlu0 %1048
    %v1050 = vsel %vm842, %v761, -inf
    %1051 = vmax.xlane.f32.xlu0 %v1050
    %v1052 = vpop.xlane.xlu0 %1051
    %v1053 = vsel %vm842, %v762, -inf
    %1054 = vmax.xlane.f32.xlu0 %v1053
    %v1055 = vpop.xlane.xlu0 %1054
    %v1056 = vsel %vm842, %v763, -inf
    %1057 = vmax.xlane.f32.xlu0 %v1056
    %v1058 = vpop.xlane.xlu0 %1057
    %v1059 = vsel %vm842, %v764, -inf
    %1060 = vmax.xlane.f32.xlu0 %v1059
    %v1061 = vpop.xlane.xlu0 %1060
    %v1062 = vsel %vm842, %v765, -inf
    %1063 = vmax.xlane.f32.xlu0 %v1062
    %v1064 = vpop.xlane.xlu0 %1063
    %v1065 = vsel %vm842, %v766, -inf
    %1066 = vmax.xlane.f32.xlu0 %v1065
    %v1067 = vpop.xlane.xlu0 %1066
    %v1068 = vsub.f32 %v692, %v845
    %v1069 = vsub.f32 %v693, %v848
    %v1070 = vsub.f32 %v694, %v851
    %v1071 = vsub.f32 %v695, %v854
    %v1072 = vsub.f32 %v696, %v857
    %v1073 = vsub.f32 %v697, %v860
    %v1074 = vsub.f32 %v698, %v863
    %v1075 = vsub.f32 %v699, %v866
    %v1076 = vsub.f32 %v700, %v869
    %v1077 = vsub.f32 %v701, %v872
    %v1078 = vsub.f32 %v702, %v875
    %v1079 = vsub.f32 %v703, %v878
    %v1080 = vsub.f32 %v704, %v881
    %v1081 = vsub.f32 %v705, %v884
    %v1082 = vsub.f32 %v706, %v887
    %v1083 = vsub.f32 %v707, %v890
    %v1084 = vsub.f32 %v708, %v893
    %v1085 = vsub.f32 %v709, %v896
    %v1086 = vsub.f32 %v710, %v899
    %v1087 = vsub.f32 %v711, %v902
    %v1088 = vsub.f32 %v712, %v905
    %v1089 = vsub.f32 %v713, %v908
    %v1090 = vsub.f32 %v714, %v911
    %v1091 = vsub.f32 %v715, %v914
    %v1092 = vsub.f32 %v716, %v917
    %v1093 = vsub.f32 %v717, %v920
    %v1094 = vsub.f32 %v718, %v923
    %v1095 = vsub.f32 %v719, %v926
    %v1096 = vsub.f32 %v720, %v929
    %v1097 = vsub.f32 %v721, %v932
    %v1098 = vsub.f32 %v722, %v935
    %v1099 = vsub.f32 %v723, %v938
    %v1100 = vsub.f32 %v724, %v941
    %v1101 = vsub.f32 %v725, %v944
    %v1102 = vsub.f32 %v726, %v947
    %v1103 = vsub.f32 %v727, %v950
    %v1104 = vsub.f32 %v728, %v953
    %v1105 = vsub.f32 %v729, %v956
    %v1106 = vsub.f32 %v730, %v959
    %v1107 = vsub.f32 %v731, %v962
    %v1108 = vsub.f32 %v732, %v965
    %v1109 = vsub.f32 %v733, %v968
    %v1110 = vsub.f32 %v734, %v971
    %v1111 = vsub.f32 %v735, %v974
    %v1112 = vsub.f32 %v736, %v977
    %v1113 = vsub.f32 %v737, %v980
    %v1114 = vsub.f32 %v738, %v983
    %v1115 = vsub.f32 %v739, %v986
    %v1116 = vsub.f32 %v740, %v989
    %v1117 = vsub.f32 %v741, %v992
    %v1118 = vsub.f32 %v742, %v995
    %v1119 = vsub.f32 %v743, %v998
    %v1120 = vsub.f32 %v744, %v1001
    %v1121 = vsub.f32 %v745, %v1004
    %v1122 = vsub.f32 %v746, %v1007
    %v1123 = vsub.f32 %v747, %v1010
    %v1124 = vsub.f32 %v748, %v1013
    %v1125 = vsub.f32 %v749, %v1016
    %v1126 = vsub.f32 %v750, %v1019
    %v1127 = vsub.f32 %v751, %v1022
    %v1128 = vsub.f32 %v752, %v1025
    %v1129 = vsub.f32 %v753, %v1028
    %v1130 = vsub.f32 %v754, %v1031
    %v1131 = vsub.f32 %v755, %v1034
    %v1132 = vsub.f32 %v756, %v1037
    %v1133 = vsub.f32 %v757, %v1040
    %v1134 = vsub.f32 %v758, %v1043
    %v1135 = vsub.f32 %v759, %v1046
    %v1136 = vsub.f32 %v760, %v1049
    %v1137 = vsub.f32 %v761, %v1052
    %v1138 = vsub.f32 %v762, %v1055
    %v1139 = vsub.f32 %v763, %v1058
    %v1140 = vsub.f32 %v764, %v1061
    %v1141 = vsub.f32 %v765, %v1064
    %v1142 = vsub.f32 %v766, %v1067
    %v1143 = vmul.f32 %v1068, 1.442695
    %v1144 = vpow.pop %v1143
    %v1145 = vmul.f32 %v1069, 1.442695
    %v1146 = vpow.pop %v1145
    %v1147 = vmul.f32 %v1070, 1.442695
    %v1148 = vpow.pop %v1147
    %v1149 = vmul.f32 %v1071, 1.442695
    %v1150 = vpow.pop %v1149
    %v1151 = vmul.f32 %v1072, 1.442695
    %v1152 = vpow.pop %v1151
    %v1153 = vmul.f32 %v1073, 1.442695
    %v1154 = vpow.pop %v1153
    %v1155 = vmul.f32 %v1074, 1.442695
    %v1156 = vpow.pop %v1155
    %v1157 = vmul.f32 %v1075, 1.442695
    %v1158 = vpow.pop %v1157
    %v1159 = vmul.f32 %v1076, 1.442695
    %v1160 = vpow.pop %v1159
    %v1161 = vmul.f32 %v1077, 1.442695
    %v1162 = vpow.pop %v1161
    %v1163 = vmul.f32 %v1078, 1.442695
    %v1164 = vpow.pop %v1163
    %v1165 = vmul.f32 %v1079, 1.442695
    %v1166 = vpow.pop %v1165
    %v1167 = vmul.f32 %v1080, 1.442695
    %v1168 = vpow.pop %v1167
    %v1169 = vmul.f32 %v1081, 1.442695
    %v1170 = vpow.pop %v1169
    %v1171 = vmul.f32 %v1082, 1.442695
    %v1172 = vpow.pop %v1171
    %v1173 = vmul.f32 %v1083, 1.442695
    %v1174 = vpow.pop %v1173
    %v1175 = vmul.f32 %v1084, 1.442695
    %v1176 = vpow.pop %v1175
    %v1177 = vmul.f32 %v1085, 1.442695
    %v1178 = vpow.pop %v1177
    %v1179 = vmul.f32 %v1086, 1.442695
    %v1180 = vpow.pop %v1179
    %v1181 = vmul.f32 %v1087, 1.442695
    %v1182 = vpow.pop %v1181
    %v1183 = vmul.f32 %v1088, 1.442695
    %v1184 = vpow.pop %v1183
    %v1185 = vmul.f32 %v1089, 1.442695
    %v1186 = vpow.pop %v1185
    %v1187 = vmul.f32 %v1090, 1.442695
    %v1188 = vpow.pop %v1187
    %v1189 = vmul.f32 %v1091, 1.442695
    %v1190 = vpow.pop %v1189
    %v1191 = vmul.f32 %v1092, 1.442695
    %v1192 = vpow.pop %v1191
    %v1193 = vmul.f32 %v1093, 1.442695
    %v1194 = vpow.pop %v1193
    %v1195 = vmul.f32 %v1094, 1.442695
    %v1196 = vpow.pop %v1195
    %v1197 = vmul.f32 %v1095, 1.442695
    %v1198 = vpow.pop %v1197
    %v1199 = vmul.f32 %v1096, 1.442695
    %v1200 = vpow.pop %v1199
    %v1201 = vmul.f32 %v1097, 1.442695
    %v1202 = vpow.pop %v1201
    %v1203 = vmul.f32 %v1098, 1.442695
    %v1204 = vpow.pop %v1203
    %v1205 = vmul.f32 %v1099, 1.442695
    %v1206 = vpow.pop %v1205
    %v1207 = vmul.f32 %v1100, 1.442695
    %v1208 = vpow.pop %v1207
    %v1209 = vmul.f32 %v1101, 1.442695
    %v1210 = vpow.pop %v1209
    %v1211 = vmul.f32 %v1102, 1.442695
    %v1212 = vpow.pop %v1211
    %v1213 = vmul.f32 %v1103, 1.442695
    %v1214 = vpow.pop %v1213
    %v1215 = vmul.f32 %v1104, 1.442695
    %v1216 = vpow.pop %v1215
    %v1217 = vmul.f32 %v1105, 1.442695
    %v1218 = vpow.pop %v1217
    %v1219 = vmul.f32 %v1106, 1.442695
    %v1220 = vpow.pop %v1219
    %v1221 = vmul.f32 %v1107, 1.442695
    %v1222 = vpow.pop %v1221
    %v1223 = vmul.f32 %v1108, 1.442695
    %v1224 = vpow.pop %v1223
    %v1225 = vmul.f32 %v1109, 1.442695
    %v1226 = vpow.pop %v1225
    %v1227 = vmul.f32 %v1110, 1.442695
    %v1228 = vpow.pop %v1227
    %v1229 = vmul.f32 %v1111, 1.442695
    %v1230 = vpow.pop %v1229
    %v1231 = vmul.f32 %v1112, 1.442695
    %v1232 = vpow.pop %v1231
    %v1233 = vmul.f32 %v1113, 1.442695
    %v1234 = vpow.pop %v1233
    %v1235 = vmul.f32 %v1114, 1.442695
    %v1236 = vpow.pop %v1235
    %v1237 = vmul.f32 %v1115, 1.442695
    %v1238 = vpow.pop %v1237
    %v1239 = vmul.f32 %v1116, 1.442695
    %v1240 = vpow.pop %v1239
    %v1241 = vmul.f32 %v1117, 1.442695
    %v1242 = vpow.pop %v1241
    %v1243 = vmul.f32 %v1118, 1.442695
    %v1244 = vpow.pop %v1243
    %v1245 = vmul.f32 %v1119, 1.442695
    %v1246 = vpow.pop %v1245
    %v1247 = vmul.f32 %v1120, 1.442695
    %v1248 = vpow.pop %v1247
    %v1249 = vmul.f32 %v1121, 1.442695
    %v1250 = vpow.pop %v1249
    %v1251 = vmul.f32 %v1122, 1.442695
    %v1252 = vpow.pop %v1251
    %v1253 = vmul.f32 %v1123, 1.442695
    %v1254 = vpow.pop %v1253
    %v1255 = vmul.f32 %v1124, 1.442695
    %v1256 = vpow.pop %v1255
    %v1257 = vmul.f32 %v1125, 1.442695
    %v1258 = vpow.pop %v1257
    %v1259 = vmul.f32 %v1126, 1.442695
    %v1260 = vpow.pop %v1259
    %v1261 = vmul.f32 %v1127, 1.442695
    %v1262 = vpow.pop %v1261
    %v1263 = vmul.f32 %v1128, 1.442695
    %v1264 = vpow.pop %v1263
    %v1265 = vmul.f32 %v1129, 1.442695
    %v1266 = vpow.pop %v1265
    %v1267 = vmul.f32 %v1130, 1.442695
    %v1268 = vpow.pop %v1267
    %v1269 = vmul.f32 %v1131, 1.442695
    %v1270 = vpow.pop %v1269
    %v1271 = vmul.f32 %v1132, 1.442695
    %v1272 = vpow.pop %v1271
    %v1273 = vmul.f32 %v1133, 1.442695
    %v1274 = vpow.pop %v1273
    %v1275 = vmul.f32 %v1134, 1.442695
    %v1276 = vpow.pop %v1275
    %v1277 = vmul.f32 %v1135, 1.442695
    %v1278 = vpow.pop %v1277
    %v1279 = vmul.f32 %v1136, 1.442695
    %v1280 = vpow.pop %v1279
    %v1281 = vmul.f32 %v1137, 1.442695
    %v1282 = vpow.pop %v1281
    %v1283 = vmul.f32 %v1138, 1.442695
    %v1284 = vpow.pop %v1283
    %v1285 = vmul.f32 %v1139, 1.442695
    %v1286 = vpow.pop %v1285
    %v1287 = vmul.f32 %v1140, 1.442695
    %v1288 = vpow.pop %v1287
    %v1289 = vmul.f32 %v1141, 1.442695
    %v1290 = vpow.pop %v1289
    %v1291 = vmul.f32 %v1142, 1.442695
    %v1292 = vpow.pop %v1291
    %v1293 = vsel %vm842, %v1144, 0.0
    %1294 = vadd.xlane.f32.xlu0 %v1293
    %v1295 = vpop.xlane.xlu0 %1294
    %v1296 = vsel %vm842, %v1146, 0.0
    %1297 = vadd.xlane.f32.xlu0 %v1296
    %v1298 = vpop.xlane.xlu0 %1297
    %v1299 = vsel %vm842, %v1148, 0.0
    %1300 = vadd.xlane.f32.xlu0 %v1299
    %v1301 = vpop.xlane.xlu0 %1300
    %v1302 = vsel %vm842, %v1150, 0.0
    %1303 = vadd.xlane.f32.xlu0 %v1302
    %v1304 = vpop.xlane.xlu0 %1303
    %v1305 = vsel %vm842, %v1152, 0.0
    %1306 = vadd.xlane.f32.xlu0 %v1305
    %v1307 = vpop.xlane.xlu0 %1306
    %v1308 = vsel %vm842, %v1154, 0.0
    %1309 = vadd.xlane.f32.xlu0 %v1308
    %v1310 = vpop.xlane.xlu0 %1309
    %v1311 = vsel %vm842, %v1156, 0.0
    %1312 = vadd.xlane.f32.xlu0 %v1311
    %v1313 = vpop.xlane.xlu0 %1312
    %v1314 = vsel %vm842, %v1158, 0.0
    %1315 = vadd.xlane.f32.xlu0 %v1314
    %v1316 = vpop.xlane.xlu0 %1315
    %v1317 = vsel %vm842, %v1160, 0.0
    %1318 = vadd.xlane.f32.xlu0 %v1317
    %v1319 = vpop.xlane.xlu0 %1318
    %v1320 = vsel %vm842, %v1162, 0.0
    %1321 = vadd.xlane.f32.xlu0 %v1320
    %v1322 = vpop.xlane.xlu0 %1321
    %v1323 = vsel %vm842, %v1164, 0.0
    %1324 = vadd.xlane.f32.xlu0 %v1323
    %v1325 = vpop.xlane.xlu0 %1324
    %v1326 = vsel %vm842, %v1166, 0.0
    %1327 = vadd.xlane.f32.xlu0 %v1326
    %v1328 = vpop.xlane.xlu0 %1327
    %v1329 = vsel %vm842, %v1168, 0.0
    %1330 = vadd.xlane.f32.xlu0 %v1329
    %v1331 = vpop.xlane.xlu0 %1330
    %v1332 = vsel %vm842, %v1170, 0.0
    %1333 = vadd.xlane.f32.xlu0 %v1332
    %v1334 = vpop.xlane.xlu0 %1333
    %v1335 = vsel %vm842, %v1172, 0.0
    %1336 = vadd.xlane.f32.xlu0 %v1335
    %v1337 = vpop.xlane.xlu0 %1336
    %v1338 = vsel %vm842, %v1174, 0.0
    %1339 = vadd.xlane.f32.xlu0 %v1338
    %v1340 = vpop.xlane.xlu0 %1339
    %v1341 = vsel %vm842, %v1176, 0.0
    %1342 = vadd.xlane.f32.xlu0 %v1341
    %v1343 = vpop.xlane.xlu0 %1342
    %v1344 = vsel %vm842, %v1178, 0.0
    %1345 = vadd.xlane.f32.xlu0 %v1344
    %v1346 = vpop.xlane.xlu0 %1345
    %v1347 = vsel %vm842, %v1180, 0.0
    %1348 = vadd.xlane.f32.xlu0 %v1347
    %v1349 = vpop.xlane.xlu0 %1348
    %v1350 = vsel %vm842, %v1182, 0.0
    %1351 = vadd.xlane.f32.xlu0 %v1350
    %v1352 = vpop.xlane.xlu0 %1351
    %v1353 = vsel %vm842, %v1184, 0.0
    %1354 = vadd.xlane.f32.xlu0 %v1353
    %v1355 = vpop.xlane.xlu0 %1354
    %v1356 = vsel %vm842, %v1186, 0.0
    %1357 = vadd.xlane.f32.xlu0 %v1356
    %v1358 = vpop.xlane.xlu0 %1357
    %v1359 = vsel %vm842, %v1188, 0.0
    %1360 = vadd.xlane.f32.xlu0 %v1359
    %v1361 = vpop.xlane.xlu0 %1360
    %v1362 = vsel %vm842, %v1190, 0.0
    %1363 = vadd.xlane.f32.xlu0 %v1362
    %v1364 = vpop.xlane.xlu0 %1363
    %v1365 = vsel %vm842, %v1192, 0.0
    %1366 = vadd.xlane.f32.xlu0 %v1365
    %v1367 = vpop.xlane.xlu0 %1366
    %v1368 = vsel %vm842, %v1194, 0.0
    %1369 = vadd.xlane.f32.xlu0 %v1368
    %v1370 = vpop.xlane.xlu0 %1369
    %v1371 = vsel %vm842, %v1196, 0.0
    %1372 = vadd.xlane.f32.xlu0 %v1371
    %v1373 = vpop.xlane.xlu0 %1372
    %v1374 = vsel %vm842, %v1198, 0.0
    %1375 = vadd.xlane.f32.xlu0 %v1374
    %v1376 = vpop.xlane.xlu0 %1375
    %v1377 = vsel %vm842, %v1200, 0.0
    %1378 = vadd.xlane.f32.xlu0 %v1377
    %v1379 = vpop.xlane.xlu0 %1378
    %v1380 = vsel %vm842, %v1202, 0.0
    %1381 = vadd.xlane.f32.xlu0 %v1380
    %v1382 = vpop.xlane.xlu0 %1381
    %v1383 = vsel %vm842, %v1204, 0.0
    %1384 = vadd.xlane.f32.xlu0 %v1383
    %v1385 = vpop.xlane.xlu0 %1384
    %v1386 = vsel %vm842, %v1206, 0.0
    %1387 = vadd.xlane.f32.xlu0 %v1386
    %v1388 = vpop.xlane.xlu0 %1387
    %v1389 = vsel %vm842, %v1208, 0.0
    %1390 = vadd.xlane.f32.xlu0 %v1389
    %v1391 = vpop.xlane.xlu0 %1390
    %v1392 = vsel %vm842, %v1210, 0.0
    %1393 = vadd.xlane.f32.xlu0 %v1392
    %v1394 = vpop.xlane.xlu0 %1393
    %v1395 = vsel %vm842, %v1212, 0.0
    %1396 = vadd.xlane.f32.xlu0 %v1395
    %v1397 = vpop.xlane.xlu0 %1396
    %v1398 = vsel %vm842, %v1214, 0.0
    %1399 = vadd.xlane.f32.xlu0 %v1398
    %v1400 = vpop.xlane.xlu0 %1399
    %v1401 = vsel %vm842, %v1216, 0.0
    %1402 = vadd.xlane.f32.xlu0 %v1401
    %v1403 = vpop.xlane.xlu0 %1402
    %v1404 = vsel %vm842, %v1218, 0.0
    %1405 = vadd.xlane.f32.xlu0 %v1404
    %v1406 = vpop.xlane.xlu0 %1405
    %v1407 = vsel %vm842, %v1220, 0.0
    %1408 = vadd.xlane.f32.xlu0 %v1407
    %v1409 = vpop.xlane.xlu0 %1408
    %v1410 = vsel %vm842, %v1222, 0.0
    %1411 = vadd.xlane.f32.xlu0 %v1410
    %v1412 = vpop.xlane.xlu0 %1411
    %v1413 = vsel %vm842, %v1224, 0.0
    %1414 = vadd.xlane.f32.xlu0 %v1413
    %v1415 = vpop.xlane.xlu0 %1414
    %v1416 = vsel %vm842, %v1226, 0.0
    %1417 = vadd.xlane.f32.xlu0 %v1416
    %v1418 = vpop.xlane.xlu0 %1417
    %v1419 = vsel %vm842, %v1228, 0.0
    %1420 = vadd.xlane.f32.xlu0 %v1419
    %v1421 = vpop.xlane.xlu0 %1420
    %v1422 = vsel %vm842, %v1230, 0.0
    %1423 = vadd.xlane.f32.xlu0 %v1422
    %v1424 = vpop.xlane.xlu0 %1423
    %v1425 = vsel %vm842, %v1232, 0.0
    %1426 = vadd.xlane.f32.xlu0 %v1425
    %v1427 = vpop.xlane.xlu0 %1426
    %v1428 = vsel %vm842, %v1234, 0.0
    %1429 = vadd.xlane.f32.xlu0 %v1428
    %v1430 = vpop.xlane.xlu0 %1429
    %v1431 = vsel %vm842, %v1236, 0.0
    %1432 = vadd.xlane.f32.xlu0 %v1431
    %v1433 = vpop.xlane.xlu0 %1432
    %v1434 = vsel %vm842, %v1238, 0.0
    %1435 = vadd.xlane.f32.xlu0 %v1434
    %v1436 = vpop.xlane.xlu0 %1435
    %v1437 = vsel %vm842, %v1240, 0.0
    %1438 = vadd.xlane.f32.xlu0 %v1437
    %v1439 = vpop.xlane.xlu0 %1438
    %v1440 = vsel %vm842, %v1242, 0.0
    %1441 = vadd.xlane.f32.xlu0 %v1440
    %v1442 = vpop.xlane.xlu0 %1441
    %v1443 = vsel %vm842, %v1244, 0.0
    %1444 = vadd.xlane.f32.xlu0 %v1443
    %v1445 = vpop.xlane.xlu0 %1444
    %v1446 = vsel %vm842, %v1246, 0.0
    %1447 = vadd.xlane.f32.xlu0 %v1446
    %v1448 = vpop.xlane.xlu0 %1447
    %v1449 = vsel %vm842, %v1248, 0.0
    %1450 = vadd.xlane.f32.xlu0 %v1449
    %v1451 = vpop.xlane.xlu0 %1450
    %v1452 = vsel %vm842, %v1250, 0.0
    %1453 = vadd.xlane.f32.xlu0 %v1452
    %v1454 = vpop.xlane.xlu0 %1453
    %v1455 = vsel %vm842, %v1252, 0.0
    %1456 = vadd.xlane.f32.xlu0 %v1455
    %v1457 = vpop.xlane.xlu0 %1456
    %v1458 = vsel %vm842, %v1254, 0.0
    %1459 = vadd.xlane.f32.xlu0 %v1458
    %v1460 = vpop.xlane.xlu0 %1459
    %v1461 = vsel %vm842, %v1256, 0.0
    %1462 = vadd.xlane.f32.xlu0 %v1461
    %v1463 = vpop.xlane.xlu0 %1462
    %v1464 = vsel %vm842, %v1258, 0.0
    %1465 = vadd.xlane.f32.xlu0 %v1464
    %v1466 = vpop.xlane.xlu0 %1465
    %v1467 = vsel %vm842, %v1260, 0.0
    %1468 = vadd.xlane.f32.xlu0 %v1467
    %v1469 = vpop.xlane.xlu0 %1468
    %v1470 = vsel %vm842, %v1262, 0.0
    %1471 = vadd.xlane.f32.xlu0 %v1470
    %v1472 = vpop.xlane.xlu0 %1471
    %v1473 = vsel %vm842, %v1264, 0.0
    %1474 = vadd.xlane.f32.xlu0 %v1473
    %v1475 = vpop.xlane.xlu0 %1474
    %v1476 = vsel %vm842, %v1266, 0.0
    %1477 = vadd.xlane.f32.xlu0 %v1476
    %v1478 = vpop.xlane.xlu0 %1477
    %v1479 = vsel %vm842, %v1268, 0.0
    %1480 = vadd.xlane.f32.xlu0 %v1479
    %v1481 = vpop.xlane.xlu0 %1480
    %v1482 = vsel %vm842, %v1270, 0.0
    %1483 = vadd.xlane.f32.xlu0 %v1482
    %v1484 = vpop.xlane.xlu0 %1483
    %v1485 = vsel %vm842, %v1272, 0.0
    %1486 = vadd.xlane.f32.xlu0 %v1485
    %v1487 = vpop.xlane.xlu0 %1486
    %v1488 = vsel %vm842, %v1274, 0.0
    %1489 = vadd.xlane.f32.xlu0 %v1488
    %v1490 = vpop.xlane.xlu0 %1489
    %v1491 = vsel %vm842, %v1276, 0.0
    %1492 = vadd.xlane.f32.xlu0 %v1491
    %v1493 = vpop.xlane.xlu0 %1492
    %v1494 = vsel %vm842, %v1278, 0.0
    %1495 = vadd.xlane.f32.xlu0 %v1494
    %v1496 = vpop.xlane.xlu0 %1495
    %v1497 = vsel %vm842, %v1280, 0.0
    %1498 = vadd.xlane.f32.xlu0 %v1497
    %v1499 = vpop.xlane.xlu0 %1498
    %v1500 = vsel %vm842, %v1282, 0.0
    %1501 = vadd.xlane.f32.xlu0 %v1500
    %v1502 = vpop.xlane.xlu0 %1501
    %v1503 = vsel %vm842, %v1284, 0.0
    %1504 = vadd.xlane.f32.xlu0 %v1503
    %v1505 = vpop.xlane.xlu0 %1504
    %v1506 = vsel %vm842, %v1286, 0.0
    %1507 = vadd.xlane.f32.xlu0 %v1506
    %v1508 = vpop.xlane.xlu0 %1507
    %v1509 = vsel %vm842, %v1288, 0.0
    %1510 = vadd.xlane.f32.xlu0 %v1509
    %v1511 = vpop.xlane.xlu0 %1510
    %v1512 = vsel %vm842, %v1290, 0.0
    %1513 = vadd.xlane.f32.xlu0 %v1512
    %v1514 = vpop.xlane.xlu0 %1513
    %v1515 = vsel %vm842, %v1292, 0.0
    %1516 = vadd.xlane.f32.xlu0 %v1515
    %v1517 = vpop.xlane.xlu0 %1516
    %v1518 = vlog2.pop %v1295
    %v1519 = vmul.f32 %v1518, 0.6931472
    %v1520 = vlog2.pop %v1298
    %v1521 = vmul.f32 %v1520, 0.6931472
    %v1522 = vlog2.pop %v1301
    %v1523 = vmul.f32 %v1522, 0.6931472
    %v1524 = vlog2.pop %v1304
    %v1525 = vmul.f32 %v1524, 0.6931472
    %v1526 = vlog2.pop %v1307
    %v1527 = vmul.f32 %v1526, 0.6931472
    %v1528 = vlog2.pop %v1310
    %v1529 = vmul.f32 %v1528, 0.6931472
    %v1530 = vlog2.pop %v1313
    %v1531 = vmul.f32 %v1530, 0.6931472
    %v1532 = vlog2.pop %v1316
    %v1533 = vmul.f32 %v1532, 0.6931472
    %v1534 = vlog2.pop %v1319
    %v1535 = vmul.f32 %v1534, 0.6931472
    %v1536 = vlog2.pop %v1322
    %v1537 = vmul.f32 %v1536, 0.6931472
    %v1538 = vlog2.pop %v1325
    %v1539 = vmul.f32 %v1538, 0.6931472
    %v1540 = vlog2.pop %v1328
    %v1541 = vmul.f32 %v1540, 0.6931472
    %v1542 = vlog2.pop %v1331
    %v1543 = vmul.f32 %v1542, 0.6931472
    %v1544 = vlog2.pop %v1334
    %v1545 = vmul.f32 %v1544, 0.6931472
    %v1546 = vlog2.pop %v1337
    %v1547 = vmul.f32 %v1546, 0.6931472
    %v1548 = vlog2.pop %v1340
    %v1549 = vmul.f32 %v1548, 0.6931472
    %v1550 = vlog2.pop %v1343
    %v1551 = vmul.f32 %v1550, 0.6931472
    %v1552 = vlog2.pop %v1346
    %v1553 = vmul.f32 %v1552, 0.6931472
    %v1554 = vlog2.pop %v1349
    %v1555 = vmul.f32 %v1554, 0.6931472
    %v1556 = vlog2.pop %v1352
    %v1557 = vmul.f32 %v1556, 0.6931472
    %v1558 = vlog2.pop %v1355
    %v1559 = vmul.f32 %v1558, 0.6931472
    %v1560 = vlog2.pop %v1358
    %v1561 = vmul.f32 %v1560, 0.6931472
    %v1562 = vlog2.pop %v1361
    %v1563 = vmul.f32 %v1562, 0.6931472
    %v1564 = vlog2.pop %v1364
    %v1565 = vmul.f32 %v1564, 0.6931472
    %v1566 = vlog2.pop %v1367
    %v1567 = vmul.f32 %v1566, 0.6931472
    %v1568 = vlog2.pop %v1370
    %v1569 = vmul.f32 %v1568, 0.6931472
    %v1570 = vlog2.pop %v1373
    %v1571 = vmul.f32 %v1570, 0.6931472
    %v1572 = vlog2.pop %v1376
    %v1573 = vmul.f32 %v1572, 0.6931472
    %v1574 = vlog2.pop %v1379
    %v1575 = vmul.f32 %v1574, 0.6931472
    %v1576 = vlog2.pop %v1382
    %v1577 = vmul.f32 %v1576, 0.6931472
    %v1578 = vlog2.pop %v1385
    %v1579 = vmul.f32 %v1578, 0.6931472
    %v1580 = vlog2.pop %v1388
    %v1581 = vmul.f32 %v1580, 0.6931472
    %v1582 = vlog2.pop %v1391
    %v1583 = vmul.f32 %v1582, 0.6931472
    %v1584 = vlog2.pop %v1394
    %v1585 = vmul.f32 %v1584, 0.6931472
    %v1586 = vlog2.pop %v1397
    %v1587 = vmul.f32 %v1586, 0.6931472
    %v1588 = vlog2.pop %v1400
    %v1589 = vmul.f32 %v1588, 0.6931472
    %v1590 = vlog2.pop %v1403
    %v1591 = vmul.f32 %v1590, 0.6931472
    %v1592 = vlog2.pop %v1406
    %v1593 = vmul.f32 %v1592, 0.6931472
    %v1594 = vlog2.pop %v1409
    %v1595 = vmul.f32 %v1594, 0.6931472
    %v1596 = vlog2.pop %v1412
    %v1597 = vmul.f32 %v1596, 0.6931472
    %v1598 = vlog2.pop %v1415
    %v1599 = vmul.f32 %v1598, 0.6931472
    %v1600 = vlog2.pop %v1418
    %v1601 = vmul.f32 %v1600, 0.6931472
    %v1602 = vlog2.pop %v1421
    %v1603 = vmul.f32 %v1602, 0.6931472
    %v1604 = vlog2.pop %v1424
    %v1605 = vmul.f32 %v1604, 0.6931472
    %v1606 = vlog2.pop %v1427
    %v1607 = vmul.f32 %v1606, 0.6931472
    %v1608 = vlog2.pop %v1430
    %v1609 = vmul.f32 %v1608, 0.6931472
    %v1610 = vlog2.pop %v1433
    %v1611 = vmul.f32 %v1610, 0.6931472
    %v1612 = vlog2.pop %v1436
    %v1613 = vmul.f32 %v1612, 0.6931472
    %v1614 = vlog2.pop %v1439
    %v1615 = vmul.f32 %v1614, 0.6931472
    %v1616 = vlog2.pop %v1442
    %v1617 = vmul.f32 %v1616, 0.6931472
    %v1618 = vlog2.pop %v1445
    %v1619 = vmul.f32 %v1618, 0.6931472
    %v1620 = vlog2.pop %v1448
    %v1621 = vmul.f32 %v1620, 0.6931472
    %v1622 = vlog2.pop %v1451
    %v1623 = vmul.f32 %v1622, 0.6931472
    %v1624 = vlog2.pop %v1454
    %v1625 = vmul.f32 %v1624, 0.6931472
    %v1626 = vlog2.pop %v1457
    %v1627 = vmul.f32 %v1626, 0.6931472
    %v1628 = vlog2.pop %v1460
    %v1629 = vmul.f32 %v1628, 0.6931472
    %v1630 = vlog2.pop %v1463
    %v1631 = vmul.f32 %v1630, 0.6931472
    %v1632 = vlog2.pop %v1466
    %v1633 = vmul.f32 %v1632, 0.6931472
    %v1634 = vlog2.pop %v1469
    %v1635 = vmul.f32 %v1634, 0.6931472
    %v1636 = vlog2.pop %v1472
    %v1637 = vmul.f32 %v1636, 0.6931472
    %v1638 = vlog2.pop %v1475
    %v1639 = vmul.f32 %v1638, 0.6931472
    %v1640 = vlog2.pop %v1478
    %v1641 = vmul.f32 %v1640, 0.6931472
    %v1642 = vlog2.pop %v1481
    %v1643 = vmul.f32 %v1642, 0.6931472
    %v1644 = vlog2.pop %v1484
    %v1645 = vmul.f32 %v1644, 0.6931472
    %v1646 = vlog2.pop %v1487
    %v1647 = vmul.f32 %v1646, 0.6931472
    %v1648 = vlog2.pop %v1490
    %v1649 = vmul.f32 %v1648, 0.6931472
    %v1650 = vlog2.pop %v1493
    %v1651 = vmul.f32 %v1650, 0.6931472
    %v1652 = vlog2.pop %v1496
    %v1653 = vmul.f32 %v1652, 0.6931472
    %v1654 = vlog2.pop %v1499
    %v1655 = vmul.f32 %v1654, 0.6931472
    %v1656 = vlog2.pop %v1502
    %v1657 = vmul.f32 %v1656, 0.6931472
    %v1658 = vlog2.pop %v1505
    %v1659 = vmul.f32 %v1658, 0.6931472
    %v1660 = vlog2.pop %v1508
    %v1661 = vmul.f32 %v1660, 0.6931472
    %v1662 = vlog2.pop %v1511
    %v1663 = vmul.f32 %v1662, 0.6931472
    %v1664 = vlog2.pop %v1514
    %v1665 = vmul.f32 %v1664, 0.6931472
    %v1666 = vlog2.pop %v1517
    %v1667 = vmul.f32 %v1666, 0.6931472
    %v1668 = vadd.f32 %v845, %v1519
    %v1669 = vadd.f32 %v848, %v1521
    %v1670 = vadd.f32 %v851, %v1523
    %v1671 = vadd.f32 %v854, %v1525
    %v1672 = vadd.f32 %v857, %v1527
    %v1673 = vadd.f32 %v860, %v1529
    %v1674 = vadd.f32 %v863, %v1531
    %v1675 = vadd.f32 %v866, %v1533
    %v1676 = vadd.f32 %v869, %v1535
    %v1677 = vadd.f32 %v872, %v1537
    %v1678 = vadd.f32 %v875, %v1539
    %v1679 = vadd.f32 %v878, %v1541
    %v1680 = vadd.f32 %v881, %v1543
    %v1681 = vadd.f32 %v884, %v1545
    %v1682 = vadd.f32 %v887, %v1547
    %v1683 = vadd.f32 %v890, %v1549
    %v1684 = vadd.f32 %v893, %v1551
    %v1685 = vadd.f32 %v896, %v1553
    %v1686 = vadd.f32 %v899, %v1555
    %v1687 = vadd.f32 %v902, %v1557
    %v1688 = vadd.f32 %v905, %v1559
    %v1689 = vadd.f32 %v908, %v1561
    %v1690 = vadd.f32 %v911, %v1563
    %v1691 = vadd.f32 %v914, %v1565
    %v1692 = vadd.f32 %v917, %v1567
    %v1693 = vadd.f32 %v920, %v1569
    %v1694 = vadd.f32 %v923, %v1571
    %v1695 = vadd.f32 %v926, %v1573
    %v1696 = vadd.f32 %v929, %v1575
    %v1697 = vadd.f32 %v932, %v1577
    %v1698 = vadd.f32 %v935, %v1579
    %v1699 = vadd.f32 %v938, %v1581
    %v1700 = vadd.f32 %v941, %v1583
    %v1701 = vadd.f32 %v944, %v1585
    %v1702 = vadd.f32 %v947, %v1587
    %v1703 = vadd.f32 %v950, %v1589
    %v1704 = vadd.f32 %v953, %v1591
    %v1705 = vadd.f32 %v956, %v1593
    %v1706 = vadd.f32 %v959, %v1595
    %v1707 = vadd.f32 %v962, %v1597
    %v1708 = vadd.f32 %v965, %v1599
    %v1709 = vadd.f32 %v968, %v1601
    %v1710 = vadd.f32 %v971, %v1603
    %v1711 = vadd.f32 %v974, %v1605
    %v1712 = vadd.f32 %v977, %v1607
    %v1713 = vadd.f32 %v980, %v1609
    %v1714 = vadd.f32 %v983, %v1611
    %v1715 = vadd.f32 %v986, %v1613
    %v1716 = vadd.f32 %v989, %v1615
    %v1717 = vadd.f32 %v992, %v1617
    %v1718 = vadd.f32 %v995, %v1619
    %v1719 = vadd.f32 %v998, %v1621
    %v1720 = vadd.f32 %v1001, %v1623
    %v1721 = vadd.f32 %v1004, %v1625
    %v1722 = vadd.f32 %v1007, %v1627
    %v1723 = vadd.f32 %v1010, %v1629
    %v1724 = vadd.f32 %v1013, %v1631
    %v1725 = vadd.f32 %v1016, %v1633
    %v1726 = vadd.f32 %v1019, %v1635
    %v1727 = vadd.f32 %v1022, %v1637
    %v1728 = vadd.f32 %v1025, %v1639
    %v1729 = vadd.f32 %v1028, %v1641
    %v1730 = vadd.f32 %v1031, %v1643
    %v1731 = vadd.f32 %v1034, %v1645
    %v1732 = vadd.f32 %v1037, %v1647
    %v1733 = vadd.f32 %v1040, %v1649
    %v1734 = vadd.f32 %v1043, %v1651
    %v1735 = vadd.f32 %v1046, %v1653
    %v1736 = vadd.f32 %v1049, %v1655
    %v1737 = vadd.f32 %v1052, %v1657
    %v1738 = vadd.f32 %v1055, %v1659
    %v1739 = vadd.f32 %v1058, %v1661
    %v1740 = vadd.f32 %v1061, %v1663
    %v1741 = vadd.f32 %v1064, %v1665
    %v1742 = vadd.f32 %v1067, %v1667
    %v1743 = vsub.f32 %v1668, %v767
    %v1744 = vsub.f32 %v1669, %v768
    %v1745 = vsub.f32 %v1670, %v769
    %v1746 = vsub.f32 %v1671, %v770
    %v1747 = vsub.f32 %v1672, %v771
    %v1748 = vsub.f32 %v1673, %v772
    %v1749 = vsub.f32 %v1674, %v773
    %v1750 = vsub.f32 %v1675, %v774
    %v1751 = vsub.f32 %v1676, %v775
    %v1752 = vsub.f32 %v1677, %v776
    %v1753 = vsub.f32 %v1678, %v777
    %v1754 = vsub.f32 %v1679, %v778
    %v1755 = vsub.f32 %v1680, %v779
    %v1756 = vsub.f32 %v1681, %v780
    %v1757 = vsub.f32 %v1682, %v781
    %v1758 = vsub.f32 %v1683, %v782
    %v1759 = vsub.f32 %v1684, %v783
    %v1760 = vsub.f32 %v1685, %v784
    %v1761 = vsub.f32 %v1686, %v785
    %v1762 = vsub.f32 %v1687, %v786
    %v1763 = vsub.f32 %v1688, %v787
    %v1764 = vsub.f32 %v1689, %v788
    %v1765 = vsub.f32 %v1690, %v789
    %v1766 = vsub.f32 %v1691, %v790
    %v1767 = vsub.f32 %v1692, %v791
    %v1768 = vsub.f32 %v1693, %v792
    %v1769 = vsub.f32 %v1694, %v793
    %v1770 = vsub.f32 %v1695, %v794
    %v1771 = vsub.f32 %v1696, %v795
    %v1772 = vsub.f32 %v1697, %v796
    %v1773 = vsub.f32 %v1698, %v797
    %v1774 = vsub.f32 %v1699, %v798
    %v1775 = vsub.f32 %v1700, %v799
    %v1776 = vsub.f32 %v1701, %v800
    %v1777 = vsub.f32 %v1702, %v801
    %v1778 = vsub.f32 %v1703, %v802
    %v1779 = vsub.f32 %v1704, %v803
    %v1780 = vsub.f32 %v1705, %v804
    %v1781 = vsub.f32 %v1706, %v805
    %v1782 = vsub.f32 %v1707, %v806
    %v1783 = vsub.f32 %v1708, %v807
    %v1784 = vsub.f32 %v1709, %v808
    %v1785 = vsub.f32 %v1710, %v809
    %v1786 = vsub.f32 %v1711, %v810
    %v1787 = vsub.f32 %v1712, %v811
    %v1788 = vsub.f32 %v1713, %v812
    %v1789 = vsub.f32 %v1714, %v813
    %v1790 = vsub.f32 %v1715, %v814
    %v1791 = vsub.f32 %v1716, %v815
    %v1792 = vsub.f32 %v1717, %v816
    %v1793 = vsub.f32 %v1718, %v817
    %v1794 = vsub.f32 %v1719, %v818
    %v1795 = vsub.f32 %v1720, %v819
    %v1796 = vsub.f32 %v1721, %v820
    %v1797 = vsub.f32 %v1722, %v821
    %v1798 = vsub.f32 %v1723, %v822
    %v1799 = vsub.f32 %v1724, %v823
    %v1800 = vsub.f32 %v1725, %v824
    %v1801 = vsub.f32 %v1726, %v825
    %v1802 = vsub.f32 %v1727, %v826
    %v1803 = vsub.f32 %v1728, %v827
    %v1804 = vsub.f32 %v1729, %v828
    %v1805 = vsub.f32 %v1730, %v829
    %v1806 = vsub.f32 %v1731, %v830
    %v1807 = vsub.f32 %v1732, %v831
    %v1808 = vsub.f32 %v1733, %v832
    %v1809 = vsub.f32 %v1734, %v833
    %v1810 = vsub.f32 %v1735, %v834
    %v1811 = vsub.f32 %v1736, %v835
    %v1812 = vsub.f32 %v1737, %v836
    %v1813 = vsub.f32 %v1738, %v837
    %v1814 = vsub.f32 %v1739, %v838
    %v1815 = vsub.f32 %v1740, %v839
    %v1816 = vsub.f32 %v1741, %v840
    %v1817 = vsub.f32 %v1742, %v841
    %v1818 = vld [vmem:[#allocation3] sm:$0x1]
    %vm1819 = vcmask 7168
    %v1820 = vsel %vm1819, %v1743, 0.0
    %v1821 = vsel %vm1819, %v1744, 0.0
    %v1822 = vadd.f32 %v1820, %v1821
    %v1823 = vsel %vm1819, %v1745, 0.0
    %v1824 = vadd.f32 %v1822, %v1823
    %v1825 = vsel %vm1819, %v1746, 0.0
    %v1826 = vadd.f32 %v1824, %v1825
    %v1827 = vsel %vm1819, %v1747, 0.0
    %v1828 = vadd.f32 %v1826, %v1827
    %v1829 = vsel %vm1819, %v1748, 0.0
    %v1830 = vadd.f32 %v1828, %v1829
    %v1831 = vsel %vm1819, %v1749, 0.0
    %v1832 = vadd.f32 %v1830, %v1831
    %v1833 = vsel %vm1819, %v1750, 0.0
    %v1834 = vadd.f32 %v1832, %v1833
    %v1835 = vsel %vm1819, %v1751, 0.0
    %v1836 = vadd.f32 %v1834, %v1835
    %v1837 = vsel %vm1819, %v1752, 0.0
    %v1838 = vadd.f32 %v1836, %v1837
    %v1839 = vsel %vm1819, %v1753, 0.0
    %v1840 = vadd.f32 %v1838, %v1839
    %v1841 = vsel %vm1819, %v1754, 0.0
    %v1842 = vadd.f32 %v1840, %v1841
    %v1843 = vsel %vm1819, %v1755, 0.0
    %v1844 = vadd.f32 %v1842, %v1843
    %v1845 = vsel %vm1819, %v1756, 0.0
    %v1846 = vadd.f32 %v1844, %v1845
    %v1847 = vsel %vm1819, %v1757, 0.0
    %v1848 = vadd.f32 %v1846, %v1847
    %v1849 = vsel %vm1819, %v1758, 0.0
    %v1850 = vadd.f32 %v1848, %v1849
    %v1851 = vsel %vm1819, %v1759, 0.0
    %v1852 = vadd.f32 %v1850, %v1851
    %v1853 = vsel %vm1819, %v1760, 0.0
    %v1854 = vadd.f32 %v1852, %v1853
    %v1855 = vsel %vm1819, %v1761, 0.0
    %v1856 = vadd.f32 %v1854, %v1855
    %v1857 = vsel %vm1819, %v1762, 0.0
    %v1858 = vadd.f32 %v1856, %v1857
    %v1859 = vsel %vm1819, %v1763, 0.0
    %v1860 = vadd.f32 %v1858, %v1859
    %v1861 = vsel %vm1819, %v1764, 0.0
    %v1862 = vadd.f32 %v1860, %v1861
    %v1863 = vsel %vm1819, %v1765, 0.0
    %v1864 = vadd.f32 %v1862, %v1863
    %v1865 = vsel %vm1819, %v1766, 0.0
    %v1866 = vadd.f32 %v1864, %v1865
    %v1867 = vsel %vm1819, %v1767, 0.0
    %v1868 = vadd.f32 %v1866, %v1867
    %v1869 = vsel %vm1819, %v1768, 0.0
    %v1870 = vadd.f32 %v1868, %v1869
    %v1871 = vsel %vm1819, %v1769, 0.0
    %v1872 = vadd.f32 %v1870, %v1871
    %v1873 = vsel %vm1819, %v1770, 0.0
    %v1874 = vadd.f32 %v1872, %v1873
    %v1875 = vsel %vm1819, %v1771, 0.0
    %v1876 = vadd.f32 %v1874, %v1875
    %v1877 = vsel %vm1819, %v1772, 0.0
    %v1878 = vadd.f32 %v1876, %v1877
    %v1879 = vsel %vm1819, %v1773, 0.0
    %v1880 = vadd.f32 %v1878, %v1879
    %v1881 = vsel %vm1819, %v1774, 0.0
    %v1882 = vadd.f32 %v1880, %v1881
    %v1883 = vsel %vm1819, %v1775, 0.0
    %v1884 = vadd.f32 %v1882, %v1883
    %v1885 = vsel %vm1819, %v1776, 0.0
    %v1886 = vadd.f32 %v1884, %v1885
    %v1887 = vsel %vm1819, %v1777, 0.0
    %v1888 = vadd.f32 %v1886, %v1887
    %v1889 = vsel %vm1819, %v1778, 0.0
    %v1890 = vadd.f32 %v1888, %v1889
    %v1891 = vsel %vm1819, %v1779, 0.0
    %v1892 = vadd.f32 %v1890, %v1891
    %v1893 = vsel %vm1819, %v1780, 0.0
    %v1894 = vadd.f32 %v1892, %v1893
    %v1895 = vsel %vm1819, %v1781, 0.0
    %v1896 = vadd.f32 %v1894, %v1895
    %v1897 = vsel %vm1819, %v1782, 0.0
    %v1898 = vadd.f32 %v1896, %v1897
    %v1899 = vsel %vm1819, %v1783, 0.0
    %v1900 = vadd.f32 %v1898, %v1899
    %v1901 = vsel %vm1819, %v1784, 0.0
    %v1902 = vadd.f32 %v1900, %v1901
    %v1903 = vsel %vm1819, %v1785, 0.0
    %v1904 = vadd.f32 %v1902, %v1903
    %v1905 = vsel %vm1819, %v1786, 0.0
    %v1906 = vadd.f32 %v1904, %v1905
    %v1907 = vsel %vm1819, %v1787, 0.0
    %v1908 = vadd.f32 %v1906, %v1907
    %v1909 = vsel %vm1819, %v1788, 0.0
    %v1910 = vadd.f32 %v1908, %v1909
    %v1911 = vsel %vm1819, %v1789, 0.0
    %v1912 = vadd.f32 %v1910, %v1911
    %v1913 = vsel %vm1819, %v1790, 0.0
    %v1914 = vadd.f32 %v1912, %v1913
    %v1915 = vsel %vm1819, %v1791, 0.0
    %v1916 = vadd.f32 %v1914, %v1915
    %v1917 = vsel %vm1819, %v1792, 0.0
    %v1918 = vadd.f32 %v1916, %v1917
    %v1919 = vsel %vm1819, %v1793, 0.0
    %v1920 = vadd.f32 %v1918, %v1919
    %v1921 = vsel %vm1819, %v1794, 0.0
    %v1922 = vadd.f32 %v1920, %v1921
    %v1923 = vsel %vm1819, %v1795, 0.0
    %v1924 = vadd.f32 %v1922, %v1923
    %v1925 = vsel %vm1819, %v1796, 0.0
    %v1926 = vadd.f32 %v1924, %v1925
    %v1927 = vsel %vm1819, %v1797, 0.0
    %v1928 = vadd.f32 %v1926, %v1927
    %v1929 = vsel %vm1819, %v1798, 0.0
    %v1930 = vadd.f32 %v1928, %v1929
    %v1931 = vsel %vm1819, %v1799, 0.0
    %v1932 = vadd.f32 %v1930, %v1931
    %v1933 = vsel %vm1819, %v1800, 0.0
    %v1934 = vadd.f32 %v1932, %v1933
    %v1935 = vsel %vm1819, %v1801, 0.0
    %v1936 = vadd.f32 %v1934, %v1935
    %v1937 = vsel %vm1819, %v1802, 0.0
    %v1938 = vadd.f32 %v1936, %v1937
    %v1939 = vsel %vm1819, %v1803, 0.0
    %v1940 = vadd.f32 %v1938, %v1939
    %v1941 = vsel %vm1819, %v1804, 0.0
    %v1942 = vadd.f32 %v1940, %v1941
    %v1943 = vsel %vm1819, %v1805, 0.0
    %v1944 = vadd.f32 %v1942, %v1943
    %v1945 = vsel %vm1819, %v1806, 0.0
    %v1946 = vadd.f32 %v1944, %v1945
    %v1947 = vsel %vm1819, %v1807, 0.0
    %v1948 = vadd.f32 %v1946, %v1947
    %v1949 = vsel %vm1819, %v1808, 0.0
    %v1950 = vadd.f32 %v1948, %v1949
    %v1951 = vsel %vm1819, %v1809, 0.0
    %v1952 = vadd.f32 %v1950, %v1951
    %v1953 = vsel %vm1819, %v1810, 0.0
    %v1954 = vadd.f32 %v1952, %v1953
    %v1955 = vsel %vm1819, %v1811, 0.0
    %v1956 = vadd.f32 %v1954, %v1955
    %v1957 = vsel %vm1819, %v1812, 0.0
    %v1958 = vadd.f32 %v1956, %v1957
    %v1959 = vsel %vm1819, %v1813, 0.0
    %v1960 = vadd.f32 %v1958, %v1959
    %v1961 = vsel %vm1819, %v1814, 0.0
    %v1962 = vadd.f32 %v1960, %v1961
    %v1963 = vsel %vm1819, %v1815, 0.0
    %v1964 = vadd.f32 %v1962, %v1963
    %v1965 = vsel %vm1819, %v1816, 0.0
    %v1966 = vadd.f32 %v1964, %v1965
    %v1967 = vsel %vm1819, %v1817, 0.0
    %v1968 = vadd.f32 %v1966, %v1967
    %v1969 = vrot.slane %v1968, 4
    %v1970 = vadd.f32 %v1968, %v1969
    %v1971 = vrot.slane %v1970, 2
    %v1972 = vadd.f32 %v1970, %v1971
    %v1973 = vrot.slane %v1972, 1
    %v1974 = vadd.f32 %v1972, %v1973
    %v1975 = vadd.f32 %v1818, %v1974
    %vm1976 = vcmask 0
    %1977 = vst.msk [vmem:[#allocation3] sm:$0x1] %vm1976, %v1975
    %v1978 = vld [vmem:[%s198] sm:$0xff]
    %v1979 = vld [vmem:[%s198 + $0x8] sm:$0xff]
    %v1980 = vld [vmem:[%s198 + $0x10] sm:$0xff]
    %v1981 = vld [vmem:[%s198 + $0x18] sm:$0xff]
    %v1982 = vld [vmem:[%s198 + $0x20] sm:$0xff]
    %v1983 = vld [vmem:[%s198 + $0x28] sm:$0xff]
    %v1984 = vld [vmem:[%s198 + $0x30] sm:$0xff]
    %v1985 = vld [vmem:[%s198 + $0x38] sm:$0xff]
    %v1986 = vld [vmem:[%s198 + $0x40] sm:$0xff]
    %v1987 = vld [vmem:[%s198 + $0x48] sm:$0xff]
    %v1988 = vld [vmem:[%s198 + $0x50] sm:$0xff]
    %v1989 = vld [vmem:[%s198 + $0x58] sm:$0xff]
    %v1990 = vld [vmem:[%s198 + $0x60] sm:$0xff]
    %v1991 = vld [vmem:[%s198 + $0x68] sm:$0xff]
    %v1992 = vld [vmem:[%s198 + $0x70] sm:$0xff]
    %v1993 = vld [vmem:[%s198 + $0x78] sm:$0xff]
    %v1994 = vld [vmem:[%s198 + $0x80] sm:$0xff]
    %v1995 = vld [vmem:[%s198 + $0x88] sm:$0xff]
    %v1996 = vld [vmem:[%s198 + $0x90] sm:$0xff]
    %v1997 = vld [vmem:[%s198 + $0x98] sm:$0xff]
    %v1998 = vld [vmem:[%s198 + $0xa0] sm:$0xff]
    %v1999 = vld [vmem:[%s198 + $0xa8] sm:$0xff]
    %v2000 = vld [vmem:[%s198 + $0xb0] sm:$0xff]
    %v2001 = vld [vmem:[%s198 + $0xb8] sm:$0xff]
    %v2002 = vld [vmem:[%s198 + $0xc0] sm:$0xff]
    %v2003 = vld [vmem:[%s198 + $0xc8] sm:$0xff]
    %v2004 = vld [vmem:[%s198 + $0xd0] sm:$0xff]
    %v2005 = vld [vmem:[%s198 + $0xd8] sm:$0xff]
    %v2006 = vld [vmem:[%s198 + $0xe0] sm:$0xff]
    %v2007 = vld [vmem:[%s198 + $0xe8] sm:$0xff]
    %v2008 = vld [vmem:[%s198 + $0xf0] sm:$0xff]
    %v2009 = vld [vmem:[%s198 + $0xf8] sm:$0xff]
    %v2010 = vld [vmem:[%s198 + $0x100] sm:$0xff]
    %v2011 = vld [vmem:[%s198 + $0x108] sm:$0xff]
    %v2012 = vld [vmem:[%s198 + $0x110] sm:$0xff]
    %v2013 = vld [vmem:[%s198 + $0x118] sm:$0xff]
    %v2014 = vld [vmem:[%s198 + $0x120] sm:$0xff]
    %v2015 = vld [vmem:[%s198 + $0x128] sm:$0xff]
    %v2016 = vld [vmem:[%s198 + $0x130] sm:$0xff]
    %v2017 = vld [vmem:[%s198 + $0x138] sm:$0xff]
    %v2018 = vld [vmem:[%s198 + $0x140] sm:$0xff]
    %v2019 = vld [vmem:[%s198 + $0x148] sm:$0xff]
    %v2020 = vld [vmem:[%s198 + $0x150] sm:$0xff]
    %v2021 = vld [vmem:[%s198 + $0x158] sm:$0xff]
    %v2022 = vld [vmem:[%s198 + $0x160] sm:$0xff]
    %v2023 = vld [vmem:[%s198 + $0x168] sm:$0xff]
    %v2024 = vld [vmem:[%s198 + $0x170] sm:$0xff]
    %v2025 = vld [vmem:[%s198 + $0x178] sm:$0xff]
    %v2026 = vld [vmem:[%s198 + $0x180] sm:$0xff]
    %v2027 = vld [vmem:[%s198 + $0x188] sm:$0xff]
    %v2028 = vld [vmem:[%s198 + $0x190] sm:$0xff]
    %v2029 = vld [vmem:[%s198 + $0x198] sm:$0xff]
    %v2030 = vld [vmem:[%s198 + $0x1a0] sm:$0xff]
    %v2031 = vld [vmem:[%s198 + $0x1a8] sm:$0xff]
    %v2032 = vld [vmem:[%s198 + $0x1b0] sm:$0xff]
    %v2033 = vld [vmem:[%s198 + $0x1b8] sm:$0xff]
    %v2034 = vld [vmem:[%s198 + $0x1c0] sm:$0xff]
    %v2035 = vld [vmem:[%s198 + $0x1c8] sm:$0xff]
    %v2036 = vld [vmem:[%s198 + $0x1d0] sm:$0xff]
    %v2037 = vld [vmem:[%s198 + $0x1d8] sm:$0xff]
    %v2038 = vld [vmem:[%s198 + $0x1e0] sm:$0xff]
    %v2039 = vld [vmem:[%s198 + $0x1e8] sm:$0xff]
    %v2040 = vld [vmem:[%s198 + $0x1f0] sm:$0xff]
    %v2041 = vld [vmem:[%s198 + $0x1f8] sm:$0xff]
    %v2042 = vld [vmem:[%s198 + $0x200] sm:$0xff]
    %v2043 = vld [vmem:[%s198 + $0x208] sm:$0xff]
    %v2044 = vld [vmem:[%s198 + $0x210] sm:$0xff]
    %v2045 = vld [vmem:[%s198 + $0x218] sm:$0xff]
    %v2046 = vld [vmem:[%s198 + $0x220] sm:$0xff]
    %v2047 = vld [vmem:[%s198 + $0x228] sm:$0xff]
    %v2048 = vld [vmem:[%s198 + $0x230] sm:$0xff]
    %v2049 = vld [vmem:[%s198 + $0x238] sm:$0xff]
    %v2050 = vld [vmem:[%s198 + $0x240] sm:$0xff]
    %v2051 = vld [vmem:[%s198 + $0x248] sm:$0xff]
    %v2052 = vld [vmem:[%s198 + $0x250] sm:$0xff]
    %v2053 = vld [vmem:[%s210] sm:$0xff]
    %v2054 = vld [vmem:[%s210 + $0x8] sm:$0xff]
    %v2055 = vld [vmem:[%s210 + $0x10] sm:$0xff]
    %v2056 = vld [vmem:[%s210 + $0x18] sm:$0xff]
    %v2057 = vld [vmem:[%s210 + $0x20] sm:$0xff]
    %v2058 = vld [vmem:[%s210 + $0x28] sm:$0xff]
    %v2059 = vld [vmem:[%s210 + $0x30] sm:$0xff]
    %v2060 = vld [vmem:[%s210 + $0x38] sm:$0xff]
    %v2061 = vld [vmem:[%s210 + $0x40] sm:$0xff]
    %v2062 = vld [vmem:[%s210 + $0x48] sm:$0xff]
    %v2063 = vld [vmem:[%s210 + $0x50] sm:$0xff]
    %v2064 = vld [vmem:[%s210 + $0x58] sm:$0xff]
    %v2065 = vld [vmem:[%s210 + $0x60] sm:$0xff]
    %v2066 = vld [vmem:[%s210 + $0x68] sm:$0xff]
    %v2067 = vld [vmem:[%s210 + $0x70] sm:$0xff]
    %v2068 = vld [vmem:[%s210 + $0x78] sm:$0xff]
    %v2069 = vld [vmem:[%s210 + $0x80] sm:$0xff]
    %v2070 = vld [vmem:[%s210 + $0x88] sm:$0xff]
    %v2071 = vld [vmem:[%s210 + $0x90] sm:$0xff]
    %v2072 = vld [vmem:[%s210 + $0x98] sm:$0xff]
    %v2073 = vld [vmem:[%s210 + $0xa0] sm:$0xff]
    %v2074 = vld [vmem:[%s210 + $0xa8] sm:$0xff]
    %v2075 = vld [vmem:[%s210 + $0xb0] sm:$0xff]
    %v2076 = vld [vmem:[%s210 + $0xb8] sm:$0xff]
    %v2077 = vld [vmem:[%s210 + $0xc0] sm:$0xff]
    %v2078 = vld [vmem:[%s210 + $0xc8] sm:$0xff]
    %v2079 = vld [vmem:[%s210 + $0xd0] sm:$0xff]
    %v2080 = vld [vmem:[%s210 + $0xd8] sm:$0xff]
    %v2081 = vld [vmem:[%s210 + $0xe0] sm:$0xff]
    %v2082 = vld [vmem:[%s210 + $0xe8] sm:$0xff]
    %v2083 = vld [vmem:[%s210 + $0xf0] sm:$0xff]
    %v2084 = vld [vmem:[%s210 + $0xf8] sm:$0xff]
    %v2085 = vld [vmem:[%s210 + $0x100] sm:$0xff]
    %v2086 = vld [vmem:[%s210 + $0x108] sm:$0xff]
    %v2087 = vld [vmem:[%s210 + $0x110] sm:$0xff]
    %v2088 = vld [vmem:[%s210 + $0x118] sm:$0xff]
    %v2089 = vld [vmem:[%s210 + $0x120] sm:$0xff]
    %v2090 = vld [vmem:[%s210 + $0x128] sm:$0xff]
    %v2091 = vld [vmem:[%s210 + $0x130] sm:$0xff]
    %v2092 = vld [vmem:[%s210 + $0x138] sm:$0xff]
    %v2093 = vld [vmem:[%s210 + $0x140] sm:$0xff]
    %v2094 = vld [vmem:[%s210 + $0x148] sm:$0xff]
    %v2095 = vld [vmem:[%s210 + $0x150] sm:$0xff]
    %v2096 = vld [vmem:[%s210 + $0x158] sm:$0xff]
    %v2097 = vld [vmem:[%s210 + $0x160] sm:$0xff]
    %v2098 = vld [vmem:[%s210 + $0x168] sm:$0xff]
    %v2099 = vld [vmem:[%s210 + $0x170] sm:$0xff]
    %v2100 = vld [vmem:[%s210 + $0x178] sm:$0xff]
    %v2101 = vld [vmem:[%s210 + $0x180] sm:$0xff]
    %v2102 = vld [vmem:[%s210 + $0x188] sm:$0xff]
    %v2103 = vld [vmem:[%s210 + $0x190] sm:$0xff]
    %v2104 = vld [vmem:[%s210 + $0x198] sm:$0xff]
    %v2105 = vld [vmem:[%s210 + $0x1a0] sm:$0xff]
    %v2106 = vld [vmem:[%s210 + $0x1a8] sm:$0xff]
    %v2107 = vld [vmem:[%s210 + $0x1b0] sm:$0xff]
    %v2108 = vld [vmem:[%s210 + $0x1b8] sm:$0xff]
    %v2109 = vld [vmem:[%s210 + $0x1c0] sm:$0xff]
    %v2110 = vld [vmem:[%s210 + $0x1c8] sm:$0xff]
    %v2111 = vld [vmem:[%s210 + $0x1d0] sm:$0xff]
    %v2112 = vld [vmem:[%s210 + $0x1d8] sm:$0xff]
    %v2113 = vld [vmem:[%s210 + $0x1e0] sm:$0xff]
    %v2114 = vld [vmem:[%s210 + $0x1e8] sm:$0xff]
    %v2115 = vld [vmem:[%s210 + $0x1f0] sm:$0xff]
    %v2116 = vld [vmem:[%s210 + $0x1f8] sm:$0xff]
    %v2117 = vld [vmem:[%s210 + $0x200] sm:$0xff]
    %v2118 = vld [vmem:[%s210 + $0x208] sm:$0xff]
    %v2119 = vld [vmem:[%s210 + $0x210] sm:$0xff]
    %v2120 = vld [vmem:[%s210 + $0x218] sm:$0xff]
    %v2121 = vld [vmem:[%s210 + $0x220] sm:$0xff]
    %v2122 = vld [vmem:[%s210 + $0x228] sm:$0xff]
    %v2123 = vld [vmem:[%s210 + $0x230] sm:$0xff]
    %v2124 = vld [vmem:[%s210 + $0x238] sm:$0xff]
    %v2125 = vld [vmem:[%s210 + $0x240] sm:$0xff]
    %v2126 = vld [vmem:[%s210 + $0x248] sm:$0xff]
    %v2127 = vld [vmem:[%s210 + $0x250] sm:$0xff]
    %v2128 = vsub.f32 %v1978, %v2053
    %v2129 = vsub.f32 %v1979, %v2054
    %v2130 = vsub.f32 %v1980, %v2055
    %v2131 = vsub.f32 %v1981, %v2056
    %v2132 = vsub.f32 %v1982, %v2057
    %v2133 = vsub.f32 %v1983, %v2058
    %v2134 = vsub.f32 %v1984, %v2059
    %v2135 = vsub.f32 %v1985, %v2060
    %v2136 = vsub.f32 %v1986, %v2061
    %v2137 = vsub.f32 %v1987, %v2062
    %v2138 = vsub.f32 %v1988, %v2063
    %v2139 = vsub.f32 %v1989, %v2064
    %v2140 = vsub.f32 %v1990, %v2065
    %v2141 = vsub.f32 %v1991, %v2066
    %v2142 = vsub.f32 %v1992, %v2067
    %v2143 = vsub.f32 %v1993, %v2068
    %v2144 = vsub.f32 %v1994, %v2069
    %v2145 = vsub.f32 %v1995, %v2070
    %v2146 = vsub.f32 %v1996, %v2071
    %v2147 = vsub.f32 %v1997, %v2072
    %v2148 = vsub.f32 %v1998, %v2073
    %v2149 = vsub.f32 %v1999, %v2074
    %v2150 = vsub.f32 %v2000, %v2075
    %v2151 = vsub.f32 %v2001, %v2076
    %v2152 = vsub.f32 %v2002, %v2077
    %v2153 = vsub.f32 %v2003, %v2078
    %v2154 = vsub.f32 %v2004, %v2079
    %v2155 = vsub.f32 %v2005, %v2080
    %v2156 = vsub.f32 %v2006, %v2081
    %v2157 = vsub.f32 %v2007, %v2082
    %v2158 = vsub.f32 %v2008, %v2083
    %v2159 = vsub.f32 %v2009, %v2084
    %v2160 = vsub.f32 %v2010, %v2085
    %v2161 = vsub.f32 %v2011, %v2086
    %v2162 = vsub.f32 %v2012, %v2087
    %v2163 = vsub.f32 %v2013, %v2088
    %v2164 = vsub.f32 %v2014, %v2089
    %v2165 = vsub.f32 %v2015, %v2090
    %v2166 = vsub.f32 %v2016, %v2091
    %v2167 = vsub.f32 %v2017, %v2092
    %v2168 = vsub.f32 %v2018, %v2093
    %v2169 = vsub.f32 %v2019, %v2094
    %v2170 = vsub.f32 %v2020, %v2095
    %v2171 = vsub.f32 %v2021, %v2096
    %v2172 = vsub.f32 %v2022, %v2097
    %v2173 = vsub.f32 %v2023, %v2098
    %v2174 = vsub.f32 %v2024, %v2099
    %v2175 = vsub.f32 %v2025, %v2100
    %v2176 = vsub.f32 %v2026, %v2101
    %v2177 = vsub.f32 %v2027, %v2102
    %v2178 = vsub.f32 %v2028, %v2103
    %v2179 = vsub.f32 %v2029, %v2104
    %v2180 = vsub.f32 %v2030, %v2105
    %v2181 = vsub.f32 %v2031, %v2106
    %v2182 = vsub.f32 %v2032, %v2107
    %v2183 = vsub.f32 %v2033, %v2108
    %v2184 = vsub.f32 %v2034, %v2109
    %v2185 = vsub.f32 %v2035, %v2110
    %v2186 = vsub.f32 %v2036, %v2111
    %v2187 = vsub.f32 %v2037, %v2112
    %v2188 = vsub.f32 %v2038, %v2113
    %v2189 = vsub.f32 %v2039, %v2114
    %v2190 = vsub.f32 %v2040, %v2115
    %v2191 = vsub.f32 %v2041, %v2116
    %v2192 = vsub.f32 %v2042, %v2117
    %v2193 = vsub.f32 %v2043, %v2118
    %v2194 = vsub.f32 %v2044, %v2119
    %v2195 = vsub.f32 %v2045, %v2120
    %v2196 = vsub.f32 %v2046, %v2121
    %v2197 = vsub.f32 %v2047, %v2122
    %v2198 = vsub.f32 %v2048, %v2123
    %v2199 = vsub.f32 %v2049, %v2124
    %v2200 = vsub.f32 %v2050, %v2125
    %v2201 = vsub.f32 %v2051, %v2126
    %v2202 = vsub.f32 %v2052, %v2127
    %v2203 = vand.u32 2147483647, %v2128
    %v2204 = vand.u32 2147483647, %v2129
    %v2205 = vand.u32 2147483647, %v2130
    %v2206 = vand.u32 2147483647, %v2131
    %v2207 = vand.u32 2147483647, %v2132
    %v2208 = vand.u32 2147483647, %v2133
    %v2209 = vand.u32 2147483647, %v2134
    %v2210 = vand.u32 2147483647, %v2135
    %v2211 = vand.u32 2147483647, %v2136
    %v2212 = vand.u32 2147483647, %v2137
    %v2213 = vand.u32 2147483647, %v2138
    %v2214 = vand.u32 2147483647, %v2139
    %v2215 = vand.u32 2147483647, %v2140
    %v2216 = vand.u32 2147483647, %v2141
    %v2217 = vand.u32 2147483647, %v2142
    %v2218 = vand.u32 2147483647, %v2143
    %v2219 = vand.u32 2147483647, %v2144
    %v2220 = vand.u32 2147483647, %v2145
    %v2221 = vand.u32 2147483647, %v2146
    %v2222 = vand.u32 2147483647, %v2147
    %v2223 = vand.u32 2147483647, %v2148
    %v2224 = vand.u32 2147483647, %v2149
    %v2225 = vand.u32 2147483647, %v2150
    %v2226 = vand.u32 2147483647, %v2151
    %v2227 = vand.u32 2147483647, %v2152
    %v2228 = vand.u32 2147483647, %v2153
    %v2229 = vand.u32 2147483647, %v2154
    %v2230 = vand.u32 2147483647, %v2155
    %v2231 = vand.u32 2147483647, %v2156
    %v2232 = vand.u32 2147483647, %v2157
    %v2233 = vand.u32 2147483647, %v2158
    %v2234 = vand.u32 2147483647, %v2159
    %v2235 = vand.u32 2147483647, %v2160
    %v2236 = vand.u32 2147483647, %v2161
    %v2237 = vand.u32 2147483647, %v2162
    %v2238 = vand.u32 2147483647, %v2163
    %v2239 = vand.u32 2147483647, %v2164
    %v2240 = vand.u32 2147483647, %v2165
    %v2241 = vand.u32 2147483647, %v2166
    %v2242 = vand.u32 2147483647, %v2167
    %v2243 = vand.u32 2147483647, %v2168
    %v2244 = vand.u32 2147483647, %v2169
    %v2245 = vand.u32 2147483647, %v2170
    %v2246 = vand.u32 2147483647, %v2171
    %v2247 = vand.u32 2147483647, %v2172
    %v2248 = vand.u32 2147483647, %v2173
    %v2249 = vand.u32 2147483647, %v2174
    %v2250 = vand.u32 2147483647, %v2175
    %v2251 = vand.u32 2147483647, %v2176
    %v2252 = vand.u32 2147483647, %v2177
    %v2253 = vand.u32 2147483647, %v2178
    %v2254 = vand.u32 2147483647, %v2179
    %v2255 = vand.u32 2147483647, %v2180
    %v2256 = vand.u32 2147483647, %v2181
    %v2257 = vand.u32 2147483647, %v2182
    %v2258 = vand.u32 2147483647, %v2183
    %v2259 = vand.u32 2147483647, %v2184
    %v2260 = vand.u32 2147483647, %v2185
    %v2261 = vand.u32 2147483647, %v2186
    %v2262 = vand.u32 2147483647, %v2187
    %v2263 = vand.u32 2147483647, %v2188
    %v2264 = vand.u32 2147483647, %v2189
    %v2265 = vand.u32 2147483647, %v2190
    %v2266 = vand.u32 2147483647, %v2191
    %v2267 = vand.u32 2147483647, %v2192
    %v2268 = vand.u32 2147483647, %v2193
    %v2269 = vand.u32 2147483647, %v2194
    %v2270 = vand.u32 2147483647, %v2195
    %v2271 = vand.u32 2147483647, %v2196
    %v2272 = vand.u32 2147483647, %v2197
    %v2273 = vand.u32 2147483647, %v2198
    %v2274 = vand.u32 2147483647, %v2199
    %v2275 = vand.u32 2147483647, %v2200
    %v2276 = vand.u32 2147483647, %v2201
    %v2277 = vand.u32 2147483647, %v2202
    %v2278 = vld [vmem:[#allocation4] sm:$0x1]
    %vm2279 = vcmask 523264
    %v2280 = vsel %vm2279, %v2203, 0.0
    %v2281 = vsel %vm2279, %v2204, 0.0
    %v2282 = vadd.f32 %v2280, %v2281
    %v2283 = vsel %vm2279, %v2205, 0.0
    %v2284 = vadd.f32 %v2282, %v2283
    %v2285 = vsel %vm2279, %v2206, 0.0
    %v2286 = vadd.f32 %v2284, %v2285
    %v2287 = vsel %vm2279, %v2207, 0.0
    %v2288 = vadd.f32 %v2286, %v2287
    %v2289 = vsel %vm2279, %v2208, 0.0
    %v2290 = vadd.f32 %v2288, %v2289
    %v2291 = vsel %vm2279, %v2209, 0.0
    %v2292 = vadd.f32 %v2290, %v2291
    %v2293 = vsel %vm2279, %v2210, 0.0
    %v2294 = vadd.f32 %v2292, %v2293
    %v2295 = vsel %vm2279, %v2211, 0.0
    %v2296 = vadd.f32 %v2294, %v2295
    %v2297 = vsel %vm2279, %v2212, 0.0
    %v2298 = vadd.f32 %v2296, %v2297
    %v2299 = vsel %vm2279, %v2213, 0.0
    %v2300 = vadd.f32 %v2298, %v2299
    %v2301 = vsel %vm2279, %v2214, 0.0
    %v2302 = vadd.f32 %v2300, %v2301
    %v2303 = vsel %vm2279, %v2215, 0.0
    %v2304 = vadd.f32 %v2302, %v2303
    %v2305 = vsel %vm2279, %v2216, 0.0
    %v2306 = vadd.f32 %v2304, %v2305
    %v2307 = vsel %vm2279, %v2217, 0.0
    %v2308 = vadd.f32 %v2306, %v2307
    %v2309 = vsel %vm2279, %v2218, 0.0
    %v2310 = vadd.f32 %v2308, %v2309
    %v2311 = vsel %vm2279, %v2219, 0.0
    %v2312 = vadd.f32 %v2310, %v2311
    %v2313 = vsel %vm2279, %v2220, 0.0
    %v2314 = vadd.f32 %v2312, %v2313
    %v2315 = vsel %vm2279, %v2221, 0.0
    %v2316 = vadd.f32 %v2314, %v2315
    %v2317 = vsel %vm2279, %v2222, 0.0
    %v2318 = vadd.f32 %v2316, %v2317
    %v2319 = vsel %vm2279, %v2223, 0.0
    %v2320 = vadd.f32 %v2318, %v2319
    %v2321 = vsel %vm2279, %v2224, 0.0
    %v2322 = vadd.f32 %v2320, %v2321
    %v2323 = vsel %vm2279, %v2225, 0.0
    %v2324 = vadd.f32 %v2322, %v2323
    %v2325 = vsel %vm2279, %v2226, 0.0
    %v2326 = vadd.f32 %v2324, %v2325
    %v2327 = vsel %vm2279, %v2227, 0.0
    %v2328 = vadd.f32 %v2326, %v2327
    %v2329 = vsel %vm2279, %v2228, 0.0
    %v2330 = vadd.f32 %v2328, %v2329
    %v2331 = vsel %vm2279, %v2229, 0.0
    %v2332 = vadd.f32 %v2330, %v2331
    %v2333 = vsel %vm2279, %v2230, 0.0
    %v2334 = vadd.f32 %v2332, %v2333
    %v2335 = vsel %vm2279, %v2231, 0.0
    %v2336 = vadd.f32 %v2334, %v2335
    %v2337 = vsel %vm2279, %v2232, 0.0
    %v2338 = vadd.f32 %v2336, %v2337
    %v2339 = vsel %vm2279, %v2233, 0.0
    %v2340 = vadd.f32 %v2338, %v2339
    %v2341 = vsel %vm2279, %v2234, 0.0
    %v2342 = vadd.f32 %v2340, %v2341
    %v2343 = vsel %vm2279, %v2235, 0.0
    %v2344 = vadd.f32 %v2342, %v2343
    %v2345 = vsel %vm2279, %v2236, 0.0
    %v2346 = vadd.f32 %v2344, %v2345
    %v2347 = vsel %vm2279, %v2237, 0.0
    %v2348 = vadd.f32 %v2346, %v2347
    %v2349 = vsel %vm2279, %v2238, 0.0
    %v2350 = vadd.f32 %v2348, %v2349
    %v2351 = vsel %vm2279, %v2239, 0.0
    %v2352 = vadd.f32 %v2350, %v2351
    %v2353 = vsel %vm2279, %v2240, 0.0
    %v2354 = vadd.f32 %v2352, %v2353
    %v2355 = vsel %vm2279, %v2241, 0.0
    %v2356 = vadd.f32 %v2354, %v2355
    %v2357 = vsel %vm2279, %v2242, 0.0
    %v2358 = vadd.f32 %v2356, %v2357
    %v2359 = vsel %vm2279, %v2243, 0.0
    %v2360 = vadd.f32 %v2358, %v2359
    %v2361 = vsel %vm2279, %v2244, 0.0
    %v2362 = vadd.f32 %v2360, %v2361
    %v2363 = vsel %vm2279, %v2245, 0.0
    %v2364 = vadd.f32 %v2362, %v2363
    %v2365 = vsel %vm2279, %v2246, 0.0
    %v2366 = vadd.f32 %v2364, %v2365
    %v2367 = vsel %vm2279, %v2247, 0.0
    %v2368 = vadd.f32 %v2366, %v2367
    %v2369 = vsel %vm2279, %v2248, 0.0
    %v2370 = vadd.f32 %v2368, %v2369
    %v2371 = vsel %vm2279, %v2249, 0.0
    %v2372 = vadd.f32 %v2370, %v2371
    %v2373 = vsel %vm2279, %v2250, 0.0
    %v2374 = vadd.f32 %v2372, %v2373
    %v2375 = vsel %vm2279, %v2251, 0.0
    %v2376 = vadd.f32 %v2374, %v2375
    %v2377 = vsel %vm2279, %v2252, 0.0
    %v2378 = vadd.f32 %v2376, %v2377
    %v2379 = vsel %vm2279, %v2253, 0.0
    %v2380 = vadd.f32 %v2378, %v2379
    %v2381 = vsel %vm2279, %v2254, 0.0
    %v2382 = vadd.f32 %v2380, %v2381
    %v2383 = vsel %vm2279, %v2255, 0.0
    %v2384 = vadd.f32 %v2382, %v2383
    %v2385 = vsel %vm2279, %v2256, 0.0
    %v2386 = vadd.f32 %v2384, %v2385
    %v2387 = vsel %vm2279, %v2257, 0.0
    %v2388 = vadd.f32 %v2386, %v2387
    %v2389 = vsel %vm2279, %v2258, 0.0
    %v2390 = vadd.f32 %v2388, %v2389
    %v2391 = vsel %vm2279, %v2259, 0.0
    %v2392 = vadd.f32 %v2390, %v2391
    %v2393 = vsel %vm2279, %v2260, 0.0
    %v2394 = vadd.f32 %v2392, %v2393
    %v2395 = vsel %vm2279, %v2261, 0.0
    %v2396 = vadd.f32 %v2394, %v2395
    %v2397 = vsel %vm2279, %v2262, 0.0
    %v2398 = vadd.f32 %v2396, %v2397
    %v2399 = vsel %vm2279, %v2263, 0.0
    %v2400 = vadd.f32 %v2398, %v2399
    %v2401 = vsel %vm2279, %v2264, 0.0
    %v2402 = vadd.f32 %v2400, %v2401
    %v2403 = vsel %vm2279, %v2265, 0.0
    %v2404 = vadd.f32 %v2402, %v2403
    %v2405 = vsel %vm2279, %v2266, 0.0
    %v2406 = vadd.f32 %v2404, %v2405
    %v2407 = vsel %vm2279, %v2267, 0.0
    %v2408 = vadd.f32 %v2406, %v2407
    %v2409 = vsel %vm2279, %v2268, 0.0
    %v2410 = vadd.f32 %v2408, %v2409
    %v2411 = vsel %vm2279, %v2269, 0.0
    %v2412 = vadd.f32 %v2410, %v2411
    %v2413 = vsel %vm2279, %v2270, 0.0
    %v2414 = vadd.f32 %v2412, %v2413
    %v2415 = vsel %vm2279, %v2271, 0.0
    %v2416 = vadd.f32 %v2414, %v2415
    %v2417 = vsel %vm2279, %v2272, 0.0
    %v2418 = vadd.f32 %v2416, %v2417
    %v2419 = vsel %vm2279, %v2273, 0.0
    %v2420 = vadd.f32 %v2418, %v2419
    %v2421 = vsel %vm2279, %v2274, 0.0
    %v2422 = vadd.f32 %v2420, %v2421
    %v2423 = vsel %vm2279, %v2275, 0.0
    %v2424 = vadd.f32 %v2422, %v2423
    %v2425 = vsel %vm2279, %v2276, 0.0
    %v2426 = vadd.f32 %v2424, %v2425
    %v2427 = vsel %vm2279, %v2277, 0.0
    %v2428 = vadd.f32 %v2426, %v2427
    %v2429 = vrot.slane %v2428, 4
    %v2430 = vadd.f32 %v2428, %v2429
    %v2431 = vrot.slane %v2430, 2
    %v2432 = vadd.f32 %v2430, %v2431
    %v2433 = vrot.slane %v2432, 1
    %v2434 = vadd.f32 %v2432, %v2433
    %v2435 = vadd.f32 %v2278, %v2434
    %vm2436 = vcmask 516096
    %2437 = vst.msk [vmem:[#allocation4] sm:$0x1] %vm2436, %v2435
  $region33: #{_fused_losses_impl.1} parent=0 // pred_fallthru
    _
  %p2438 = scmp.gt.s32.totalorder %s227, 600
  // Predicated region
  $region34: #{_fused_losses_impl.1} parent=0 // pred_check
    %p2439 = pneg %p2438
  $region35: #{_fused_losses_impl.1} parent=0 // pred_check_branch
    %2441 = sbr.rel (%p2439) target = $region37
  $region36: #{_fused_losses_impl.1} parent=0 // pred_region
    %v2442 = vlaneseq
    %v2443 = vshrl.u32 %v2442, 7
    %v2444 = vadd.s32 %v2443, 8
    %v2445 = vadd.s32 %v2443, 16
    %v2446 = vadd.s32 %v2443, 24
    %v2447 = vadd.s32 %v2443, 32
    %v2448 = vadd.s32 %v2443, 40
    %v2449 = vadd.s32 %v2443, 48
    %v2450 = vadd.s32 %v2443, 56
    %v2451 = vadd.s32 %v2443, 64
    %v2452 = vadd.s32 %v2443, 72
    %v2453 = vadd.s32 %v2443, 80
    %v2454 = vadd.s32 %v2443, 88
    %v2455 = vadd.s32 %v2443, 96
    %v2456 = vadd.s32 %v2443, 104
    %v2457 = vadd.s32 %v2443, 112
    %v2458 = vadd.s32 %v2443, 120
    %v2459 = vadd.s32 %v2443, 128
    %v2460 = vadd.s32 %v2443, 136
    %v2461 = vadd.s32 %v2443, 144
    %v2462 = vadd.s32 %v2443, 152
    %v2463 = vadd.s32 %v2443, 160
    %v2464 = vadd.s32 %v2443, 168
    %v2465 = vadd.s32 %v2443, 176
    %v2466 = vadd.s32 %v2443, 184
    %v2467 = vadd.s32 %v2443, 192
    %v2468 = vadd.s32 %v2443, 200
    %v2469 = vadd.s32 %v2443, 208
    %v2470 = vadd.s32 %v2443, 216
    %v2471 = vadd.s32 %v2443, 224
    %v2472 = vadd.s32 %v2443, 232
    %v2473 = vadd.s32 %v2443, 240
    %v2474 = vadd.s32 %v2443, 248
    %v2475 = vadd.s32 %v2443, 256
    %v2476 = vadd.s32 %v2443, 264
    %v2477 = vadd.s32 %v2443, 272
    %v2478 = vadd.s32 %v2443, 280
    %v2479 = vadd.s32 %v2443, 288
    %v2480 = vadd.s32 %v2443, 296
    %v2481 = vadd.s32 %v2443, 304
    %v2482 = vadd.s32 %v2443, 312
    %v2483 = vadd.s32 %v2443, 320
    %v2484 = vadd.s32 %v2443, 328
    %v2485 = vadd.s32 %v2443, 336
    %v2486 = vadd.s32 %v2443, 344
    %v2487 = vadd.s32 %v2443, 352
    %v2488 = vadd.s32 %v2443, 360
    %v2489 = vadd.s32 %v2443, 368
    %v2490 = vadd.s32 %v2443, 376
    %v2491 = vadd.s32 %v2443, 384
    %v2492 = vadd.s32 %v2443, 392
    %v2493 = vadd.s32 %v2443, 400
    %v2494 = vadd.s32 %v2443, 408
    %v2495 = vadd.s32 %v2443, 416
    %v2496 = vadd.s32 %v2443, 424
    %v2497 = vadd.s32 %v2443, 432
    %v2498 = vadd.s32 %v2443, 440
    %v2499 = vadd.s32 %v2443, 448
    %v2500 = vadd.s32 %v2443, 456
    %v2501 = vadd.s32 %v2443, 464
    %v2502 = vadd.s32 %v2443, 472
    %v2503 = vadd.s32 %v2443, 480
    %v2504 = vadd.s32 %v2443, 488
    %v2505 = vadd.s32 %v2443, 496
    %v2506 = vadd.s32 %v2443, 504
    %v2507 = vadd.s32 %v2443, 512
    %v2508 = vadd.s32 %v2443, 520
    %v2509 = vadd.s32 %v2443, 528
    %v2510 = vadd.s32 %v2443, 536
    %v2511 = vadd.s32 %v2443, 544
    %v2512 = vadd.s32 %v2443, 552
    %v2513 = vadd.s32 %v2443, 560
    %v2514 = vadd.s32 %v2443, 568
    %v2515 = vadd.s32 %v2443, 576
    %v2516 = vadd.s32 %v2443, 584
    %v2517 = vadd.s32 %v2443, 592
    %v2518 = vstv %s216
    %v2519 = vadd.s32 %v2518, %v2443
    %v2520 = vadd.s32 %v2518, %v2444
    %v2521 = vadd.s32 %v2518, %v2445
    %v2522 = vadd.s32 %v2518, %v2446
    %v2523 = vadd.s32 %v2518, %v2447
    %v2524 = vadd.s32 %v2518, %v2448
    %v2525 = vadd.s32 %v2518, %v2449
    %v2526 = vadd.s32 %v2518, %v2450
    %v2527 = vadd.s32 %v2518, %v2451
    %v2528 = vadd.s32 %v2518, %v2452
    %v2529 = vadd.s32 %v2518, %v2453
    %v2530 = vadd.s32 %v2518, %v2454
    %v2531 = vadd.s32 %v2518, %v2455
    %v2532 = vadd.s32 %v2518, %v2456
    %v2533 = vadd.s32 %v2518, %v2457
    %v2534 = vadd.s32 %v2518, %v2458
    %v2535 = vadd.s32 %v2518, %v2459
    %v2536 = vadd.s32 %v2518, %v2460
    %v2537 = vadd.s32 %v2518, %v2461
    %v2538 = vadd.s32 %v2518, %v2462
    %v2539 = vadd.s32 %v2518, %v2463
    %v2540 = vadd.s32 %v2518, %v2464
    %v2541 = vadd.s32 %v2518, %v2465
    %v2542 = vadd.s32 %v2518, %v2466
    %v2543 = vadd.s32 %v2518, %v2467
    %v2544 = vadd.s32 %v2518, %v2468
    %v2545 = vadd.s32 %v2518, %v2469
    %v2546 = vadd.s32 %v2518, %v2470
    %v2547 = vadd.s32 %v2518, %v2471
    %v2548 = vadd.s32 %v2518, %v2472
    %v2549 = vadd.s32 %v2518, %v2473
    %v2550 = vadd.s32 %v2518, %v2474
    %v2551 = vadd.s32 %v2518, %v2475
    %v2552 = vadd.s32 %v2518, %v2476
    %v2553 = vadd.s32 %v2518, %v2477
    %v2554 = vadd.s32 %v2518, %v2478
    %v2555 = vadd.s32 %v2518, %v2479
    %v2556 = vadd.s32 %v2518, %v2480
    %v2557 = vadd.s32 %v2518, %v2481
    %v2558 = vadd.s32 %v2518, %v2482
    %v2559 = vadd.s32 %v2518, %v2483
    %v2560 = vadd.s32 %v2518, %v2484
    %v2561 = vadd.s32 %v2518, %v2485
    %v2562 = vadd.s32 %v2518, %v2486
    %v2563 = vadd.s32 %v2518, %v2487
    %v2564 = vadd.s32 %v2518, %v2488
    %v2565 = vadd.s32 %v2518, %v2489
    %v2566 = vadd.s32 %v2518, %v2490
    %v2567 = vadd.s32 %v2518, %v2491
    %v2568 = vadd.s32 %v2518, %v2492
    %v2569 = vadd.s32 %v2518, %v2493
    %v2570 = vadd.s32 %v2518, %v2494
    %v2571 = vadd.s32 %v2518, %v2495
    %v2572 = vadd.s32 %v2518, %v2496
    %v2573 = vadd.s32 %v2518, %v2497
    %v2574 = vadd.s32 %v2518, %v2498
    %v2575 = vadd.s32 %v2518, %v2499
    %v2576 = vadd.s32 %v2518, %v2500
    %v2577 = vadd.s32 %v2518, %v2501
    %v2578 = vadd.s32 %v2518, %v2502
    %v2579 = vadd.s32 %v2518, %v2503
    %v2580 = vadd.s32 %v2518, %v2504
    %v2581 = vadd.s32 %v2518, %v2505
    %v2582 = vadd.s32 %v2518, %v2506
    %v2583 = vadd.s32 %v2518, %v2507
    %v2584 = vadd.s32 %v2518, %v2508
    %v2585 = vadd.s32 %v2518, %v2509
    %v2586 = vadd.s32 %v2518, %v2510
    %v2587 = vadd.s32 %v2518, %v2511
    %v2588 = vadd.s32 %v2518, %v2512
    %v2589 = vadd.s32 %v2518, %v2513
    %v2590 = vadd.s32 %v2518, %v2514
    %v2591 = vadd.s32 %v2518, %v2515
    %v2592 = vadd.s32 %v2518, %v2516
    %v2593 = vadd.s32 %v2518, %v2517
    %vm2594 = vcmp.lt.s32.totalorder %v2519, 600
    %vm2595 = vcmp.lt.s32.totalorder %v2520, 600
    %vm2596 = vcmp.lt.s32.totalorder %v2521, 600
    %vm2597 = vcmp.lt.s32.totalorder %v2522, 600
    %vm2598 = vcmp.lt.s32.totalorder %v2523, 600
    %vm2599 = vcmp.lt.s32.totalorder %v2524, 600
    %vm2600 = vcmp.lt.s32.totalorder %v2525, 600
    %vm2601 = vcmp.lt.s32.totalorder %v2526, 600
    %vm2602 = vcmp.lt.s32.totalorder %v2527, 600
    %vm2603 = vcmp.lt.s32.totalorder %v2528, 600
    %vm2604 = vcmp.lt.s32.totalorder %v2529, 600
    %vm2605 = vcmp.lt.s32.totalorder %v2530, 600
    %vm2606 = vcmp.lt.s32.totalorder %v2531, 600
    %vm2607 = vcmp.lt.s32.totalorder %v2532, 600
    %vm2608 = vcmp.lt.s32.totalorder %v2533, 600
    %vm2609 = vcmp.lt.s32.totalorder %v2534, 600
    %vm2610 = vcmp.lt.s32.totalorder %v2535, 600
    %vm2611 = vcmp.lt.s32.totalorder %v2536, 600
    %vm2612 = vcmp.lt.s32.totalorder %v2537, 600
    %vm2613 = vcmp.lt.s32.totalorder %v2538, 600
    %vm2614 = vcmp.lt.s32.totalorder %v2539, 600
    %vm2615 = vcmp.lt.s32.totalorder %v2540, 600
    %vm2616 = vcmp.lt.s32.totalorder %v2541, 600
    %vm2617 = vcmp.lt.s32.totalorder %v2542, 600
    %vm2618 = vcmp.lt.s32.totalorder %v2543, 600
    %vm2619 = vcmp.lt.s32.totalorder %v2544, 600
    %vm2620 = vcmp.lt.s32.totalorder %v2545, 600
    %vm2621 = vcmp.lt.s32.totalorder %v2546, 600
    %vm2622 = vcmp.lt.s32.totalorder %v2547, 600
    %vm2623 = vcmp.lt.s32.totalorder %v2548, 600
    %vm2624 = vcmp.lt.s32.totalorder %v2549, 600
    %vm2625 = vcmp.lt.s32.totalorder %v2550, 600
    %vm2626 = vcmp.lt.s32.totalorder %v2551, 600
    %vm2627 = vcmp.lt.s32.totalorder %v2552, 600
    %vm2628 = vcmp.lt.s32.totalorder %v2553, 600
    %vm2629 = vcmp.lt.s32.totalorder %v2554, 600
    %vm2630 = vcmp.lt.s32.totalorder %v2555, 600
    %vm2631 = vcmp.lt.s32.totalorder %v2556, 600
    %vm2632 = vcmp.lt.s32.totalorder %v2557, 600
    %vm2633 = vcmp.lt.s32.totalorder %v2558, 600
    %vm2634 = vcmp.lt.s32.totalorder %v2559, 600
    %vm2635 = vcmp.lt.s32.totalorder %v2560, 600
    %vm2636 = vcmp.lt.s32.totalorder %v2561, 600
    %vm2637 = vcmp.lt.s32.totalorder %v2562, 600
    %vm2638 = vcmp.lt.s32.totalorder %v2563, 600
    %vm2639 = vcmp.lt.s32.totalorder %v2564, 600
    %vm2640 = vcmp.lt.s32.totalorder %v2565, 600
    %vm2641 = vcmp.lt.s32.totalorder %v2566, 600
    %vm2642 = vcmp.lt.s32.totalorder %v2567, 600
    %vm2643 = vcmp.lt.s32.totalorder %v2568, 600
    %vm2644 = vcmp.lt.s32.totalorder %v2569, 600
    %vm2645 = vcmp.lt.s32.totalorder %v2570, 600
    %vm2646 = vcmp.lt.s32.totalorder %v2571, 600
    %vm2647 = vcmp.lt.s32.totalorder %v2572, 600
    %vm2648 = vcmp.lt.s32.totalorder %v2573, 600
    %vm2649 = vcmp.lt.s32.totalorder %v2574, 600
    %vm2650 = vcmp.lt.s32.totalorder %v2575, 600
    %vm2651 = vcmp.lt.s32.totalorder %v2576, 600
    %vm2652 = vcmp.lt.s32.totalorder %v2577, 600
    %vm2653 = vcmp.lt.s32.totalorder %v2578, 600
    %vm2654 = vcmp.lt.s32.totalorder %v2579, 600
    %vm2655 = vcmp.lt.s32.totalorder %v2580, 600
    %vm2656 = vcmp.lt.s32.totalorder %v2581, 600
    %vm2657 = vcmp.lt.s32.totalorder %v2582, 600
    %vm2658 = vcmp.lt.s32.totalorder %v2583, 600
    %vm2659 = vcmp.lt.s32.totalorder %v2584, 600
    %vm2660 = vcmp.lt.s32.totalorder %v2585, 600
    %vm2661 = vcmp.lt.s32.totalorder %v2586, 600
    %vm2662 = vcmp.lt.s32.totalorder %v2587, 600
    %vm2663 = vcmp.lt.s32.totalorder %v2588, 600
    %vm2664 = vcmp.lt.s32.totalorder %v2589, 600
    %vm2665 = vcmp.lt.s32.totalorder %v2590, 600
    %vm2666 = vcmp.lt.s32.totalorder %v2591, 600
    %vm2667 = vcmp.lt.s32.totalorder %v2592, 600
    %vm2668 = vcmp.lt.s32.totalorder %v2593, 600
    %v2669 = vld [vmem:[%s150] sm:$0xff]
    %v2670 = vld [vmem:[%s150 + $0x8] sm:$0xff]
    %v2671 = vld [vmem:[%s150 + $0x10] sm:$0xff]
    %v2672 = vld [vmem:[%s150 + $0x18] sm:$0xff]
    %v2673 = vld [vmem:[%s150 + $0x20] sm:$0xff]
    %v2674 = vld [vmem:[%s150 + $0x28] sm:$0xff]
    %v2675 = vld [vmem:[%s150 + $0x30] sm:$0xff]
    %v2676 = vld [vmem:[%s150 + $0x38] sm:$0xff]
    %v2677 = vld [vmem:[%s150 + $0x40] sm:$0xff]
    %v2678 = vld [vmem:[%s150 + $0x48] sm:$0xff]
    %v2679 = vld [vmem:[%s150 + $0x50] sm:$0xff]
    %v2680 = vld [vmem:[%s150 + $0x58] sm:$0xff]
    %v2681 = vld [vmem:[%s150 + $0x60] sm:$0xff]
    %v2682 = vld [vmem:[%s150 + $0x68] sm:$0xff]
    %v2683 = vld [vmem:[%s150 + $0x70] sm:$0xff]
    %v2684 = vld [vmem:[%s150 + $0x78] sm:$0xff]
    %v2685 = vld [vmem:[%s150 + $0x80] sm:$0xff]
    %v2686 = vld [vmem:[%s150 + $0x88] sm:$0xff]
    %v2687 = vld [vmem:[%s150 + $0x90] sm:$0xff]
    %v2688 = vld [vmem:[%s150 + $0x98] sm:$0xff]
    %v2689 = vld [vmem:[%s150 + $0xa0] sm:$0xff]
    %v2690 = vld [vmem:[%s150 + $0xa8] sm:$0xff]
    %v2691 = vld [vmem:[%s150 + $0xb0] sm:$0xff]
    %v2692 = vld [vmem:[%s150 + $0xb8] sm:$0xff]
    %v2693 = vld [vmem:[%s150 + $0xc0] sm:$0xff]
    %v2694 = vld [vmem:[%s150 + $0xc8] sm:$0xff]
    %v2695 = vld [vmem:[%s150 + $0xd0] sm:$0xff]
    %v2696 = vld [vmem:[%s150 + $0xd8] sm:$0xff]
    %v2697 = vld [vmem:[%s150 + $0xe0] sm:$0xff]
    %v2698 = vld [vmem:[%s150 + $0xe8] sm:$0xff]
    %v2699 = vld [vmem:[%s150 + $0xf0] sm:$0xff]
    %v2700 = vld [vmem:[%s150 + $0xf8] sm:$0xff]
    %v2701 = vld [vmem:[%s150 + $0x100] sm:$0xff]
    %v2702 = vld [vmem:[%s150 + $0x108] sm:$0xff]
    %v2703 = vld [vmem:[%s150 + $0x110] sm:$0xff]
    %v2704 = vld [vmem:[%s150 + $0x118] sm:$0xff]
    %v2705 = vld [vmem:[%s150 + $0x120] sm:$0xff]
    %v2706 = vld [vmem:[%s150 + $0x128] sm:$0xff]
    %v2707 = vld [vmem:[%s150 + $0x130] sm:$0xff]
    %v2708 = vld [vmem:[%s150 + $0x138] sm:$0xff]
    %v2709 = vld [vmem:[%s150 + $0x140] sm:$0xff]
    %v2710 = vld [vmem:[%s150 + $0x148] sm:$0xff]
    %v2711 = vld [vmem:[%s150 + $0x150] sm:$0xff]
    %v2712 = vld [vmem:[%s150 + $0x158] sm:$0xff]
    %v2713 = vld [vmem:[%s150 + $0x160] sm:$0xff]
    %v2714 = vld [vmem:[%s150 + $0x168] sm:$0xff]
    %v2715 = vld [vmem:[%s150 + $0x170] sm:$0xff]
    %v2716 = vld [vmem:[%s150 + $0x178] sm:$0xff]
    %v2717 = vld [vmem:[%s150 + $0x180] sm:$0xff]
    %v2718 = vld [vmem:[%s150 + $0x188] sm:$0xff]
    %v2719 = vld [vmem:[%s150 + $0x190] sm:$0xff]
    %v2720 = vld [vmem:[%s150 + $0x198] sm:$0xff]
    %v2721 = vld [vmem:[%s150 + $0x1a0] sm:$0xff]
    %v2722 = vld [vmem:[%s150 + $0x1a8] sm:$0xff]
    %v2723 = vld [vmem:[%s150 + $0x1b0] sm:$0xff]
    %v2724 = vld [vmem:[%s150 + $0x1b8] sm:$0xff]
    %v2725 = vld [vmem:[%s150 + $0x1c0] sm:$0xff]
    %v2726 = vld [vmem:[%s150 + $0x1c8] sm:$0xff]
    %v2727 = vld [vmem:[%s150 + $0x1d0] sm:$0xff]
    %v2728 = vld [vmem:[%s150 + $0x1d8] sm:$0xff]
    %v2729 = vld [vmem:[%s150 + $0x1e0] sm:$0xff]
    %v2730 = vld [vmem:[%s150 + $0x1e8] sm:$0xff]
    %v2731 = vld [vmem:[%s150 + $0x1f0] sm:$0xff]
    %v2732 = vld [vmem:[%s150 + $0x1f8] sm:$0xff]
    %v2733 = vld [vmem:[%s150 + $0x200] sm:$0xff]
    %v2734 = vld [vmem:[%s150 + $0x208] sm:$0xff]
    %v2735 = vld [vmem:[%s150 + $0x210] sm:$0xff]
    %v2736 = vld [vmem:[%s150 + $0x218] sm:$0xff]
    %v2737 = vld [vmem:[%s150 + $0x220] sm:$0xff]
    %v2738 = vld [vmem:[%s150 + $0x228] sm:$0xff]
    %v2739 = vld [vmem:[%s150 + $0x230] sm:$0xff]
    %v2740 = vld [vmem:[%s150 + $0x238] sm:$0xff]
    %v2741 = vld [vmem:[%s150 + $0x240] sm:$0xff]
    %v2742 = vld [vmem:[%s150 + $0x248] sm:$0xff]
    %v2743 = vld [vmem:[%s150 + $0x250] sm:$0xff]
    %v2744 = vld [vmem:[%s162] sm:$0xff]
    %v2745 = vld [vmem:[%s162 + $0x8] sm:$0xff]
    %v2746 = vld [vmem:[%s162 + $0x10] sm:$0xff]
    %v2747 = vld [vmem:[%s162 + $0x18] sm:$0xff]
    %v2748 = vld [vmem:[%s162 + $0x20] sm:$0xff]
    %v2749 = vld [vmem:[%s162 + $0x28] sm:$0xff]
    %v2750 = vld [vmem:[%s162 + $0x30] sm:$0xff]
    %v2751 = vld [vmem:[%s162 + $0x38] sm:$0xff]
    %v2752 = vld [vmem:[%s162 + $0x40] sm:$0xff]
    %v2753 = vld [vmem:[%s162 + $0x48] sm:$0xff]
    %v2754 = vld [vmem:[%s162 + $0x50] sm:$0xff]
    %v2755 = vld [vmem:[%s162 + $0x58] sm:$0xff]
    %v2756 = vld [vmem:[%s162 + $0x60] sm:$0xff]
    %v2757 = vld [vmem:[%s162 + $0x68] sm:$0xff]
    %v2758 = vld [vmem:[%s162 + $0x70] sm:$0xff]
    %v2759 = vld [vmem:[%s162 + $0x78] sm:$0xff]
    %v2760 = vld [vmem:[%s162 + $0x80] sm:$0xff]
    %v2761 = vld [vmem:[%s162 + $0x88] sm:$0xff]
    %v2762 = vld [vmem:[%s162 + $0x90] sm:$0xff]
    %v2763 = vld [vmem:[%s162 + $0x98] sm:$0xff]
    %v2764 = vld [vmem:[%s162 + $0xa0] sm:$0xff]
    %v2765 = vld [vmem:[%s162 + $0xa8] sm:$0xff]
    %v2766 = vld [vmem:[%s162 + $0xb0] sm:$0xff]
    %v2767 = vld [vmem:[%s162 + $0xb8] sm:$0xff]
    %v2768 = vld [vmem:[%s162 + $0xc0] sm:$0xff]
    %v2769 = vld [vmem:[%s162 + $0xc8] sm:$0xff]
    %v2770 = vld [vmem:[%s162 + $0xd0] sm:$0xff]
    %v2771 = vld [vmem:[%s162 + $0xd8] sm:$0xff]
    %v2772 = vld [vmem:[%s162 + $0xe0] sm:$0xff]
    %v2773 = vld [vmem:[%s162 + $0xe8] sm:$0xff]
    %v2774 = vld [vmem:[%s162 + $0xf0] sm:$0xff]
    %v2775 = vld [vmem:[%s162 + $0xf8] sm:$0xff]
    %v2776 = vld [vmem:[%s162 + $0x100] sm:$0xff]
    %v2777 = vld [vmem:[%s162 + $0x108] sm:$0xff]
    %v2778 = vld [vmem:[%s162 + $0x110] sm:$0xff]
    %v2779 = vld [vmem:[%s162 + $0x118] sm:$0xff]
    %v2780 = vld [vmem:[%s162 + $0x120] sm:$0xff]
    %v2781 = vld [vmem:[%s162 + $0x128] sm:$0xff]
    %v2782 = vld [vmem:[%s162 + $0x130] sm:$0xff]
    %v2783 = vld [vmem:[%s162 + $0x138] sm:$0xff]
    %v2784 = vld [vmem:[%s162 + $0x140] sm:$0xff]
    %v2785 = vld [vmem:[%s162 + $0x148] sm:$0xff]
    %v2786 = vld [vmem:[%s162 + $0x150] sm:$0xff]
    %v2787 = vld [vmem:[%s162 + $0x158] sm:$0xff]
    %v2788 = vld [vmem:[%s162 + $0x160] sm:$0xff]
    %v2789 = vld [vmem:[%s162 + $0x168] sm:$0xff]
    %v2790 = vld [vmem:[%s162 + $0x170] sm:$0xff]
    %v2791 = vld [vmem:[%s162 + $0x178] sm:$0xff]
    %v2792 = vld [vmem:[%s162 + $0x180] sm:$0xff]
    %v2793 = vld [vmem:[%s162 + $0x188] sm:$0xff]
    %v2794 = vld [vmem:[%s162 + $0x190] sm:$0xff]
    %v2795 = vld [vmem:[%s162 + $0x198] sm:$0xff]
    %v2796 = vld [vmem:[%s162 + $0x1a0] sm:$0xff]
    %v2797 = vld [vmem:[%s162 + $0x1a8] sm:$0xff]
    %v2798 = vld [vmem:[%s162 + $0x1b0] sm:$0xff]
    %v2799 = vld [vmem:[%s162 + $0x1b8] sm:$0xff]
    %v2800 = vld [vmem:[%s162 + $0x1c0] sm:$0xff]
    %v2801 = vld [vmem:[%s162 + $0x1c8] sm:$0xff]
    %v2802 = vld [vmem:[%s162 + $0x1d0] sm:$0xff]
    %v2803 = vld [vmem:[%s162 + $0x1d8] sm:$0xff]
    %v2804 = vld [vmem:[%s162 + $0x1e0] sm:$0xff]
    %v2805 = vld [vmem:[%s162 + $0x1e8] sm:$0xff]
    %v2806 = vld [vmem:[%s162 + $0x1f0] sm:$0xff]
    %v2807 = vld [vmem:[%s162 + $0x1f8] sm:$0xff]
    %v2808 = vld [vmem:[%s162 + $0x200] sm:$0xff]
    %v2809 = vld [vmem:[%s162 + $0x208] sm:$0xff]
    %v2810 = vld [vmem:[%s162 + $0x210] sm:$0xff]
    %v2811 = vld [vmem:[%s162 + $0x218] sm:$0xff]
    %v2812 = vld [vmem:[%s162 + $0x220] sm:$0xff]
    %v2813 = vld [vmem:[%s162 + $0x228] sm:$0xff]
    %v2814 = vld [vmem:[%s162 + $0x230] sm:$0xff]
    %v2815 = vld [vmem:[%s162 + $0x238] sm:$0xff]
    %v2816 = vld [vmem:[%s162 + $0x240] sm:$0xff]
    %v2817 = vld [vmem:[%s162 + $0x248] sm:$0xff]
    %v2818 = vld [vmem:[%s162 + $0x250] sm:$0xff]
    %v2819 = vsub.f32 %v2669, %v2744
    %v2820 = vsub.f32 %v2670, %v2745
    %v2821 = vsub.f32 %v2671, %v2746
    %v2822 = vsub.f32 %v2672, %v2747
    %v2823 = vsub.f32 %v2673, %v2748
    %v2824 = vsub.f32 %v2674, %v2749
    %v2825 = vsub.f32 %v2675, %v2750
    %v2826 = vsub.f32 %v2676, %v2751
    %v2827 = vsub.f32 %v2677, %v2752
    %v2828 = vsub.f32 %v2678, %v2753
    %v2829 = vsub.f32 %v2679, %v2754
    %v2830 = vsub.f32 %v2680, %v2755
    %v2831 = vsub.f32 %v2681, %v2756
    %v2832 = vsub.f32 %v2682, %v2757
    %v2833 = vsub.f32 %v2683, %v2758
    %v2834 = vsub.f32 %v2684, %v2759
    %v2835 = vsub.f32 %v2685, %v2760
    %v2836 = vsub.f32 %v2686, %v2761
    %v2837 = vsub.f32 %v2687, %v2762
    %v2838 = vsub.f32 %v2688, %v2763
    %v2839 = vsub.f32 %v2689, %v2764
    %v2840 = vsub.f32 %v2690, %v2765
    %v2841 = vsub.f32 %v2691, %v2766
    %v2842 = vsub.f32 %v2692, %v2767
    %v2843 = vsub.f32 %v2693, %v2768
    %v2844 = vsub.f32 %v2694, %v2769
    %v2845 = vsub.f32 %v2695, %v2770
    %v2846 = vsub.f32 %v2696, %v2771
    %v2847 = vsub.f32 %v2697, %v2772
    %v2848 = vsub.f32 %v2698, %v2773
    %v2849 = vsub.f32 %v2699, %v2774
    %v2850 = vsub.f32 %v2700, %v2775
    %v2851 = vsub.f32 %v2701, %v2776
    %v2852 = vsub.f32 %v2702, %v2777
    %v2853 = vsub.f32 %v2703, %v2778
    %v2854 = vsub.f32 %v2704, %v2779
    %v2855 = vsub.f32 %v2705, %v2780
    %v2856 = vsub.f32 %v2706, %v2781
    %v2857 = vsub.f32 %v2707, %v2782
    %v2858 = vsub.f32 %v2708, %v2783
    %v2859 = vsub.f32 %v2709, %v2784
    %v2860 = vsub.f32 %v2710, %v2785
    %v2861 = vsub.f32 %v2711, %v2786
    %v2862 = vsub.f32 %v2712, %v2787
    %v2863 = vsub.f32 %v2713, %v2788
    %v2864 = vsub.f32 %v2714, %v2789
    %v2865 = vsub.f32 %v2715, %v2790
    %v2866 = vsub.f32 %v2716, %v2791
    %v2867 = vsub.f32 %v2717, %v2792
    %v2868 = vsub.f32 %v2718, %v2793
    %v2869 = vsub.f32 %v2719, %v2794
    %v2870 = vsub.f32 %v2720, %v2795
    %v2871 = vsub.f32 %v2721, %v2796
    %v2872 = vsub.f32 %v2722, %v2797
    %v2873 = vsub.f32 %v2723, %v2798
    %v2874 = vsub.f32 %v2724, %v2799
    %v2875 = vsub.f32 %v2725, %v2800
    %v2876 = vsub.f32 %v2726, %v2801
    %v2877 = vsub.f32 %v2727, %v2802
    %v2878 = vsub.f32 %v2728, %v2803
    %v2879 = vsub.f32 %v2729, %v2804
    %v2880 = vsub.f32 %v2730, %v2805
    %v2881 = vsub.f32 %v2731, %v2806
    %v2882 = vsub.f32 %v2732, %v2807
    %v2883 = vsub.f32 %v2733, %v2808
    %v2884 = vsub.f32 %v2734, %v2809
    %v2885 = vsub.f32 %v2735, %v2810
    %v2886 = vsub.f32 %v2736, %v2811
    %v2887 = vsub.f32 %v2737, %v2812
    %v2888 = vsub.f32 %v2738, %v2813
    %v2889 = vsub.f32 %v2739, %v2814
    %v2890 = vsub.f32 %v2740, %v2815
    %v2891 = vsub.f32 %v2741, %v2816
    %v2892 = vsub.f32 %v2742, %v2817
    %v2893 = vsub.f32 %v2743, %v2818
    %v2894 = vmul.f32 %v2819, %v2819
    %v2895 = vmul.f32 %v2820, %v2820
    %v2896 = vmul.f32 %v2821, %v2821
    %v2897 = vmul.f32 %v2822, %v2822
    %v2898 = vmul.f32 %v2823, %v2823
    %v2899 = vmul.f32 %v2824, %v2824
    %v2900 = vmul.f32 %v2825, %v2825
    %v2901 = vmul.f32 %v2826, %v2826
    %v2902 = vmul.f32 %v2827, %v2827
    %v2903 = vmul.f32 %v2828, %v2828
    %v2904 = vmul.f32 %v2829, %v2829
    %v2905 = vmul.f32 %v2830, %v2830
    %v2906 = vmul.f32 %v2831, %v2831
    %v2907 = vmul.f32 %v2832, %v2832
    %v2908 = vmul.f32 %v2833, %v2833
    %v2909 = vmul.f32 %v2834, %v2834
    %v2910 = vmul.f32 %v2835, %v2835
    %v2911 = vmul.f32 %v2836, %v2836
    %v2912 = vmul.f32 %v2837, %v2837
    %v2913 = vmul.f32 %v2838, %v2838
    %v2914 = vmul.f32 %v2839, %v2839
    %v2915 = vmul.f32 %v2840, %v2840
    %v2916 = vmul.f32 %v2841, %v2841
    %v2917 = vmul.f32 %v2842, %v2842
    %v2918 = vmul.f32 %v2843, %v2843
    %v2919 = vmul.f32 %v2844, %v2844
    %v2920 = vmul.f32 %v2845, %v2845
    %v2921 = vmul.f32 %v2846, %v2846
    %v2922 = vmul.f32 %v2847, %v2847
    %v2923 = vmul.f32 %v2848, %v2848
    %v2924 = vmul.f32 %v2849, %v2849
    %v2925 = vmul.f32 %v2850, %v2850
    %v2926 = vmul.f32 %v2851, %v2851
    %v2927 = vmul.f32 %v2852, %v2852
    %v2928 = vmul.f32 %v2853, %v2853
    %v2929 = vmul.f32 %v2854, %v2854
    %v2930 = vmul.f32 %v2855, %v2855
    %v2931 = vmul.f32 %v2856, %v2856
    %v2932 = vmul.f32 %v2857, %v2857
    %v2933 = vmul.f32 %v2858, %v2858
    %v2934 = vmul.f32 %v2859, %v2859
    %v2935 = vmul.f32 %v2860, %v2860
    %v2936 = vmul.f32 %v2861, %v2861
    %v2937 = vmul.f32 %v2862, %v2862
    %v2938 = vmul.f32 %v2863, %v2863
    %v2939 = vmul.f32 %v2864, %v2864
    %v2940 = vmul.f32 %v2865, %v2865
    %v2941 = vmul.f32 %v2866, %v2866
    %v2942 = vmul.f32 %v2867, %v2867
    %v2943 = vmul.f32 %v2868, %v2868
    %v2944 = vmul.f32 %v2869, %v2869
    %v2945 = vmul.f32 %v2870, %v2870
    %v2946 = vmul.f32 %v2871, %v2871
    %v2947 = vmul.f32 %v2872, %v2872
    %v2948 = vmul.f32 %v2873, %v2873
    %v2949 = vmul.f32 %v2874, %v2874
    %v2950 = vmul.f32 %v2875, %v2875
    %v2951 = vmul.f32 %v2876, %v2876
    %v2952 = vmul.f32 %v2877, %v2877
    %v2953 = vmul.f32 %v2878, %v2878
    %v2954 = vmul.f32 %v2879, %v2879
    %v2955 = vmul.f32 %v2880, %v2880
    %v2956 = vmul.f32 %v2881, %v2881
    %v2957 = vmul.f32 %v2882, %v2882
    %v2958 = vmul.f32 %v2883, %v2883
    %v2959 = vmul.f32 %v2884, %v2884
    %v2960 = vmul.f32 %v2885, %v2885
    %v2961 = vmul.f32 %v2886, %v2886
    %v2962 = vmul.f32 %v2887, %v2887
    %v2963 = vmul.f32 %v2888, %v2888
    %v2964 = vmul.f32 %v2889, %v2889
    %v2965 = vmul.f32 %v2890, %v2890
    %v2966 = vmul.f32 %v2891, %v2891
    %v2967 = vmul.f32 %v2892, %v2892
    %v2968 = vmul.f32 %v2893, %v2893
    %v2969 = vsel %vm2594, 1, 0
    %v2970 = vsel %vm2595, 1, 0
    %v2971 = vsel %vm2596, 1, 0
    %v2972 = vsel %vm2597, 1, 0
    %v2973 = vsel %vm2598, 1, 0
    %v2974 = vsel %vm2599, 1, 0
    %v2975 = vsel %vm2600, 1, 0
    %v2976 = vsel %vm2601, 1, 0
    %v2977 = vsel %vm2602, 1, 0
    %v2978 = vsel %vm2603, 1, 0
    %v2979 = vsel %vm2604, 1, 0
    %v2980 = vsel %vm2605, 1, 0
    %v2981 = vsel %vm2606, 1, 0
    %v2982 = vsel %vm2607, 1, 0
    %v2983 = vsel %vm2608, 1, 0
    %v2984 = vsel %vm2609, 1, 0
    %v2985 = vsel %vm2610, 1, 0
    %v2986 = vsel %vm2611, 1, 0
    %v2987 = vsel %vm2612, 1, 0
    %v2988 = vsel %vm2613, 1, 0
    %v2989 = vsel %vm2614, 1, 0
    %v2990 = vsel %vm2615, 1, 0
    %v2991 = vsel %vm2616, 1, 0
    %v2992 = vsel %vm2617, 1, 0
    %v2993 = vsel %vm2618, 1, 0
    %v2994 = vsel %vm2619, 1, 0
    %v2995 = vsel %vm2620, 1, 0
    %v2996 = vsel %vm2621, 1, 0
    %v2997 = vsel %vm2622, 1, 0
    %v2998 = vsel %vm2623, 1, 0
    %v2999 = vsel %vm2624, 1, 0
    %v3000 = vsel %vm2625, 1, 0
    %v3001 = vsel %vm2626, 1, 0
    %v3002 = vsel %vm2627, 1, 0
    %v3003 = vsel %vm2628, 1, 0
    %v3004 = vsel %vm2629, 1, 0
    %v3005 = vsel %vm2630, 1, 0
    %v3006 = vsel %vm2631, 1, 0
    %v3007 = vsel %vm2632, 1, 0
    %v3008 = vsel %vm2633, 1, 0
    %v3009 = vsel %vm2634, 1, 0
    %v3010 = vsel %vm2635, 1, 0
    %v3011 = vsel %vm2636, 1, 0
    %v3012 = vsel %vm2637, 1, 0
    %v3013 = vsel %vm2638, 1, 0
    %v3014 = vsel %vm2639, 1, 0
    %v3015 = vsel %vm2640, 1, 0
    %v3016 = vsel %vm2641, 1, 0
    %v3017 = vsel %vm2642, 1, 0
    %v3018 = vsel %vm2643, 1, 0
    %v3019 = vsel %vm2644, 1, 0
    %v3020 = vsel %vm2645, 1, 0
    %v3021 = vsel %vm2646, 1, 0
    %v3022 = vsel %vm2647, 1, 0
    %v3023 = vsel %vm2648, 1, 0
    %v3024 = vsel %vm2649, 1, 0
    %v3025 = vsel %vm2650, 1, 0
    %v3026 = vsel %vm2651, 1, 0
    %v3027 = vsel %vm2652, 1, 0
    %v3028 = vsel %vm2653, 1, 0
    %v3029 = vsel %vm2654, 1, 0
    %v3030 = vsel %vm2655, 1, 0
    %v3031 = vsel %vm2656, 1, 0
    %v3032 = vsel %vm2657, 1, 0
    %v3033 = vsel %vm2658, 1, 0
    %v3034 = vsel %vm2659, 1, 0
    %v3035 = vsel %vm2660, 1, 0
    %v3036 = vsel %vm2661, 1, 0
    %v3037 = vsel %vm2662, 1, 0
    %v3038 = vsel %vm2663, 1, 0
    %v3039 = vsel %vm2664, 1, 0
    %v3040 = vsel %vm2665, 1, 0
    %v3041 = vsel %vm2666, 1, 0
    %v3042 = vsel %vm2667, 1, 0
    %v3043 = vsel %vm2668, 1, 0
    %vm3044 = vcmp.eq.s32.totalorder %v2969, 1
    %vm3045 = vcmp.eq.s32.totalorder %v2970, 1
    %vm3046 = vcmp.eq.s32.totalorder %v2971, 1
    %vm3047 = vcmp.eq.s32.totalorder %v2972, 1
    %vm3048 = vcmp.eq.s32.totalorder %v2973, 1
    %vm3049 = vcmp.eq.s32.totalorder %v2974, 1
    %vm3050 = vcmp.eq.s32.totalorder %v2975, 1
    %vm3051 = vcmp.eq.s32.totalorder %v2976, 1
    %vm3052 = vcmp.eq.s32.totalorder %v2977, 1
    %vm3053 = vcmp.eq.s32.totalorder %v2978, 1
    %vm3054 = vcmp.eq.s32.totalorder %v2979, 1
    %vm3055 = vcmp.eq.s32.totalorder %v2980, 1
    %vm3056 = vcmp.eq.s32.totalorder %v2981, 1
    %vm3057 = vcmp.eq.s32.totalorder %v2982, 1
    %vm3058 = vcmp.eq.s32.totalorder %v2983, 1
    %vm3059 = vcmp.eq.s32.totalorder %v2984, 1
    %vm3060 = vcmp.eq.s32.totalorder %v2985, 1
    %vm3061 = vcmp.eq.s32.totalorder %v2986, 1
    %vm3062 = vcmp.eq.s32.totalorder %v2987, 1
    %vm3063 = vcmp.eq.s32.totalorder %v2988, 1
    %vm3064 = vcmp.eq.s32.totalorder %v2989, 1
    %vm3065 = vcmp.eq.s32.totalorder %v2990, 1
    %vm3066 = vcmp.eq.s32.totalorder %v2991, 1
    %vm3067 = vcmp.eq.s32.totalorder %v2992, 1
    %vm3068 = vcmp.eq.s32.totalorder %v2993, 1
    %vm3069 = vcmp.eq.s32.totalorder %v2994, 1
    %vm3070 = vcmp.eq.s32.totalorder %v2995, 1
    %vm3071 = vcmp.eq.s32.totalorder %v2996, 1
    %vm3072 = vcmp.eq.s32.totalorder %v2997, 1
    %vm3073 = vcmp.eq.s32.totalorder %v2998, 1
    %vm3074 = vcmp.eq.s32.totalorder %v2999, 1
    %vm3075 = vcmp.eq.s32.totalorder %v3000, 1
    %vm3076 = vcmp.eq.s32.totalorder %v3001, 1
    %vm3077 = vcmp.eq.s32.totalorder %v3002, 1
    %vm3078 = vcmp.eq.s32.totalorder %v3003, 1
    %vm3079 = vcmp.eq.s32.totalorder %v3004, 1
    %vm3080 = vcmp.eq.s32.totalorder %v3005, 1
    %vm3081 = vcmp.eq.s32.totalorder %v3006, 1
    %vm3082 = vcmp.eq.s32.totalorder %v3007, 1
    %vm3083 = vcmp.eq.s32.totalorder %v3008, 1
    %vm3084 = vcmp.eq.s32.totalorder %v3009, 1
    %vm3085 = vcmp.eq.s32.totalorder %v3010, 1
    %vm3086 = vcmp.eq.s32.totalorder %v3011, 1
    %vm3087 = vcmp.eq.s32.totalorder %v3012, 1
    %vm3088 = vcmp.eq.s32.totalorder %v3013, 1
    %vm3089 = vcmp.eq.s32.totalorder %v3014, 1
    %vm3090 = vcmp.eq.s32.totalorder %v3015, 1
    %vm3091 = vcmp.eq.s32.totalorder %v3016, 1
    %vm3092 = vcmp.eq.s32.totalorder %v3017, 1
    %vm3093 = vcmp.eq.s32.totalorder %v3018, 1
    %vm3094 = vcmp.eq.s32.totalorder %v3019, 1
    %vm3095 = vcmp.eq.s32.totalorder %v3020, 1
    %vm3096 = vcmp.eq.s32.totalorder %v3021, 1
    %vm3097 = vcmp.eq.s32.totalorder %v3022, 1
    %vm3098 = vcmp.eq.s32.totalorder %v3023, 1
    %vm3099 = vcmp.eq.s32.totalorder %v3024, 1
    %vm3100 = vcmp.eq.s32.totalorder %v3025, 1
    %vm3101 = vcmp.eq.s32.totalorder %v3026, 1
    %vm3102 = vcmp.eq.s32.totalorder %v3027, 1
    %vm3103 = vcmp.eq.s32.totalorder %v3028, 1
    %vm3104 = vcmp.eq.s32.totalorder %v3029, 1
    %vm3105 = vcmp.eq.s32.totalorder %v3030, 1
    %vm3106 = vcmp.eq.s32.totalorder %v3031, 1
    %vm3107 = vcmp.eq.s32.totalorder %v3032, 1
    %vm3108 = vcmp.eq.s32.totalorder %v3033, 1
    %vm3109 = vcmp.eq.s32.totalorder %v3034, 1
    %vm3110 = vcmp.eq.s32.totalorder %v3035, 1
    %vm3111 = vcmp.eq.s32.totalorder %v3036, 1
    %vm3112 = vcmp.eq.s32.totalorder %v3037, 1
    %vm3113 = vcmp.eq.s32.totalorder %v3038, 1
    %vm3114 = vcmp.eq.s32.totalorder %v3039, 1
    %vm3115 = vcmp.eq.s32.totalorder %v3040, 1
    %vm3116 = vcmp.eq.s32.totalorder %v3041, 1
    %vm3117 = vcmp.eq.s32.totalorder %v3042, 1
    %vm3118 = vcmp.eq.s32.totalorder %v3043, 1
    %v3119 = vsel %vm3044, %v2894, 0.0
    %v3120 = vsel %vm3045, %v2895, 0.0
    %v3121 = vsel %vm3046, %v2896, 0.0
    %v3122 = vsel %vm3047, %v2897, 0.0
    %v3123 = vsel %vm3048, %v2898, 0.0
    %v3124 = vsel %vm3049, %v2899, 0.0
    %v3125 = vsel %vm3050, %v2900, 0.0
    %v3126 = vsel %vm3051, %v2901, 0.0
    %v3127 = vsel %vm3052, %v2902, 0.0
    %v3128 = vsel %vm3053, %v2903, 0.0
    %v3129 = vsel %vm3054, %v2904, 0.0
    %v3130 = vsel %vm3055, %v2905, 0.0
    %v3131 = vsel %vm3056, %v2906, 0.0
    %v3132 = vsel %vm3057, %v2907, 0.0
    %v3133 = vsel %vm3058, %v2908, 0.0
    %v3134 = vsel %vm3059, %v2909, 0.0
    %v3135 = vsel %vm3060, %v2910, 0.0
    %v3136 = vsel %vm3061, %v2911, 0.0
    %v3137 = vsel %vm3062, %v2912, 0.0
    %v3138 = vsel %vm3063, %v2913, 0.0
    %v3139 = vsel %vm3064, %v2914, 0.0
    %v3140 = vsel %vm3065, %v2915, 0.0
    %v3141 = vsel %vm3066, %v2916, 0.0
    %v3142 = vsel %vm3067, %v2917, 0.0
    %v3143 = vsel %vm3068, %v2918, 0.0
    %v3144 = vsel %vm3069, %v2919, 0.0
    %v3145 = vsel %vm3070, %v2920, 0.0
    %v3146 = vsel %vm3071, %v2921, 0.0
    %v3147 = vsel %vm3072, %v2922, 0.0
    %v3148 = vsel %vm3073, %v2923, 0.0
    %v3149 = vsel %vm3074, %v2924, 0.0
    %v3150 = vsel %vm3075, %v2925, 0.0
    %v3151 = vsel %vm3076, %v2926, 0.0
    %v3152 = vsel %vm3077, %v2927, 0.0
    %v3153 = vsel %vm3078, %v2928, 0.0
    %v3154 = vsel %vm3079, %v2929, 0.0
    %v3155 = vsel %vm3080, %v2930, 0.0
    %v3156 = vsel %vm3081, %v2931, 0.0
    %v3157 = vsel %vm3082, %v2932, 0.0
    %v3158 = vsel %vm3083, %v2933, 0.0
    %v3159 = vsel %vm3084, %v2934, 0.0
    %v3160 = vsel %vm3085, %v2935, 0.0
    %v3161 = vsel %vm3086, %v2936, 0.0
    %v3162 = vsel %vm3087, %v2937, 0.0
    %v3163 = vsel %vm3088, %v2938, 0.0
    %v3164 = vsel %vm3089, %v2939, 0.0
    %v3165 = vsel %vm3090, %v2940, 0.0
    %v3166 = vsel %vm3091, %v2941, 0.0
    %v3167 = vsel %vm3092, %v2942, 0.0
    %v3168 = vsel %vm3093, %v2943, 0.0
    %v3169 = vsel %vm3094, %v2944, 0.0
    %v3170 = vsel %vm3095, %v2945, 0.0
    %v3171 = vsel %vm3096, %v2946, 0.0
    %v3172 = vsel %vm3097, %v2947, 0.0
    %v3173 = vsel %vm3098, %v2948, 0.0
    %v3174 = vsel %vm3099, %v2949, 0.0
    %v3175 = vsel %vm3100, %v2950, 0.0
    %v3176 = vsel %vm3101, %v2951, 0.0
    %v3177 = vsel %vm3102, %v2952, 0.0
    %v3178 = vsel %vm3103, %v2953, 0.0
    %v3179 = vsel %vm3104, %v2954, 0.0
    %v3180 = vsel %vm3105, %v2955, 0.0
    %v3181 = vsel %vm3106, %v2956, 0.0
    %v3182 = vsel %vm3107, %v2957, 0.0
    %v3183 = vsel %vm3108, %v2958, 0.0
    %v3184 = vsel %vm3109, %v2959, 0.0
    %v3185 = vsel %vm3110, %v2960, 0.0
    %v3186 = vsel %vm3111, %v2961, 0.0
    %v3187 = vsel %vm3112, %v2962, 0.0
    %v3188 = vsel %vm3113, %v2963, 0.0
    %v3189 = vsel %vm3114, %v2964, 0.0
    %v3190 = vsel %vm3115, %v2965, 0.0
    %v3191 = vsel %vm3116, %v2966, 0.0
    %v3192 = vsel %vm3117, %v2967, 0.0
    %v3193 = vsel %vm3118, %v2968, 0.0
    %v3194 = vld [vmem:[#allocation2] sm:$0x1]
    %vm3195 = vcmask 785408
    %v3196 = vsel %vm3195, %v3119, 0.0
    %v3197 = vsel %vm3195, %v3120, 0.0
    %v3198 = vadd.f32 %v3196, %v3197
    %v3199 = vsel %vm3195, %v3121, 0.0
    %v3200 = vadd.f32 %v3198, %v3199
    %v3201 = vsel %vm3195, %v3122, 0.0
    %v3202 = vadd.f32 %v3200, %v3201
    %v3203 = vsel %vm3195, %v3123, 0.0
    %v3204 = vadd.f32 %v3202, %v3203
    %v3205 = vsel %vm3195, %v3124, 0.0
    %v3206 = vadd.f32 %v3204, %v3205
    %v3207 = vsel %vm3195, %v3125, 0.0
    %v3208 = vadd.f32 %v3206, %v3207
    %v3209 = vsel %vm3195, %v3126, 0.0
    %v3210 = vadd.f32 %v3208, %v3209
    %v3211 = vsel %vm3195, %v3127, 0.0
    %v3212 = vadd.f32 %v3210, %v3211
    %v3213 = vsel %vm3195, %v3128, 0.0
    %v3214 = vadd.f32 %v3212, %v3213
    %v3215 = vsel %vm3195, %v3129, 0.0
    %v3216 = vadd.f32 %v3214, %v3215
    %v3217 = vsel %vm3195, %v3130, 0.0
    %v3218 = vadd.f32 %v3216, %v3217
    %v3219 = vsel %vm3195, %v3131, 0.0
    %v3220 = vadd.f32 %v3218, %v3219
    %v3221 = vsel %vm3195, %v3132, 0.0
    %v3222 = vadd.f32 %v3220, %v3221
    %v3223 = vsel %vm3195, %v3133, 0.0
    %v3224 = vadd.f32 %v3222, %v3223
    %v3225 = vsel %vm3195, %v3134, 0.0
    %v3226 = vadd.f32 %v3224, %v3225
    %v3227 = vsel %vm3195, %v3135, 0.0
    %v3228 = vadd.f32 %v3226, %v3227
    %v3229 = vsel %vm3195, %v3136, 0.0
    %v3230 = vadd.f32 %v3228, %v3229
    %v3231 = vsel %vm3195, %v3137, 0.0
    %v3232 = vadd.f32 %v3230, %v3231
    %v3233 = vsel %vm3195, %v3138, 0.0
    %v3234 = vadd.f32 %v3232, %v3233
    %v3235 = vsel %vm3195, %v3139, 0.0
    %v3236 = vadd.f32 %v3234, %v3235
    %v3237 = vsel %vm3195, %v3140, 0.0
    %v3238 = vadd.f32 %v3236, %v3237
    %v3239 = vsel %vm3195, %v3141, 0.0
    %v3240 = vadd.f32 %v3238, %v3239
    %v3241 = vsel %vm3195, %v3142, 0.0
    %v3242 = vadd.f32 %v3240, %v3241
    %v3243 = vsel %vm3195, %v3143, 0.0
    %v3244 = vadd.f32 %v3242, %v3243
    %v3245 = vsel %vm3195, %v3144, 0.0
    %v3246 = vadd.f32 %v3244, %v3245
    %v3247 = vsel %vm3195, %v3145, 0.0
    %v3248 = vadd.f32 %v3246, %v3247
    %v3249 = vsel %vm3195, %v3146, 0.0
    %v3250 = vadd.f32 %v3248, %v3249
    %v3251 = vsel %vm3195, %v3147, 0.0
    %v3252 = vadd.f32 %v3250, %v3251
    %v3253 = vsel %vm3195, %v3148, 0.0
    %v3254 = vadd.f32 %v3252, %v3253
    %v3255 = vsel %vm3195, %v3149, 0.0
    %v3256 = vadd.f32 %v3254, %v3255
    %v3257 = vsel %vm3195, %v3150, 0.0
    %v3258 = vadd.f32 %v3256, %v3257
    %v3259 = vsel %vm3195, %v3151, 0.0
    %v3260 = vadd.f32 %v3258, %v3259
    %v3261 = vsel %vm3195, %v3152, 0.0
    %v3262 = vadd.f32 %v3260, %v3261
    %v3263 = vsel %vm3195, %v3153, 0.0
    %v3264 = vadd.f32 %v3262, %v3263
    %v3265 = vsel %vm3195, %v3154, 0.0
    %v3266 = vadd.f32 %v3264, %v3265
    %v3267 = vsel %vm3195, %v3155, 0.0
    %v3268 = vadd.f32 %v3266, %v3267
    %v3269 = vsel %vm3195, %v3156, 0.0
    %v3270 = vadd.f32 %v3268, %v3269
    %v3271 = vsel %vm3195, %v3157, 0.0
    %v3272 = vadd.f32 %v3270, %v3271
    %v3273 = vsel %vm3195, %v3158, 0.0
    %v3274 = vadd.f32 %v3272, %v3273
    %v3275 = vsel %vm3195, %v3159, 0.0
    %v3276 = vadd.f32 %v3274, %v3275
    %v3277 = vsel %vm3195, %v3160, 0.0
    %v3278 = vadd.f32 %v3276, %v3277
    %v3279 = vsel %vm3195, %v3161, 0.0
    %v3280 = vadd.f32 %v3278, %v3279
    %v3281 = vsel %vm3195, %v3162, 0.0
    %v3282 = vadd.f32 %v3280, %v3281
    %v3283 = vsel %vm3195, %v3163, 0.0
    %v3284 = vadd.f32 %v3282, %v3283
    %v3285 = vsel %vm3195, %v3164, 0.0
    %v3286 = vadd.f32 %v3284, %v3285
    %v3287 = vsel %vm3195, %v3165, 0.0
    %v3288 = vadd.f32 %v3286, %v3287
    %v3289 = vsel %vm3195, %v3166, 0.0
    %v3290 = vadd.f32 %v3288, %v3289
    %v3291 = vsel %vm3195, %v3167, 0.0
    %v3292 = vadd.f32 %v3290, %v3291
    %v3293 = vsel %vm3195, %v3168, 0.0
    %v3294 = vadd.f32 %v3292, %v3293
    %v3295 = vsel %vm3195, %v3169, 0.0
    %v3296 = vadd.f32 %v3294, %v3295
    %v3297 = vsel %vm3195, %v3170, 0.0
    %v3298 = vadd.f32 %v3296, %v3297
    %v3299 = vsel %vm3195, %v3171, 0.0
    %v3300 = vadd.f32 %v3298, %v3299
    %v3301 = vsel %vm3195, %v3172, 0.0
    %v3302 = vadd.f32 %v3300, %v3301
    %v3303 = vsel %vm3195, %v3173, 0.0
    %v3304 = vadd.f32 %v3302, %v3303
    %v3305 = vsel %vm3195, %v3174, 0.0
    %v3306 = vadd.f32 %v3304, %v3305
    %v3307 = vsel %vm3195, %v3175, 0.0
    %v3308 = vadd.f32 %v3306, %v3307
    %v3309 = vsel %vm3195, %v3176, 0.0
    %v3310 = vadd.f32 %v3308, %v3309
    %v3311 = vsel %vm3195, %v3177, 0.0
    %v3312 = vadd.f32 %v3310, %v3311
    %v3313 = vsel %vm3195, %v3178, 0.0
    %v3314 = vadd.f32 %v3312, %v3313
    %v3315 = vsel %vm3195, %v3179, 0.0
    %v3316 = vadd.f32 %v3314, %v3315
    %v3317 = vsel %vm3195, %v3180, 0.0
    %v3318 = vadd.f32 %v3316, %v3317
    %v3319 = vsel %vm3195, %v3181, 0.0
    %v3320 = vadd.f32 %v3318, %v3319
    %v3321 = vsel %vm3195, %v3182, 0.0
    %v3322 = vadd.f32 %v3320, %v3321
    %v3323 = vsel %vm3195, %v3183, 0.0
    %v3324 = vadd.f32 %v3322, %v3323
    %v3325 = vsel %vm3195, %v3184, 0.0
    %v3326 = vadd.f32 %v3324, %v3325
    %v3327 = vsel %vm3195, %v3185, 0.0
    %v3328 = vadd.f32 %v3326, %v3327
    %v3329 = vsel %vm3195, %v3186, 0.0
    %v3330 = vadd.f32 %v3328, %v3329
    %v3331 = vsel %vm3195, %v3187, 0.0
    %v3332 = vadd.f32 %v3330, %v3331
    %v3333 = vsel %vm3195, %v3188, 0.0
    %v3334 = vadd.f32 %v3332, %v3333
    %v3335 = vsel %vm3195, %v3189, 0.0
    %v3336 = vadd.f32 %v3334, %v3335
    %v3337 = vsel %vm3195, %v3190, 0.0
    %v3338 = vadd.f32 %v3336, %v3337
    %v3339 = vsel %vm3195, %v3191, 0.0
    %v3340 = vadd.f32 %v3338, %v3339
    %v3341 = vsel %vm3195, %v3192, 0.0
    %v3342 = vadd.f32 %v3340, %v3341
    %v3343 = vsel %vm3195, %v3193, 0.0
    %v3344 = vadd.f32 %v3342, %v3343
    %v3345 = vrot.slane %v3344, 4
    %v3346 = vadd.f32 %v3344, %v3345
    %v3347 = vrot.slane %v3346, 2
    %v3348 = vadd.f32 %v3346, %v3347
    %v3349 = vrot.slane %v3348, 1
    %v3350 = vadd.f32 %v3348, %v3349
    %v3351 = vadd.f32 %v3194, %v3350
    %vm3352 = vcmask 778240
    %3353 = vst.msk [vmem:[#allocation2] sm:$0x1] %vm3352, %v3351
    %v3354 = vld [vmem:[%s174] sm:$0xff]
    %v3355 = vld [vmem:[%s174 + $0x8] sm:$0xff]
    %v3356 = vld [vmem:[%s174 + $0x10] sm:$0xff]
    %v3357 = vld [vmem:[%s174 + $0x18] sm:$0xff]
    %v3358 = vld [vmem:[%s174 + $0x20] sm:$0xff]
    %v3359 = vld [vmem:[%s174 + $0x28] sm:$0xff]
    %v3360 = vld [vmem:[%s174 + $0x30] sm:$0xff]
    %v3361 = vld [vmem:[%s174 + $0x38] sm:$0xff]
    %v3362 = vld [vmem:[%s174 + $0x40] sm:$0xff]
    %v3363 = vld [vmem:[%s174 + $0x48] sm:$0xff]
    %v3364 = vld [vmem:[%s174 + $0x50] sm:$0xff]
    %v3365 = vld [vmem:[%s174 + $0x58] sm:$0xff]
    %v3366 = vld [vmem:[%s174 + $0x60] sm:$0xff]
    %v3367 = vld [vmem:[%s174 + $0x68] sm:$0xff]
    %v3368 = vld [vmem:[%s174 + $0x70] sm:$0xff]
    %v3369 = vld [vmem:[%s174 + $0x78] sm:$0xff]
    %v3370 = vld [vmem:[%s174 + $0x80] sm:$0xff]
    %v3371 = vld [vmem:[%s174 + $0x88] sm:$0xff]
    %v3372 = vld [vmem:[%s174 + $0x90] sm:$0xff]
    %v3373 = vld [vmem:[%s174 + $0x98] sm:$0xff]
    %v3374 = vld [vmem:[%s174 + $0xa0] sm:$0xff]
    %v3375 = vld [vmem:[%s174 + $0xa8] sm:$0xff]
    %v3376 = vld [vmem:[%s174 + $0xb0] sm:$0xff]
    %v3377 = vld [vmem:[%s174 + $0xb8] sm:$0xff]
    %v3378 = vld [vmem:[%s174 + $0xc0] sm:$0xff]
    %v3379 = vld [vmem:[%s174 + $0xc8] sm:$0xff]
    %v3380 = vld [vmem:[%s174 + $0xd0] sm:$0xff]
    %v3381 = vld [vmem:[%s174 + $0xd8] sm:$0xff]
    %v3382 = vld [vmem:[%s174 + $0xe0] sm:$0xff]
    %v3383 = vld [vmem:[%s174 + $0xe8] sm:$0xff]
    %v3384 = vld [vmem:[%s174 + $0xf0] sm:$0xff]
    %v3385 = vld [vmem:[%s174 + $0xf8] sm:$0xff]
    %v3386 = vld [vmem:[%s174 + $0x100] sm:$0xff]
    %v3387 = vld [vmem:[%s174 + $0x108] sm:$0xff]
    %v3388 = vld [vmem:[%s174 + $0x110] sm:$0xff]
    %v3389 = vld [vmem:[%s174 + $0x118] sm:$0xff]
    %v3390 = vld [vmem:[%s174 + $0x120] sm:$0xff]
    %v3391 = vld [vmem:[%s174 + $0x128] sm:$0xff]
    %v3392 = vld [vmem:[%s174 + $0x130] sm:$0xff]
    %v3393 = vld [vmem:[%s174 + $0x138] sm:$0xff]
    %v3394 = vld [vmem:[%s174 + $0x140] sm:$0xff]
    %v3395 = vld [vmem:[%s174 + $0x148] sm:$0xff]
    %v3396 = vld [vmem:[%s174 + $0x150] sm:$0xff]
    %v3397 = vld [vmem:[%s174 + $0x158] sm:$0xff]
    %v3398 = vld [vmem:[%s174 + $0x160] sm:$0xff]
    %v3399 = vld [vmem:[%s174 + $0x168] sm:$0xff]
    %v3400 = vld [vmem:[%s174 + $0x170] sm:$0xff]
    %v3401 = vld [vmem:[%s174 + $0x178] sm:$0xff]
    %v3402 = vld [vmem:[%s174 + $0x180] sm:$0xff]
    %v3403 = vld [vmem:[%s174 + $0x188] sm:$0xff]
    %v3404 = vld [vmem:[%s174 + $0x190] sm:$0xff]
    %v3405 = vld [vmem:[%s174 + $0x198] sm:$0xff]
    %v3406 = vld [vmem:[%s174 + $0x1a0] sm:$0xff]
    %v3407 = vld [vmem:[%s174 + $0x1a8] sm:$0xff]
    %v3408 = vld [vmem:[%s174 + $0x1b0] sm:$0xff]
    %v3409 = vld [vmem:[%s174 + $0x1b8] sm:$0xff]
    %v3410 = vld [vmem:[%s174 + $0x1c0] sm:$0xff]
    %v3411 = vld [vmem:[%s174 + $0x1c8] sm:$0xff]
    %v3412 = vld [vmem:[%s174 + $0x1d0] sm:$0xff]
    %v3413 = vld [vmem:[%s174 + $0x1d8] sm:$0xff]
    %v3414 = vld [vmem:[%s174 + $0x1e0] sm:$0xff]
    %v3415 = vld [vmem:[%s174 + $0x1e8] sm:$0xff]
    %v3416 = vld [vmem:[%s174 + $0x1f0] sm:$0xff]
    %v3417 = vld [vmem:[%s174 + $0x1f8] sm:$0xff]
    %v3418 = vld [vmem:[%s174 + $0x200] sm:$0xff]
    %v3419 = vld [vmem:[%s174 + $0x208] sm:$0xff]
    %v3420 = vld [vmem:[%s174 + $0x210] sm:$0xff]
    %v3421 = vld [vmem:[%s174 + $0x218] sm:$0xff]
    %v3422 = vld [vmem:[%s174 + $0x220] sm:$0xff]
    %v3423 = vld [vmem:[%s174 + $0x228] sm:$0xff]
    %v3424 = vld [vmem:[%s174 + $0x230] sm:$0xff]
    %v3425 = vld [vmem:[%s174 + $0x238] sm:$0xff]
    %v3426 = vld [vmem:[%s174 + $0x240] sm:$0xff]
    %v3427 = vld [vmem:[%s174 + $0x248] sm:$0xff]
    %v3428 = vld [vmem:[%s174 + $0x250] sm:$0xff]
    %v3429 = vld [vmem:[%s186] sm:$0xff]
    %v3430 = vld [vmem:[%s186 + $0x8] sm:$0xff]
    %v3431 = vld [vmem:[%s186 + $0x10] sm:$0xff]
    %v3432 = vld [vmem:[%s186 + $0x18] sm:$0xff]
    %v3433 = vld [vmem:[%s186 + $0x20] sm:$0xff]
    %v3434 = vld [vmem:[%s186 + $0x28] sm:$0xff]
    %v3435 = vld [vmem:[%s186 + $0x30] sm:$0xff]
    %v3436 = vld [vmem:[%s186 + $0x38] sm:$0xff]
    %v3437 = vld [vmem:[%s186 + $0x40] sm:$0xff]
    %v3438 = vld [vmem:[%s186 + $0x48] sm:$0xff]
    %v3439 = vld [vmem:[%s186 + $0x50] sm:$0xff]
    %v3440 = vld [vmem:[%s186 + $0x58] sm:$0xff]
    %v3441 = vld [vmem:[%s186 + $0x60] sm:$0xff]
    %v3442 = vld [vmem:[%s186 + $0x68] sm:$0xff]
    %v3443 = vld [vmem:[%s186 + $0x70] sm:$0xff]
    %v3444 = vld [vmem:[%s186 + $0x78] sm:$0xff]
    %v3445 = vld [vmem:[%s186 + $0x80] sm:$0xff]
    %v3446 = vld [vmem:[%s186 + $0x88] sm:$0xff]
    %v3447 = vld [vmem:[%s186 + $0x90] sm:$0xff]
    %v3448 = vld [vmem:[%s186 + $0x98] sm:$0xff]
    %v3449 = vld [vmem:[%s186 + $0xa0] sm:$0xff]
    %v3450 = vld [vmem:[%s186 + $0xa8] sm:$0xff]
    %v3451 = vld [vmem:[%s186 + $0xb0] sm:$0xff]
    %v3452 = vld [vmem:[%s186 + $0xb8] sm:$0xff]
    %v3453 = vld [vmem:[%s186 + $0xc0] sm:$0xff]
    %v3454 = vld [vmem:[%s186 + $0xc8] sm:$0xff]
    %v3455 = vld [vmem:[%s186 + $0xd0] sm:$0xff]
    %v3456 = vld [vmem:[%s186 + $0xd8] sm:$0xff]
    %v3457 = vld [vmem:[%s186 + $0xe0] sm:$0xff]
    %v3458 = vld [vmem:[%s186 + $0xe8] sm:$0xff]
    %v3459 = vld [vmem:[%s186 + $0xf0] sm:$0xff]
    %v3460 = vld [vmem:[%s186 + $0xf8] sm:$0xff]
    %v3461 = vld [vmem:[%s186 + $0x100] sm:$0xff]
    %v3462 = vld [vmem:[%s186 + $0x108] sm:$0xff]
    %v3463 = vld [vmem:[%s186 + $0x110] sm:$0xff]
    %v3464 = vld [vmem:[%s186 + $0x118] sm:$0xff]
    %v3465 = vld [vmem:[%s186 + $0x120] sm:$0xff]
    %v3466 = vld [vmem:[%s186 + $0x128] sm:$0xff]
    %v3467 = vld [vmem:[%s186 + $0x130] sm:$0xff]
    %v3468 = vld [vmem:[%s186 + $0x138] sm:$0xff]
    %v3469 = vld [vmem:[%s186 + $0x140] sm:$0xff]
    %v3470 = vld [vmem:[%s186 + $0x148] sm:$0xff]
    %v3471 = vld [vmem:[%s186 + $0x150] sm:$0xff]
    %v3472 = vld [vmem:[%s186 + $0x158] sm:$0xff]
    %v3473 = vld [vmem:[%s186 + $0x160] sm:$0xff]
    %v3474 = vld [vmem:[%s186 + $0x168] sm:$0xff]
    %v3475 = vld [vmem:[%s186 + $0x170] sm:$0xff]
    %v3476 = vld [vmem:[%s186 + $0x178] sm:$0xff]
    %v3477 = vld [vmem:[%s186 + $0x180] sm:$0xff]
    %v3478 = vld [vmem:[%s186 + $0x188] sm:$0xff]
    %v3479 = vld [vmem:[%s186 + $0x190] sm:$0xff]
    %v3480 = vld [vmem:[%s186 + $0x198] sm:$0xff]
    %v3481 = vld [vmem:[%s186 + $0x1a0] sm:$0xff]
    %v3482 = vld [vmem:[%s186 + $0x1a8] sm:$0xff]
    %v3483 = vld [vmem:[%s186 + $0x1b0] sm:$0xff]
    %v3484 = vld [vmem:[%s186 + $0x1b8] sm:$0xff]
    %v3485 = vld [vmem:[%s186 + $0x1c0] sm:$0xff]
    %v3486 = vld [vmem:[%s186 + $0x1c8] sm:$0xff]
    %v3487 = vld [vmem:[%s186 + $0x1d0] sm:$0xff]
    %v3488 = vld [vmem:[%s186 + $0x1d8] sm:$0xff]
    %v3489 = vld [vmem:[%s186 + $0x1e0] sm:$0xff]
    %v3490 = vld [vmem:[%s186 + $0x1e8] sm:$0xff]
    %v3491 = vld [vmem:[%s186 + $0x1f0] sm:$0xff]
    %v3492 = vld [vmem:[%s186 + $0x1f8] sm:$0xff]
    %v3493 = vld [vmem:[%s186 + $0x200] sm:$0xff]
    %v3494 = vld [vmem:[%s186 + $0x208] sm:$0xff]
    %v3495 = vld [vmem:[%s186 + $0x210] sm:$0xff]
    %v3496 = vld [vmem:[%s186 + $0x218] sm:$0xff]
    %v3497 = vld [vmem:[%s186 + $0x220] sm:$0xff]
    %v3498 = vld [vmem:[%s186 + $0x228] sm:$0xff]
    %v3499 = vld [vmem:[%s186 + $0x230] sm:$0xff]
    %v3500 = vld [vmem:[%s186 + $0x238] sm:$0xff]
    %v3501 = vld [vmem:[%s186 + $0x240] sm:$0xff]
    %v3502 = vld [vmem:[%s186 + $0x248] sm:$0xff]
    %v3503 = vld [vmem:[%s186 + $0x250] sm:$0xff]
    %vm3504 = vcmask 326656
    %v3505 = vsel %vm3504, %v3354, -inf
    %3506 = vmax.xlane.f32.xlu0 %v3505
    %v3507 = vpop.xlane.xlu0 %3506
    %v3508 = vsel %vm3504, %v3355, -inf
    %3509 = vmax.xlane.f32.xlu0 %v3508
    %v3510 = vpop.xlane.xlu0 %3509
    %v3511 = vsel %vm3504, %v3356, -inf
    %3512 = vmax.xlane.f32.xlu0 %v3511
    %v3513 = vpop.xlane.xlu0 %3512
    %v3514 = vsel %vm3504, %v3357, -inf
    %3515 = vmax.xlane.f32.xlu0 %v3514
    %v3516 = vpop.xlane.xlu0 %3515
    %v3517 = vsel %vm3504, %v3358, -inf
    %3518 = vmax.xlane.f32.xlu0 %v3517
    %v3519 = vpop.xlane.xlu0 %3518
    %v3520 = vsel %vm3504, %v3359, -inf
    %3521 = vmax.xlane.f32.xlu0 %v3520
    %v3522 = vpop.xlane.xlu0 %3521
    %v3523 = vsel %vm3504, %v3360, -inf
    %3524 = vmax.xlane.f32.xlu0 %v3523
    %v3525 = vpop.xlane.xlu0 %3524
    %v3526 = vsel %vm3504, %v3361, -inf
    %3527 = vmax.xlane.f32.xlu0 %v3526
    %v3528 = vpop.xlane.xlu0 %3527
    %v3529 = vsel %vm3504, %v3362, -inf
    %3530 = vmax.xlane.f32.xlu0 %v3529
    %v3531 = vpop.xlane.xlu0 %3530
    %v3532 = vsel %vm3504, %v3363, -inf
    %3533 = vmax.xlane.f32.xlu0 %v3532
    %v3534 = vpop.xlane.xlu0 %3533
    %v3535 = vsel %vm3504, %v3364, -inf
    %3536 = vmax.xlane.f32.xlu0 %v3535
    %v3537 = vpop.xlane.xlu0 %3536
    %v3538 = vsel %vm3504, %v3365, -inf
    %3539 = vmax.xlane.f32.xlu0 %v3538
    %v3540 = vpop.xlane.xlu0 %3539
    %v3541 = vsel %vm3504, %v3366, -inf
    %3542 = vmax.xlane.f32.xlu0 %v3541
    %v3543 = vpop.xlane.xlu0 %3542
    %v3544 = vsel %vm3504, %v3367, -inf
    %3545 = vmax.xlane.f32.xlu0 %v3544
    %v3546 = vpop.xlane.xlu0 %3545
    %v3547 = vsel %vm3504, %v3368, -inf
    %3548 = vmax.xlane.f32.xlu0 %v3547
    %v3549 = vpop.xlane.xlu0 %3548
    %v3550 = vsel %vm3504, %v3369, -inf
    %3551 = vmax.xlane.f32.xlu0 %v3550
    %v3552 = vpop.xlane.xlu0 %3551
    %v3553 = vsel %vm3504, %v3370, -inf
    %3554 = vmax.xlane.f32.xlu0 %v3553
    %v3555 = vpop.xlane.xlu0 %3554
    %v3556 = vsel %vm3504, %v3371, -inf
    %3557 = vmax.xlane.f32.xlu0 %v3556
    %v3558 = vpop.xlane.xlu0 %3557
    %v3559 = vsel %vm3504, %v3372, -inf
    %3560 = vmax.xlane.f32.xlu0 %v3559
    %v3561 = vpop.xlane.xlu0 %3560
    %v3562 = vsel %vm3504, %v3373, -inf
    %3563 = vmax.xlane.f32.xlu0 %v3562
    %v3564 = vpop.xlane.xlu0 %3563
    %v3565 = vsel %vm3504, %v3374, -inf
    %3566 = vmax.xlane.f32.xlu0 %v3565
    %v3567 = vpop.xlane.xlu0 %3566
    %v3568 = vsel %vm3504, %v3375, -inf
    %3569 = vmax.xlane.f32.xlu0 %v3568
    %v3570 = vpop.xlane.xlu0 %3569
    %v3571 = vsel %vm3504, %v3376, -inf
    %3572 = vmax.xlane.f32.xlu0 %v3571
    %v3573 = vpop.xlane.xlu0 %3572
    %v3574 = vsel %vm3504, %v3377, -inf
    %3575 = vmax.xlane.f32.xlu0 %v3574
    %v3576 = vpop.xlane.xlu0 %3575
    %v3577 = vsel %vm3504, %v3378, -inf
    %3578 = vmax.xlane.f32.xlu0 %v3577
    %v3579 = vpop.xlane.xlu0 %3578
    %v3580 = vsel %vm3504, %v3379, -inf
    %3581 = vmax.xlane.f32.xlu0 %v3580
    %v3582 = vpop.xlane.xlu0 %3581
    %v3583 = vsel %vm3504, %v3380, -inf
    %3584 = vmax.xlane.f32.xlu0 %v3583
    %v3585 = vpop.xlane.xlu0 %3584
    %v3586 = vsel %vm3504, %v3381, -inf
    %3587 = vmax.xlane.f32.xlu0 %v3586
    %v3588 = vpop.xlane.xlu0 %3587
    %v3589 = vsel %vm3504, %v3382, -inf
    %3590 = vmax.xlane.f32.xlu0 %v3589
    %v3591 = vpop.xlane.xlu0 %3590
    %v3592 = vsel %vm3504, %v3383, -inf
    %3593 = vmax.xlane.f32.xlu0 %v3592
    %v3594 = vpop.xlane.xlu0 %3593
    %v3595 = vsel %vm3504, %v3384, -inf
    %3596 = vmax.xlane.f32.xlu0 %v3595
    %v3597 = vpop.xlane.xlu0 %3596
    %v3598 = vsel %vm3504, %v3385, -inf
    %3599 = vmax.xlane.f32.xlu0 %v3598
    %v3600 = vpop.xlane.xlu0 %3599
    %v3601 = vsel %vm3504, %v3386, -inf
    %3602 = vmax.xlane.f32.xlu0 %v3601
    %v3603 = vpop.xlane.xlu0 %3602
    %v3604 = vsel %vm3504, %v3387, -inf
    %3605 = vmax.xlane.f32.xlu0 %v3604
    %v3606 = vpop.xlane.xlu0 %3605
    %v3607 = vsel %vm3504, %v3388, -inf
    %3608 = vmax.xlane.f32.xlu0 %v3607
    %v3609 = vpop.xlane.xlu0 %3608
    %v3610 = vsel %vm3504, %v3389, -inf
    %3611 = vmax.xlane.f32.xlu0 %v3610
    %v3612 = vpop.xlane.xlu0 %3611
    %v3613 = vsel %vm3504, %v3390, -inf
    %3614 = vmax.xlane.f32.xlu0 %v3613
    %v3615 = vpop.xlane.xlu0 %3614
    %v3616 = vsel %vm3504, %v3391, -inf
    %3617 = vmax.xlane.f32.xlu0 %v3616
    %v3618 = vpop.xlane.xlu0 %3617
    %v3619 = vsel %vm3504, %v3392, -inf
    %3620 = vmax.xlane.f32.xlu0 %v3619
    %v3621 = vpop.xlane.xlu0 %3620
    %v3622 = vsel %vm3504, %v3393, -inf
    %3623 = vmax.xlane.f32.xlu0 %v3622
    %v3624 = vpop.xlane.xlu0 %3623
    %v3625 = vsel %vm3504, %v3394, -inf
    %3626 = vmax.xlane.f32.xlu0 %v3625
    %v3627 = vpop.xlane.xlu0 %3626
    %v3628 = vsel %vm3504, %v3395, -inf
    %3629 = vmax.xlane.f32.xlu0 %v3628
    %v3630 = vpop.xlane.xlu0 %3629
    %v3631 = vsel %vm3504, %v3396, -inf
    %3632 = vmax.xlane.f32.xlu0 %v3631
    %v3633 = vpop.xlane.xlu0 %3632
    %v3634 = vsel %vm3504, %v3397, -inf
    %3635 = vmax.xlane.f32.xlu0 %v3634
    %v3636 = vpop.xlane.xlu0 %3635
    %v3637 = vsel %vm3504, %v3398, -inf
    %3638 = vmax.xlane.f32.xlu0 %v3637
    %v3639 = vpop.xlane.xlu0 %3638
    %v3640 = vsel %vm3504, %v3399, -inf
    %3641 = vmax.xlane.f32.xlu0 %v3640
    %v3642 = vpop.xlane.xlu0 %3641
    %v3643 = vsel %vm3504, %v3400, -inf
    %3644 = vmax.xlane.f32.xlu0 %v3643
    %v3645 = vpop.xlane.xlu0 %3644
    %v3646 = vsel %vm3504, %v3401, -inf
    %3647 = vmax.xlane.f32.xlu0 %v3646
    %v3648 = vpop.xlane.xlu0 %3647
    %v3649 = vsel %vm3504, %v3402, -inf
    %3650 = vmax.xlane.f32.xlu0 %v3649
    %v3651 = vpop.xlane.xlu0 %3650
    %v3652 = vsel %vm3504, %v3403, -inf
    %3653 = vmax.xlane.f32.xlu0 %v3652
    %v3654 = vpop.xlane.xlu0 %3653
    %v3655 = vsel %vm3504, %v3404, -inf
    %3656 = vmax.xlane.f32.xlu0 %v3655
    %v3657 = vpop.xlane.xlu0 %3656
    %v3658 = vsel %vm3504, %v3405, -inf
    %3659 = vmax.xlane.f32.xlu0 %v3658
    %v3660 = vpop.xlane.xlu0 %3659
    %v3661 = vsel %vm3504, %v3406, -inf
    %3662 = vmax.xlane.f32.xlu0 %v3661
    %v3663 = vpop.xlane.xlu0 %3662
    %v3664 = vsel %vm3504, %v3407, -inf
    %3665 = vmax.xlane.f32.xlu0 %v3664
    %v3666 = vpop.xlane.xlu0 %3665
    %v3667 = vsel %vm3504, %v3408, -inf
    %3668 = vmax.xlane.f32.xlu0 %v3667
    %v3669 = vpop.xlane.xlu0 %3668
    %v3670 = vsel %vm3504, %v3409, -inf
    %3671 = vmax.xlane.f32.xlu0 %v3670
    %v3672 = vpop.xlane.xlu0 %3671
    %v3673 = vsel %vm3504, %v3410, -inf
    %3674 = vmax.xlane.f32.xlu0 %v3673
    %v3675 = vpop.xlane.xlu0 %3674
    %v3676 = vsel %vm3504, %v3411, -inf
    %3677 = vmax.xlane.f32.xlu0 %v3676
    %v3678 = vpop.xlane.xlu0 %3677
    %v3679 = vsel %vm3504, %v3412, -inf
    %3680 = vmax.xlane.f32.xlu0 %v3679
    %v3681 = vpop.xlane.xlu0 %3680
    %v3682 = vsel %vm3504, %v3413, -inf
    %3683 = vmax.xlane.f32.xlu0 %v3682
    %v3684 = vpop.xlane.xlu0 %3683
    %v3685 = vsel %vm3504, %v3414, -inf
    %3686 = vmax.xlane.f32.xlu0 %v3685
    %v3687 = vpop.xlane.xlu0 %3686
    %v3688 = vsel %vm3504, %v3415, -inf
    %3689 = vmax.xlane.f32.xlu0 %v3688
    %v3690 = vpop.xlane.xlu0 %3689
    %v3691 = vsel %vm3504, %v3416, -inf
    %3692 = vmax.xlane.f32.xlu0 %v3691
    %v3693 = vpop.xlane.xlu0 %3692
    %v3694 = vsel %vm3504, %v3417, -inf
    %3695 = vmax.xlane.f32.xlu0 %v3694
    %v3696 = vpop.xlane.xlu0 %3695
    %v3697 = vsel %vm3504, %v3418, -inf
    %3698 = vmax.xlane.f32.xlu0 %v3697
    %v3699 = vpop.xlane.xlu0 %3698
    %v3700 = vsel %vm3504, %v3419, -inf
    %3701 = vmax.xlane.f32.xlu0 %v3700
    %v3702 = vpop.xlane.xlu0 %3701
    %v3703 = vsel %vm3504, %v3420, -inf
    %3704 = vmax.xlane.f32.xlu0 %v3703
    %v3705 = vpop.xlane.xlu0 %3704
    %v3706 = vsel %vm3504, %v3421, -inf
    %3707 = vmax.xlane.f32.xlu0 %v3706
    %v3708 = vpop.xlane.xlu0 %3707
    %v3709 = vsel %vm3504, %v3422, -inf
    %3710 = vmax.xlane.f32.xlu0 %v3709
    %v3711 = vpop.xlane.xlu0 %3710
    %v3712 = vsel %vm3504, %v3423, -inf
    %3713 = vmax.xlane.f32.xlu0 %v3712
    %v3714 = vpop.xlane.xlu0 %3713
    %v3715 = vsel %vm3504, %v3424, -inf
    %3716 = vmax.xlane.f32.xlu0 %v3715
    %v3717 = vpop.xlane.xlu0 %3716
    %v3718 = vsel %vm3504, %v3425, -inf
    %3719 = vmax.xlane.f32.xlu0 %v3718
    %v3720 = vpop.xlane.xlu0 %3719
    %v3721 = vsel %vm3504, %v3426, -inf
    %3722 = vmax.xlane.f32.xlu0 %v3721
    %v3723 = vpop.xlane.xlu0 %3722
    %v3724 = vsel %vm3504, %v3427, -inf
    %3725 = vmax.xlane.f32.xlu0 %v3724
    %v3726 = vpop.xlane.xlu0 %3725
    %v3727 = vsel %vm3504, %v3428, -inf
    %3728 = vmax.xlane.f32.xlu0 %v3727
    %v3729 = vpop.xlane.xlu0 %3728
    %v3730 = vsub.f32 %v3354, %v3507
    %v3731 = vsub.f32 %v3355, %v3510
    %v3732 = vsub.f32 %v3356, %v3513
    %v3733 = vsub.f32 %v3357, %v3516
    %v3734 = vsub.f32 %v3358, %v3519
    %v3735 = vsub.f32 %v3359, %v3522
    %v3736 = vsub.f32 %v3360, %v3525
    %v3737 = vsub.f32 %v3361, %v3528
    %v3738 = vsub.f32 %v3362, %v3531
    %v3739 = vsub.f32 %v3363, %v3534
    %v3740 = vsub.f32 %v3364, %v3537
    %v3741 = vsub.f32 %v3365, %v3540
    %v3742 = vsub.f32 %v3366, %v3543
    %v3743 = vsub.f32 %v3367, %v3546
    %v3744 = vsub.f32 %v3368, %v3549
    %v3745 = vsub.f32 %v3369, %v3552
    %v3746 = vsub.f32 %v3370, %v3555
    %v3747 = vsub.f32 %v3371, %v3558
    %v3748 = vsub.f32 %v3372, %v3561
    %v3749 = vsub.f32 %v3373, %v3564
    %v3750 = vsub.f32 %v3374, %v3567
    %v3751 = vsub.f32 %v3375, %v3570
    %v3752 = vsub.f32 %v3376, %v3573
    %v3753 = vsub.f32 %v3377, %v3576
    %v3754 = vsub.f32 %v3378, %v3579
    %v3755 = vsub.f32 %v3379, %v3582
    %v3756 = vsub.f32 %v3380, %v3585
    %v3757 = vsub.f32 %v3381, %v3588
    %v3758 = vsub.f32 %v3382, %v3591
    %v3759 = vsub.f32 %v3383, %v3594
    %v3760 = vsub.f32 %v3384, %v3597
    %v3761 = vsub.f32 %v3385, %v3600
    %v3762 = vsub.f32 %v3386, %v3603
    %v3763 = vsub.f32 %v3387, %v3606
    %v3764 = vsub.f32 %v3388, %v3609
    %v3765 = vsub.f32 %v3389, %v3612
    %v3766 = vsub.f32 %v3390, %v3615
    %v3767 = vsub.f32 %v3391, %v3618
    %v3768 = vsub.f32 %v3392, %v3621
    %v3769 = vsub.f32 %v3393, %v3624
    %v3770 = vsub.f32 %v3394, %v3627
    %v3771 = vsub.f32 %v3395, %v3630
    %v3772 = vsub.f32 %v3396, %v3633
    %v3773 = vsub.f32 %v3397, %v3636
    %v3774 = vsub.f32 %v3398, %v3639
    %v3775 = vsub.f32 %v3399, %v3642
    %v3776 = vsub.f32 %v3400, %v3645
    %v3777 = vsub.f32 %v3401, %v3648
    %v3778 = vsub.f32 %v3402, %v3651
    %v3779 = vsub.f32 %v3403, %v3654
    %v3780 = vsub.f32 %v3404, %v3657
    %v3781 = vsub.f32 %v3405, %v3660
    %v3782 = vsub.f32 %v3406, %v3663
    %v3783 = vsub.f32 %v3407, %v3666
    %v3784 = vsub.f32 %v3408, %v3669
    %v3785 = vsub.f32 %v3409, %v3672
    %v3786 = vsub.f32 %v3410, %v3675
    %v3787 = vsub.f32 %v3411, %v3678
    %v3788 = vsub.f32 %v3412, %v3681
    %v3789 = vsub.f32 %v3413, %v3684
    %v3790 = vsub.f32 %v3414, %v3687
    %v3791 = vsub.f32 %v3415, %v3690
    %v3792 = vsub.f32 %v3416, %v3693
    %v3793 = vsub.f32 %v3417, %v3696
    %v3794 = vsub.f32 %v3418, %v3699
    %v3795 = vsub.f32 %v3419, %v3702
    %v3796 = vsub.f32 %v3420, %v3705
    %v3797 = vsub.f32 %v3421, %v3708
    %v3798 = vsub.f32 %v3422, %v3711
    %v3799 = vsub.f32 %v3423, %v3714
    %v3800 = vsub.f32 %v3424, %v3717
    %v3801 = vsub.f32 %v3425, %v3720
    %v3802 = vsub.f32 %v3426, %v3723
    %v3803 = vsub.f32 %v3427, %v3726
    %v3804 = vsub.f32 %v3428, %v3729
    %v3805 = vmul.f32 %v3730, 1.442695
    %v3806 = vpow.pop %v3805
    %v3807 = vmul.f32 %v3731, 1.442695
    %v3808 = vpow.pop %v3807
    %v3809 = vmul.f32 %v3732, 1.442695
    %v3810 = vpow.pop %v3809
    %v3811 = vmul.f32 %v3733, 1.442695
    %v3812 = vpow.pop %v3811
    %v3813 = vmul.f32 %v3734, 1.442695
    %v3814 = vpow.pop %v3813
    %v3815 = vmul.f32 %v3735, 1.442695
    %v3816 = vpow.pop %v3815
    %v3817 = vmul.f32 %v3736, 1.442695
    %v3818 = vpow.pop %v3817
    %v3819 = vmul.f32 %v3737, 1.442695
    %v3820 = vpow.pop %v3819
    %v3821 = vmul.f32 %v3738, 1.442695
    %v3822 = vpow.pop %v3821
    %v3823 = vmul.f32 %v3739, 1.442695
    %v3824 = vpow.pop %v3823
    %v3825 = vmul.f32 %v3740, 1.442695
    %v3826 = vpow.pop %v3825
    %v3827 = vmul.f32 %v3741, 1.442695
    %v3828 = vpow.pop %v3827
    %v3829 = vmul.f32 %v3742, 1.442695
    %v3830 = vpow.pop %v3829
    %v3831 = vmul.f32 %v3743, 1.442695
    %v3832 = vpow.pop %v3831
    %v3833 = vmul.f32 %v3744, 1.442695
    %v3834 = vpow.pop %v3833
    %v3835 = vmul.f32 %v3745, 1.442695
    %v3836 = vpow.pop %v3835
    %v3837 = vmul.f32 %v3746, 1.442695
    %v3838 = vpow.pop %v3837
    %v3839 = vmul.f32 %v3747, 1.442695
    %v3840 = vpow.pop %v3839
    %v3841 = vmul.f32 %v3748, 1.442695
    %v3842 = vpow.pop %v3841
    %v3843 = vmul.f32 %v3749, 1.442695
    %v3844 = vpow.pop %v3843
    %v3845 = vmul.f32 %v3750, 1.442695
    %v3846 = vpow.pop %v3845
    %v3847 = vmul.f32 %v3751, 1.442695
    %v3848 = vpow.pop %v3847
    %v3849 = vmul.f32 %v3752, 1.442695
    %v3850 = vpow.pop %v3849
    %v3851 = vmul.f32 %v3753, 1.442695
    %v3852 = vpow.pop %v3851
    %v3853 = vmul.f32 %v3754, 1.442695
    %v3854 = vpow.pop %v3853
    %v3855 = vmul.f32 %v3755, 1.442695
    %v3856 = vpow.pop %v3855
    %v3857 = vmul.f32 %v3756, 1.442695
    %v3858 = vpow.pop %v3857
    %v3859 = vmul.f32 %v3757, 1.442695
    %v3860 = vpow.pop %v3859
    %v3861 = vmul.f32 %v3758, 1.442695
    %v3862 = vpow.pop %v3861
    %v3863 = vmul.f32 %v3759, 1.442695
    %v3864 = vpow.pop %v3863
    %v3865 = vmul.f32 %v3760, 1.442695
    %v3866 = vpow.pop %v3865
    %v3867 = vmul.f32 %v3761, 1.442695
    %v3868 = vpow.pop %v3867
    %v3869 = vmul.f32 %v3762, 1.442695
    %v3870 = vpow.pop %v3869
    %v3871 = vmul.f32 %v3763, 1.442695
    %v3872 = vpow.pop %v3871
    %v3873 = vmul.f32 %v3764, 1.442695
    %v3874 = vpow.pop %v3873
    %v3875 = vmul.f32 %v3765, 1.442695
    %v3876 = vpow.pop %v3875
    %v3877 = vmul.f32 %v3766, 1.442695
    %v3878 = vpow.pop %v3877
    %v3879 = vmul.f32 %v3767, 1.442695
    %v3880 = vpow.pop %v3879
    %v3881 = vmul.f32 %v3768, 1.442695
    %v3882 = vpow.pop %v3881
    %v3883 = vmul.f32 %v3769, 1.442695
    %v3884 = vpow.pop %v3883
    %v3885 = vmul.f32 %v3770, 1.442695
    %v3886 = vpow.pop %v3885
    %v3887 = vmul.f32 %v3771, 1.442695
    %v3888 = vpow.pop %v3887
    %v3889 = vmul.f32 %v3772, 1.442695
    %v3890 = vpow.pop %v3889
    %v3891 = vmul.f32 %v3773, 1.442695
    %v3892 = vpow.pop %v3891
    %v3893 = vmul.f32 %v3774, 1.442695
    %v3894 = vpow.pop %v3893
    %v3895 = vmul.f32 %v3775, 1.442695
    %v3896 = vpow.pop %v3895
    %v3897 = vmul.f32 %v3776, 1.442695
    %v3898 = vpow.pop %v3897
    %v3899 = vmul.f32 %v3777, 1.442695
    %v3900 = vpow.pop %v3899
    %v3901 = vmul.f32 %v3778, 1.442695
    %v3902 = vpow.pop %v3901
    %v3903 = vmul.f32 %v3779, 1.442695
    %v3904 = vpow.pop %v3903
    %v3905 = vmul.f32 %v3780, 1.442695
    %v3906 = vpow.pop %v3905
    %v3907 = vmul.f32 %v3781, 1.442695
    %v3908 = vpow.pop %v3907
    %v3909 = vmul.f32 %v3782, 1.442695
    %v3910 = vpow.pop %v3909
    %v3911 = vmul.f32 %v3783, 1.442695
    %v3912 = vpow.pop %v3911
    %v3913 = vmul.f32 %v3784, 1.442695
    %v3914 = vpow.pop %v3913
    %v3915 = vmul.f32 %v3785, 1.442695
    %v3916 = vpow.pop %v3915
    %v3917 = vmul.f32 %v3786, 1.442695
    %v3918 = vpow.pop %v3917
    %v3919 = vmul.f32 %v3787, 1.442695
    %v3920 = vpow.pop %v3919
    %v3921 = vmul.f32 %v3788, 1.442695
    %v3922 = vpow.pop %v3921
    %v3923 = vmul.f32 %v3789, 1.442695
    %v3924 = vpow.pop %v3923
    %v3925 = vmul.f32 %v3790, 1.442695
    %v3926 = vpow.pop %v3925
    %v3927 = vmul.f32 %v3791, 1.442695
    %v3928 = vpow.pop %v3927
    %v3929 = vmul.f32 %v3792, 1.442695
    %v3930 = vpow.pop %v3929
    %v3931 = vmul.f32 %v3793, 1.442695
    %v3932 = vpow.pop %v3931
    %v3933 = vmul.f32 %v3794, 1.442695
    %v3934 = vpow.pop %v3933
    %v3935 = vmul.f32 %v3795, 1.442695
    %v3936 = vpow.pop %v3935
    %v3937 = vmul.f32 %v3796, 1.442695
    %v3938 = vpow.pop %v3937
    %v3939 = vmul.f32 %v3797, 1.442695
    %v3940 = vpow.pop %v3939
    %v3941 = vmul.f32 %v3798, 1.442695
    %v3942 = vpow.pop %v3941
    %v3943 = vmul.f32 %v3799, 1.442695
    %v3944 = vpow.pop %v3943
    %v3945 = vmul.f32 %v3800, 1.442695
    %v3946 = vpow.pop %v3945
    %v3947 = vmul.f32 %v3801, 1.442695
    %v3948 = vpow.pop %v3947
    %v3949 = vmul.f32 %v3802, 1.442695
    %v3950 = vpow.pop %v3949
    %v3951 = vmul.f32 %v3803, 1.442695
    %v3952 = vpow.pop %v3951
    %v3953 = vmul.f32 %v3804, 1.442695
    %v3954 = vpow.pop %v3953
    %v3955 = vsel %vm3504, %v3806, 0.0
    %3956 = vadd.xlane.f32.xlu0 %v3955
    %v3957 = vpop.xlane.xlu0 %3956
    %v3958 = vsel %vm3504, %v3808, 0.0
    %3959 = vadd.xlane.f32.xlu0 %v3958
    %v3960 = vpop.xlane.xlu0 %3959
    %v3961 = vsel %vm3504, %v3810, 0.0
    %3962 = vadd.xlane.f32.xlu0 %v3961
    %v3963 = vpop.xlane.xlu0 %3962
    %v3964 = vsel %vm3504, %v3812, 0.0
    %3965 = vadd.xlane.f32.xlu0 %v3964
    %v3966 = vpop.xlane.xlu0 %3965
    %v3967 = vsel %vm3504, %v3814, 0.0
    %3968 = vadd.xlane.f32.xlu0 %v3967
    %v3969 = vpop.xlane.xlu0 %3968
    %v3970 = vsel %vm3504, %v3816, 0.0
    %3971 = vadd.xlane.f32.xlu0 %v3970
    %v3972 = vpop.xlane.xlu0 %3971
    %v3973 = vsel %vm3504, %v3818, 0.0
    %3974 = vadd.xlane.f32.xlu0 %v3973
    %v3975 = vpop.xlane.xlu0 %3974
    %v3976 = vsel %vm3504, %v3820, 0.0
    %3977 = vadd.xlane.f32.xlu0 %v3976
    %v3978 = vpop.xlane.xlu0 %3977
    %v3979 = vsel %vm3504, %v3822, 0.0
    %3980 = vadd.xlane.f32.xlu0 %v3979
    %v3981 = vpop.xlane.xlu0 %3980
    %v3982 = vsel %vm3504, %v3824, 0.0
    %3983 = vadd.xlane.f32.xlu0 %v3982
    %v3984 = vpop.xlane.xlu0 %3983
    %v3985 = vsel %vm3504, %v3826, 0.0
    %3986 = vadd.xlane.f32.xlu0 %v3985
    %v3987 = vpop.xlane.xlu0 %3986
    %v3988 = vsel %vm3504, %v3828, 0.0
    %3989 = vadd.xlane.f32.xlu0 %v3988
    %v3990 = vpop.xlane.xlu0 %3989
    %v3991 = vsel %vm3504, %v3830, 0.0
    %3992 = vadd.xlane.f32.xlu0 %v3991
    %v3993 = vpop.xlane.xlu0 %3992
    %v3994 = vsel %vm3504, %v3832, 0.0
    %3995 = vadd.xlane.f32.xlu0 %v3994
    %v3996 = vpop.xlane.xlu0 %3995
    %v3997 = vsel %vm3504, %v3834, 0.0
    %3998 = vadd.xlane.f32.xlu0 %v3997
    %v3999 = vpop.xlane.xlu0 %3998
    %v4000 = vsel %vm3504, %v3836, 0.0
    %4001 = vadd.xlane.f32.xlu0 %v4000
    %v4002 = vpop.xlane.xlu0 %4001
    %v4003 = vsel %vm3504, %v3838, 0.0
    %4004 = vadd.xlane.f32.xlu0 %v4003
    %v4005 = vpop.xlane.xlu0 %4004
    %v4006 = vsel %vm3504, %v3840, 0.0
    %4007 = vadd.xlane.f32.xlu0 %v4006
    %v4008 = vpop.xlane.xlu0 %4007
    %v4009 = vsel %vm3504, %v3842, 0.0
    %4010 = vadd.xlane.f32.xlu0 %v4009
    %v4011 = vpop.xlane.xlu0 %4010
    %v4012 = vsel %vm3504, %v3844, 0.0
    %4013 = vadd.xlane.f32.xlu0 %v4012
    %v4014 = vpop.xlane.xlu0 %4013
    %v4015 = vsel %vm3504, %v3846, 0.0
    %4016 = vadd.xlane.f32.xlu0 %v4015
    %v4017 = vpop.xlane.xlu0 %4016
    %v4018 = vsel %vm3504, %v3848, 0.0
    %4019 = vadd.xlane.f32.xlu0 %v4018
    %v4020 = vpop.xlane.xlu0 %4019
    %v4021 = vsel %vm3504, %v3850, 0.0
    %4022 = vadd.xlane.f32.xlu0 %v4021
    %v4023 = vpop.xlane.xlu0 %4022
    %v4024 = vsel %vm3504, %v3852, 0.0
    %4025 = vadd.xlane.f32.xlu0 %v4024
    %v4026 = vpop.xlane.xlu0 %4025
    %v4027 = vsel %vm3504, %v3854, 0.0
    %4028 = vadd.xlane.f32.xlu0 %v4027
    %v4029 = vpop.xlane.xlu0 %4028
    %v4030 = vsel %vm3504, %v3856, 0.0
    %4031 = vadd.xlane.f32.xlu0 %v4030
    %v4032 = vpop.xlane.xlu0 %4031
    %v4033 = vsel %vm3504, %v3858, 0.0
    %4034 = vadd.xlane.f32.xlu0 %v4033
    %v4035 = vpop.xlane.xlu0 %4034
    %v4036 = vsel %vm3504, %v3860, 0.0
    %4037 = vadd.xlane.f32.xlu0 %v4036
    %v4038 = vpop.xlane.xlu0 %4037
    %v4039 = vsel %vm3504, %v3862, 0.0
    %4040 = vadd.xlane.f32.xlu0 %v4039
    %v4041 = vpop.xlane.xlu0 %4040
    %v4042 = vsel %vm3504, %v3864, 0.0
    %4043 = vadd.xlane.f32.xlu0 %v4042
    %v4044 = vpop.xlane.xlu0 %4043
    %v4045 = vsel %vm3504, %v3866, 0.0
    %4046 = vadd.xlane.f32.xlu0 %v4045
    %v4047 = vpop.xlane.xlu0 %4046
    %v4048 = vsel %vm3504, %v3868, 0.0
    %4049 = vadd.xlane.f32.xlu0 %v4048
    %v4050 = vpop.xlane.xlu0 %4049
    %v4051 = vsel %vm3504, %v3870, 0.0
    %4052 = vadd.xlane.f32.xlu0 %v4051
    %v4053 = vpop.xlane.xlu0 %4052
    %v4054 = vsel %vm3504, %v3872, 0.0
    %4055 = vadd.xlane.f32.xlu0 %v4054
    %v4056 = vpop.xlane.xlu0 %4055
    %v4057 = vsel %vm3504, %v3874, 0.0
    %4058 = vadd.xlane.f32.xlu0 %v4057
    %v4059 = vpop.xlane.xlu0 %4058
    %v4060 = vsel %vm3504, %v3876, 0.0
    %4061 = vadd.xlane.f32.xlu0 %v4060
    %v4062 = vpop.xlane.xlu0 %4061
    %v4063 = vsel %vm3504, %v3878, 0.0
    %4064 = vadd.xlane.f32.xlu0 %v4063
    %v4065 = vpop.xlane.xlu0 %4064
    %v4066 = vsel %vm3504, %v3880, 0.0
    %4067 = vadd.xlane.f32.xlu0 %v4066
    %v4068 = vpop.xlane.xlu0 %4067
    %v4069 = vsel %vm3504, %v3882, 0.0
    %4070 = vadd.xlane.f32.xlu0 %v4069
    %v4071 = vpop.xlane.xlu0 %4070
    %v4072 = vsel %vm3504, %v3884, 0.0
    %4073 = vadd.xlane.f32.xlu0 %v4072
    %v4074 = vpop.xlane.xlu0 %4073
    %v4075 = vsel %vm3504, %v3886, 0.0
    %4076 = vadd.xlane.f32.xlu0 %v4075
    %v4077 = vpop.xlane.xlu0 %4076
    %v4078 = vsel %vm3504, %v3888, 0.0
    %4079 = vadd.xlane.f32.xlu0 %v4078
    %v4080 = vpop.xlane.xlu0 %4079
    %v4081 = vsel %vm3504, %v3890, 0.0
    %4082 = vadd.xlane.f32.xlu0 %v4081
    %v4083 = vpop.xlane.xlu0 %4082
    %v4084 = vsel %vm3504, %v3892, 0.0
    %4085 = vadd.xlane.f32.xlu0 %v4084
    %v4086 = vpop.xlane.xlu0 %4085
    %v4087 = vsel %vm3504, %v3894, 0.0
    %4088 = vadd.xlane.f32.xlu0 %v4087
    %v4089 = vpop.xlane.xlu0 %4088
    %v4090 = vsel %vm3504, %v3896, 0.0
    %4091 = vadd.xlane.f32.xlu0 %v4090
    %v4092 = vpop.xlane.xlu0 %4091
    %v4093 = vsel %vm3504, %v3898, 0.0
    %4094 = vadd.xlane.f32.xlu0 %v4093
    %v4095 = vpop.xlane.xlu0 %4094
    %v4096 = vsel %vm3504, %v3900, 0.0
    %4097 = vadd.xlane.f32.xlu0 %v4096
    %v4098 = vpop.xlane.xlu0 %4097
    %v4099 = vsel %vm3504, %v3902, 0.0
    %4100 = vadd.xlane.f32.xlu0 %v4099
    %v4101 = vpop.xlane.xlu0 %4100
    %v4102 = vsel %vm3504, %v3904, 0.0
    %4103 = vadd.xlane.f32.xlu0 %v4102
    %v4104 = vpop.xlane.xlu0 %4103
    %v4105 = vsel %vm3504, %v3906, 0.0
    %4106 = vadd.xlane.f32.xlu0 %v4105
    %v4107 = vpop.xlane.xlu0 %4106
    %v4108 = vsel %vm3504, %v3908, 0.0
    %4109 = vadd.xlane.f32.xlu0 %v4108
    %v4110 = vpop.xlane.xlu0 %4109
    %v4111 = vsel %vm3504, %v3910, 0.0
    %4112 = vadd.xlane.f32.xlu0 %v4111
    %v4113 = vpop.xlane.xlu0 %4112
    %v4114 = vsel %vm3504, %v3912, 0.0
    %4115 = vadd.xlane.f32.xlu0 %v4114
    %v4116 = vpop.xlane.xlu0 %4115
    %v4117 = vsel %vm3504, %v3914, 0.0
    %4118 = vadd.xlane.f32.xlu0 %v4117
    %v4119 = vpop.xlane.xlu0 %4118
    %v4120 = vsel %vm3504, %v3916, 0.0
    %4121 = vadd.xlane.f32.xlu0 %v4120
    %v4122 = vpop.xlane.xlu0 %4121
    %v4123 = vsel %vm3504, %v3918, 0.0
    %4124 = vadd.xlane.f32.xlu0 %v4123
    %v4125 = vpop.xlane.xlu0 %4124
    %v4126 = vsel %vm3504, %v3920, 0.0
    %4127 = vadd.xlane.f32.xlu0 %v4126
    %v4128 = vpop.xlane.xlu0 %4127
    %v4129 = vsel %vm3504, %v3922, 0.0
    %4130 = vadd.xlane.f32.xlu0 %v4129
    %v4131 = vpop.xlane.xlu0 %4130
    %v4132 = vsel %vm3504, %v3924, 0.0
    %4133 = vadd.xlane.f32.xlu0 %v4132
    %v4134 = vpop.xlane.xlu0 %4133
    %v4135 = vsel %vm3504, %v3926, 0.0
    %4136 = vadd.xlane.f32.xlu0 %v4135
    %v4137 = vpop.xlane.xlu0 %4136
    %v4138 = vsel %vm3504, %v3928, 0.0
    %4139 = vadd.xlane.f32.xlu0 %v4138
    %v4140 = vpop.xlane.xlu0 %4139
    %v4141 = vsel %vm3504, %v3930, 0.0
    %4142 = vadd.xlane.f32.xlu0 %v4141
    %v4143 = vpop.xlane.xlu0 %4142
    %v4144 = vsel %vm3504, %v3932, 0.0
    %4145 = vadd.xlane.f32.xlu0 %v4144
    %v4146 = vpop.xlane.xlu0 %4145
    %v4147 = vsel %vm3504, %v3934, 0.0
    %4148 = vadd.xlane.f32.xlu0 %v4147
    %v4149 = vpop.xlane.xlu0 %4148
    %v4150 = vsel %vm3504, %v3936, 0.0
    %4151 = vadd.xlane.f32.xlu0 %v4150
    %v4152 = vpop.xlane.xlu0 %4151
    %v4153 = vsel %vm3504, %v3938, 0.0
    %4154 = vadd.xlane.f32.xlu0 %v4153
    %v4155 = vpop.xlane.xlu0 %4154
    %v4156 = vsel %vm3504, %v3940, 0.0
    %4157 = vadd.xlane.f32.xlu0 %v4156
    %v4158 = vpop.xlane.xlu0 %4157
    %v4159 = vsel %vm3504, %v3942, 0.0
    %4160 = vadd.xlane.f32.xlu0 %v4159
    %v4161 = vpop.xlane.xlu0 %4160
    %v4162 = vsel %vm3504, %v3944, 0.0
    %4163 = vadd.xlane.f32.xlu0 %v4162
    %v4164 = vpop.xlane.xlu0 %4163
    %v4165 = vsel %vm3504, %v3946, 0.0
    %4166 = vadd.xlane.f32.xlu0 %v4165
    %v4167 = vpop.xlane.xlu0 %4166
    %v4168 = vsel %vm3504, %v3948, 0.0
    %4169 = vadd.xlane.f32.xlu0 %v4168
    %v4170 = vpop.xlane.xlu0 %4169
    %v4171 = vsel %vm3504, %v3950, 0.0
    %4172 = vadd.xlane.f32.xlu0 %v4171
    %v4173 = vpop.xlane.xlu0 %4172
    %v4174 = vsel %vm3504, %v3952, 0.0
    %4175 = vadd.xlane.f32.xlu0 %v4174
    %v4176 = vpop.xlane.xlu0 %4175
    %v4177 = vsel %vm3504, %v3954, 0.0
    %4178 = vadd.xlane.f32.xlu0 %v4177
    %v4179 = vpop.xlane.xlu0 %4178
    %v4180 = vlog2.pop %v3957
    %v4181 = vmul.f32 %v4180, 0.6931472
    %v4182 = vlog2.pop %v3960
    %v4183 = vmul.f32 %v4182, 0.6931472
    %v4184 = vlog2.pop %v3963
    %v4185 = vmul.f32 %v4184, 0.6931472
    %v4186 = vlog2.pop %v3966
    %v4187 = vmul.f32 %v4186, 0.6931472
    %v4188 = vlog2.pop %v3969
    %v4189 = vmul.f32 %v4188, 0.6931472
    %v4190 = vlog2.pop %v3972
    %v4191 = vmul.f32 %v4190, 0.6931472
    %v4192 = vlog2.pop %v3975
    %v4193 = vmul.f32 %v4192, 0.6931472
    %v4194 = vlog2.pop %v3978
    %v4195 = vmul.f32 %v4194, 0.6931472
    %v4196 = vlog2.pop %v3981
    %v4197 = vmul.f32 %v4196, 0.6931472
    %v4198 = vlog2.pop %v3984
    %v4199 = vmul.f32 %v4198, 0.6931472
    %v4200 = vlog2.pop %v3987
    %v4201 = vmul.f32 %v4200, 0.6931472
    %v4202 = vlog2.pop %v3990
    %v4203 = vmul.f32 %v4202, 0.6931472
    %v4204 = vlog2.pop %v3993
    %v4205 = vmul.f32 %v4204, 0.6931472
    %v4206 = vlog2.pop %v3996
    %v4207 = vmul.f32 %v4206, 0.6931472
    %v4208 = vlog2.pop %v3999
    %v4209 = vmul.f32 %v4208, 0.6931472
    %v4210 = vlog2.pop %v4002
    %v4211 = vmul.f32 %v4210, 0.6931472
    %v4212 = vlog2.pop %v4005
    %v4213 = vmul.f32 %v4212, 0.6931472
    %v4214 = vlog2.pop %v4008
    %v4215 = vmul.f32 %v4214, 0.6931472
    %v4216 = vlog2.pop %v4011
    %v4217 = vmul.f32 %v4216, 0.6931472
    %v4218 = vlog2.pop %v4014
    %v4219 = vmul.f32 %v4218, 0.6931472
    %v4220 = vlog2.pop %v4017
    %v4221 = vmul.f32 %v4220, 0.6931472
    %v4222 = vlog2.pop %v4020
    %v4223 = vmul.f32 %v4222, 0.6931472
    %v4224 = vlog2.pop %v4023
    %v4225 = vmul.f32 %v4224, 0.6931472
    %v4226 = vlog2.pop %v4026
    %v4227 = vmul.f32 %v4226, 0.6931472
    %v4228 = vlog2.pop %v4029
    %v4229 = vmul.f32 %v4228, 0.6931472
    %v4230 = vlog2.pop %v4032
    %v4231 = vmul.f32 %v4230, 0.6931472
    %v4232 = vlog2.pop %v4035
    %v4233 = vmul.f32 %v4232, 0.6931472
    %v4234 = vlog2.pop %v4038
    %v4235 = vmul.f32 %v4234, 0.6931472
    %v4236 = vlog2.pop %v4041
    %v4237 = vmul.f32 %v4236, 0.6931472
    %v4238 = vlog2.pop %v4044
    %v4239 = vmul.f32 %v4238, 0.6931472
    %v4240 = vlog2.pop %v4047
    %v4241 = vmul.f32 %v4240, 0.6931472
    %v4242 = vlog2.pop %v4050
    %v4243 = vmul.f32 %v4242, 0.6931472
    %v4244 = vlog2.pop %v4053
    %v4245 = vmul.f32 %v4244, 0.6931472
    %v4246 = vlog2.pop %v4056
    %v4247 = vmul.f32 %v4246, 0.6931472
    %v4248 = vlog2.pop %v4059
    %v4249 = vmul.f32 %v4248, 0.6931472
    %v4250 = vlog2.pop %v4062
    %v4251 = vmul.f32 %v4250, 0.6931472
    %v4252 = vlog2.pop %v4065
    %v4253 = vmul.f32 %v4252, 0.6931472
    %v4254 = vlog2.pop %v4068
    %v4255 = vmul.f32 %v4254, 0.6931472
    %v4256 = vlog2.pop %v4071
    %v4257 = vmul.f32 %v4256, 0.6931472
    %v4258 = vlog2.pop %v4074
    %v4259 = vmul.f32 %v4258, 0.6931472
    %v4260 = vlog2.pop %v4077
    %v4261 = vmul.f32 %v4260, 0.6931472
    %v4262 = vlog2.pop %v4080
    %v4263 = vmul.f32 %v4262, 0.6931472
    %v4264 = vlog2.pop %v4083
    %v4265 = vmul.f32 %v4264, 0.6931472
    %v4266 = vlog2.pop %v4086
    %v4267 = vmul.f32 %v4266, 0.6931472
    %v4268 = vlog2.pop %v4089
    %v4269 = vmul.f32 %v4268, 0.6931472
    %v4270 = vlog2.pop %v4092
    %v4271 = vmul.f32 %v4270, 0.6931472
    %v4272 = vlog2.pop %v4095
    %v4273 = vmul.f32 %v4272, 0.6931472
    %v4274 = vlog2.pop %v4098
    %v4275 = vmul.f32 %v4274, 0.6931472
    %v4276 = vlog2.pop %v4101
    %v4277 = vmul.f32 %v4276, 0.6931472
    %v4278 = vlog2.pop %v4104
    %v4279 = vmul.f32 %v4278, 0.6931472
    %v4280 = vlog2.pop %v4107
    %v4281 = vmul.f32 %v4280, 0.6931472
    %v4282 = vlog2.pop %v4110
    %v4283 = vmul.f32 %v4282, 0.6931472
    %v4284 = vlog2.pop %v4113
    %v4285 = vmul.f32 %v4284, 0.6931472
    %v4286 = vlog2.pop %v4116
    %v4287 = vmul.f32 %v4286, 0.6931472
    %v4288 = vlog2.pop %v4119
    %v4289 = vmul.f32 %v4288, 0.6931472
    %v4290 = vlog2.pop %v4122
    %v4291 = vmul.f32 %v4290, 0.6931472
    %v4292 = vlog2.pop %v4125
    %v4293 = vmul.f32 %v4292, 0.6931472
    %v4294 = vlog2.pop %v4128
    %v4295 = vmul.f32 %v4294, 0.6931472
    %v4296 = vlog2.pop %v4131
    %v4297 = vmul.f32 %v4296, 0.6931472
    %v4298 = vlog2.pop %v4134
    %v4299 = vmul.f32 %v4298, 0.6931472
    %v4300 = vlog2.pop %v4137
    %v4301 = vmul.f32 %v4300, 0.6931472
    %v4302 = vlog2.pop %v4140
    %v4303 = vmul.f32 %v4302, 0.6931472
    %v4304 = vlog2.pop %v4143
    %v4305 = vmul.f32 %v4304, 0.6931472
    %v4306 = vlog2.pop %v4146
    %v4307 = vmul.f32 %v4306, 0.6931472
    %v4308 = vlog2.pop %v4149
    %v4309 = vmul.f32 %v4308, 0.6931472
    %v4310 = vlog2.pop %v4152
    %v4311 = vmul.f32 %v4310, 0.6931472
    %v4312 = vlog2.pop %v4155
    %v4313 = vmul.f32 %v4312, 0.6931472
    %v4314 = vlog2.pop %v4158
    %v4315 = vmul.f32 %v4314, 0.6931472
    %v4316 = vlog2.pop %v4161
    %v4317 = vmul.f32 %v4316, 0.6931472
    %v4318 = vlog2.pop %v4164
    %v4319 = vmul.f32 %v4318, 0.6931472
    %v4320 = vlog2.pop %v4167
    %v4321 = vmul.f32 %v4320, 0.6931472
    %v4322 = vlog2.pop %v4170
    %v4323 = vmul.f32 %v4322, 0.6931472
    %v4324 = vlog2.pop %v4173
    %v4325 = vmul.f32 %v4324, 0.6931472
    %v4326 = vlog2.pop %v4176
    %v4327 = vmul.f32 %v4326, 0.6931472
    %v4328 = vlog2.pop %v4179
    %v4329 = vmul.f32 %v4328, 0.6931472
    %v4330 = vadd.f32 %v3507, %v4181
    %v4331 = vadd.f32 %v3510, %v4183
    %v4332 = vadd.f32 %v3513, %v4185
    %v4333 = vadd.f32 %v3516, %v4187
    %v4334 = vadd.f32 %v3519, %v4189
    %v4335 = vadd.f32 %v3522, %v4191
    %v4336 = vadd.f32 %v3525, %v4193
    %v4337 = vadd.f32 %v3528, %v4195
    %v4338 = vadd.f32 %v3531, %v4197
    %v4339 = vadd.f32 %v3534, %v4199
    %v4340 = vadd.f32 %v3537, %v4201
    %v4341 = vadd.f32 %v3540, %v4203
    %v4342 = vadd.f32 %v3543, %v4205
    %v4343 = vadd.f32 %v3546, %v4207
    %v4344 = vadd.f32 %v3549, %v4209
    %v4345 = vadd.f32 %v3552, %v4211
    %v4346 = vadd.f32 %v3555, %v4213
    %v4347 = vadd.f32 %v3558, %v4215
    %v4348 = vadd.f32 %v3561, %v4217
    %v4349 = vadd.f32 %v3564, %v4219
    %v4350 = vadd.f32 %v3567, %v4221
    %v4351 = vadd.f32 %v3570, %v4223
    %v4352 = vadd.f32 %v3573, %v4225
    %v4353 = vadd.f32 %v3576, %v4227
    %v4354 = vadd.f32 %v3579, %v4229
    %v4355 = vadd.f32 %v3582, %v4231
    %v4356 = vadd.f32 %v3585, %v4233
    %v4357 = vadd.f32 %v3588, %v4235
    %v4358 = vadd.f32 %v3591, %v4237
    %v4359 = vadd.f32 %v3594, %v4239
    %v4360 = vadd.f32 %v3597, %v4241
    %v4361 = vadd.f32 %v3600, %v4243
    %v4362 = vadd.f32 %v3603, %v4245
    %v4363 = vadd.f32 %v3606, %v4247
    %v4364 = vadd.f32 %v3609, %v4249
    %v4365 = vadd.f32 %v3612, %v4251
    %v4366 = vadd.f32 %v3615, %v4253
    %v4367 = vadd.f32 %v3618, %v4255
    %v4368 = vadd.f32 %v3621, %v4257
    %v4369 = vadd.f32 %v3624, %v4259
    %v4370 = vadd.f32 %v3627, %v4261
    %v4371 = vadd.f32 %v3630, %v4263
    %v4372 = vadd.f32 %v3633, %v4265
    %v4373 = vadd.f32 %v3636, %v4267
    %v4374 = vadd.f32 %v3639, %v4269
    %v4375 = vadd.f32 %v3642, %v4271
    %v4376 = vadd.f32 %v3645, %v4273
    %v4377 = vadd.f32 %v3648, %v4275
    %v4378 = vadd.f32 %v3651, %v4277
    %v4379 = vadd.f32 %v3654, %v4279
    %v4380 = vadd.f32 %v3657, %v4281
    %v4381 = vadd.f32 %v3660, %v4283
    %v4382 = vadd.f32 %v3663, %v4285
    %v4383 = vadd.f32 %v3666, %v4287
    %v4384 = vadd.f32 %v3669, %v4289
    %v4385 = vadd.f32 %v3672, %v4291
    %v4386 = vadd.f32 %v3675, %v4293
    %v4387 = vadd.f32 %v3678, %v4295
    %v4388 = vadd.f32 %v3681, %v4297
    %v4389 = vadd.f32 %v3684, %v4299
    %v4390 = vadd.f32 %v3687, %v4301
    %v4391 = vadd.f32 %v3690, %v4303
    %v4392 = vadd.f32 %v3693, %v4305
    %v4393 = vadd.f32 %v3696, %v4307
    %v4394 = vadd.f32 %v3699, %v4309
    %v4395 = vadd.f32 %v3702, %v4311
    %v4396 = vadd.f32 %v3705, %v4313
    %v4397 = vadd.f32 %v3708, %v4315
    %v4398 = vadd.f32 %v3711, %v4317
    %v4399 = vadd.f32 %v3714, %v4319
    %v4400 = vadd.f32 %v3717, %v4321
    %v4401 = vadd.f32 %v3720, %v4323
    %v4402 = vadd.f32 %v3723, %v4325
    %v4403 = vadd.f32 %v3726, %v4327
    %v4404 = vadd.f32 %v3729, %v4329
    %v4405 = vsub.f32 %v4330, %v3429
    %v4406 = vsub.f32 %v4331, %v3430
    %v4407 = vsub.f32 %v4332, %v3431
    %v4408 = vsub.f32 %v4333, %v3432
    %v4409 = vsub.f32 %v4334, %v3433
    %v4410 = vsub.f32 %v4335, %v3434
    %v4411 = vsub.f32 %v4336, %v3435
    %v4412 = vsub.f32 %v4337, %v3436
    %v4413 = vsub.f32 %v4338, %v3437
    %v4414 = vsub.f32 %v4339, %v3438
    %v4415 = vsub.f32 %v4340, %v3439
    %v4416 = vsub.f32 %v4341, %v3440
    %v4417 = vsub.f32 %v4342, %v3441
    %v4418 = vsub.f32 %v4343, %v3442
    %v4419 = vsub.f32 %v4344, %v3443
    %v4420 = vsub.f32 %v4345, %v3444
    %v4421 = vsub.f32 %v4346, %v3445
    %v4422 = vsub.f32 %v4347, %v3446
    %v4423 = vsub.f32 %v4348, %v3447
    %v4424 = vsub.f32 %v4349, %v3448
    %v4425 = vsub.f32 %v4350, %v3449
    %v4426 = vsub.f32 %v4351, %v3450
    %v4427 = vsub.f32 %v4352, %v3451
    %v4428 = vsub.f32 %v4353, %v3452
    %v4429 = vsub.f32 %v4354, %v3453
    %v4430 = vsub.f32 %v4355, %v3454
    %v4431 = vsub.f32 %v4356, %v3455
    %v4432 = vsub.f32 %v4357, %v3456
    %v4433 = vsub.f32 %v4358, %v3457
    %v4434 = vsub.f32 %v4359, %v3458
    %v4435 = vsub.f32 %v4360, %v3459
    %v4436 = vsub.f32 %v4361, %v3460
    %v4437 = vsub.f32 %v4362, %v3461
    %v4438 = vsub.f32 %v4363, %v3462
    %v4439 = vsub.f32 %v4364, %v3463
    %v4440 = vsub.f32 %v4365, %v3464
    %v4441 = vsub.f32 %v4366, %v3465
    %v4442 = vsub.f32 %v4367, %v3466
    %v4443 = vsub.f32 %v4368, %v3467
    %v4444 = vsub.f32 %v4369, %v3468
    %v4445 = vsub.f32 %v4370, %v3469
    %v4446 = vsub.f32 %v4371, %v3470
    %v4447 = vsub.f32 %v4372, %v3471
    %v4448 = vsub.f32 %v4373, %v3472
    %v4449 = vsub.f32 %v4374, %v3473
    %v4450 = vsub.f32 %v4375, %v3474
    %v4451 = vsub.f32 %v4376, %v3475
    %v4452 = vsub.f32 %v4377, %v3476
    %v4453 = vsub.f32 %v4378, %v3477
    %v4454 = vsub.f32 %v4379, %v3478
    %v4455 = vsub.f32 %v4380, %v3479
    %v4456 = vsub.f32 %v4381, %v3480
    %v4457 = vsub.f32 %v4382, %v3481
    %v4458 = vsub.f32 %v4383, %v3482
    %v4459 = vsub.f32 %v4384, %v3483
    %v4460 = vsub.f32 %v4385, %v3484
    %v4461 = vsub.f32 %v4386, %v3485
    %v4462 = vsub.f32 %v4387, %v3486
    %v4463 = vsub.f32 %v4388, %v3487
    %v4464 = vsub.f32 %v4389, %v3488
    %v4465 = vsub.f32 %v4390, %v3489
    %v4466 = vsub.f32 %v4391, %v3490
    %v4467 = vsub.f32 %v4392, %v3491
    %v4468 = vsub.f32 %v4393, %v3492
    %v4469 = vsub.f32 %v4394, %v3493
    %v4470 = vsub.f32 %v4395, %v3494
    %v4471 = vsub.f32 %v4396, %v3495
    %v4472 = vsub.f32 %v4397, %v3496
    %v4473 = vsub.f32 %v4398, %v3497
    %v4474 = vsub.f32 %v4399, %v3498
    %v4475 = vsub.f32 %v4400, %v3499
    %v4476 = vsub.f32 %v4401, %v3500
    %v4477 = vsub.f32 %v4402, %v3501
    %v4478 = vsub.f32 %v4403, %v3502
    %v4479 = vsub.f32 %v4404, %v3503
    %v4480 = vsel %vm2594, %v4405, 0.0
    %v4481 = vsel %vm2595, %v4406, 0.0
    %v4482 = vsel %vm2596, %v4407, 0.0
    %v4483 = vsel %vm2597, %v4408, 0.0
    %v4484 = vsel %vm2598, %v4409, 0.0
    %v4485 = vsel %vm2599, %v4410, 0.0
    %v4486 = vsel %vm2600, %v4411, 0.0
    %v4487 = vsel %vm2601, %v4412, 0.0
    %v4488 = vsel %vm2602, %v4413, 0.0
    %v4489 = vsel %vm2603, %v4414, 0.0
    %v4490 = vsel %vm2604, %v4415, 0.0
    %v4491 = vsel %vm2605, %v4416, 0.0
    %v4492 = vsel %vm2606, %v4417, 0.0
    %v4493 = vsel %vm2607, %v4418, 0.0
    %v4494 = vsel %vm2608, %v4419, 0.0
    %v4495 = vsel %vm2609, %v4420, 0.0
    %v4496 = vsel %vm2610, %v4421, 0.0
    %v4497 = vsel %vm2611, %v4422, 0.0
    %v4498 = vsel %vm2612, %v4423, 0.0
    %v4499 = vsel %vm2613, %v4424, 0.0
    %v4500 = vsel %vm2614, %v4425, 0.0
    %v4501 = vsel %vm2615, %v4426, 0.0
    %v4502 = vsel %vm2616, %v4427, 0.0
    %v4503 = vsel %vm2617, %v4428, 0.0
    %v4504 = vsel %vm2618, %v4429, 0.0
    %v4505 = vsel %vm2619, %v4430, 0.0
    %v4506 = vsel %vm2620, %v4431, 0.0
    %v4507 = vsel %vm2621, %v4432, 0.0
    %v4508 = vsel %vm2622, %v4433, 0.0
    %v4509 = vsel %vm2623, %v4434, 0.0
    %v4510 = vsel %vm2624, %v4435, 0.0
    %v4511 = vsel %vm2625, %v4436, 0.0
    %v4512 = vsel %vm2626, %v4437, 0.0
    %v4513 = vsel %vm2627, %v4438, 0.0
    %v4514 = vsel %vm2628, %v4439, 0.0
    %v4515 = vsel %vm2629, %v4440, 0.0
    %v4516 = vsel %vm2630, %v4441, 0.0
    %v4517 = vsel %vm2631, %v4442, 0.0
    %v4518 = vsel %vm2632, %v4443, 0.0
    %v4519 = vsel %vm2633, %v4444, 0.0
    %v4520 = vsel %vm2634, %v4445, 0.0
    %v4521 = vsel %vm2635, %v4446, 0.0
    %v4522 = vsel %vm2636, %v4447, 0.0
    %v4523 = vsel %vm2637, %v4448, 0.0
    %v4524 = vsel %vm2638, %v4449, 0.0
    %v4525 = vsel %vm2639, %v4450, 0.0
    %v4526 = vsel %vm2640, %v4451, 0.0
    %v4527 = vsel %vm2641, %v4452, 0.0
    %v4528 = vsel %vm2642, %v4453, 0.0
    %v4529 = vsel %vm2643, %v4454, 0.0
    %v4530 = vsel %vm2644, %v4455, 0.0
    %v4531 = vsel %vm2645, %v4456, 0.0
    %v4532 = vsel %vm2646, %v4457, 0.0
    %v4533 = vsel %vm2647, %v4458, 0.0
    %v4534 = vsel %vm2648, %v4459, 0.0
    %v4535 = vsel %vm2649, %v4460, 0.0
    %v4536 = vsel %vm2650, %v4461, 0.0
    %v4537 = vsel %vm2651, %v4462, 0.0
    %v4538 = vsel %vm2652, %v4463, 0.0
    %v4539 = vsel %vm2653, %v4464, 0.0
    %v4540 = vsel %vm2654, %v4465, 0.0
    %v4541 = vsel %vm2655, %v4466, 0.0
    %v4542 = vsel %vm2656, %v4467, 0.0
    %v4543 = vsel %vm2657, %v4468, 0.0
    %v4544 = vsel %vm2658, %v4469, 0.0
    %v4545 = vsel %vm2659, %v4470, 0.0
    %v4546 = vsel %vm2660, %v4471, 0.0
    %v4547 = vsel %vm2661, %v4472, 0.0
    %v4548 = vsel %vm2662, %v4473, 0.0
    %v4549 = vsel %vm2663, %v4474, 0.0
    %v4550 = vsel %vm2664, %v4475, 0.0
    %v4551 = vsel %vm2665, %v4476, 0.0
    %v4552 = vsel %vm2666, %v4477, 0.0
    %v4553 = vsel %vm2667, %v4478, 0.0
    %v4554 = vsel %vm2668, %v4479, 0.0
    %v4555 = vld [vmem:[#allocation3] sm:$0x1]
    %vm4556 = vcmask 7168
    %v4557 = vsel %vm4556, %v4480, 0.0
    %v4558 = vsel %vm4556, %v4481, 0.0
    %v4559 = vadd.f32 %v4557, %v4558
    %v4560 = vsel %vm4556, %v4482, 0.0
    %v4561 = vadd.f32 %v4559, %v4560
    %v4562 = vsel %vm4556, %v4483, 0.0
    %v4563 = vadd.f32 %v4561, %v4562
    %v4564 = vsel %vm4556, %v4484, 0.0
    %v4565 = vadd.f32 %v4563, %v4564
    %v4566 = vsel %vm4556, %v4485, 0.0
    %v4567 = vadd.f32 %v4565, %v4566
    %v4568 = vsel %vm4556, %v4486, 0.0
    %v4569 = vadd.f32 %v4567, %v4568
    %v4570 = vsel %vm4556, %v4487, 0.0
    %v4571 = vadd.f32 %v4569, %v4570
    %v4572 = vsel %vm4556, %v4488, 0.0
    %v4573 = vadd.f32 %v4571, %v4572
    %v4574 = vsel %vm4556, %v4489, 0.0
    %v4575 = vadd.f32 %v4573, %v4574
    %v4576 = vsel %vm4556, %v4490, 0.0
    %v4577 = vadd.f32 %v4575, %v4576
    %v4578 = vsel %vm4556, %v4491, 0.0
    %v4579 = vadd.f32 %v4577, %v4578
    %v4580 = vsel %vm4556, %v4492, 0.0
    %v4581 = vadd.f32 %v4579, %v4580
    %v4582 = vsel %vm4556, %v4493, 0.0
    %v4583 = vadd.f32 %v4581, %v4582
    %v4584 = vsel %vm4556, %v4494, 0.0
    %v4585 = vadd.f32 %v4583, %v4584
    %v4586 = vsel %vm4556, %v4495, 0.0
    %v4587 = vadd.f32 %v4585, %v4586
    %v4588 = vsel %vm4556, %v4496, 0.0
    %v4589 = vadd.f32 %v4587, %v4588
    %v4590 = vsel %vm4556, %v4497, 0.0
    %v4591 = vadd.f32 %v4589, %v4590
    %v4592 = vsel %vm4556, %v4498, 0.0
    %v4593 = vadd.f32 %v4591, %v4592
    %v4594 = vsel %vm4556, %v4499, 0.0
    %v4595 = vadd.f32 %v4593, %v4594
    %v4596 = vsel %vm4556, %v4500, 0.0
    %v4597 = vadd.f32 %v4595, %v4596
    %v4598 = vsel %vm4556, %v4501, 0.0
    %v4599 = vadd.f32 %v4597, %v4598
    %v4600 = vsel %vm4556, %v4502, 0.0
    %v4601 = vadd.f32 %v4599, %v4600
    %v4602 = vsel %vm4556, %v4503, 0.0
    %v4603 = vadd.f32 %v4601, %v4602
    %v4604 = vsel %vm4556, %v4504, 0.0
    %v4605 = vadd.f32 %v4603, %v4604
    %v4606 = vsel %vm4556, %v4505, 0.0
    %v4607 = vadd.f32 %v4605, %v4606
    %v4608 = vsel %vm4556, %v4506, 0.0
    %v4609 = vadd.f32 %v4607, %v4608
    %v4610 = vsel %vm4556, %v4507, 0.0
    %v4611 = vadd.f32 %v4609, %v4610
    %v4612 = vsel %vm4556, %v4508, 0.0
    %v4613 = vadd.f32 %v4611, %v4612
    %v4614 = vsel %vm4556, %v4509, 0.0
    %v4615 = vadd.f32 %v4613, %v4614
    %v4616 = vsel %vm4556, %v4510, 0.0
    %v4617 = vadd.f32 %v4615, %v4616
    %v4618 = vsel %vm4556, %v4511, 0.0
    %v4619 = vadd.f32 %v4617, %v4618
    %v4620 = vsel %vm4556, %v4512, 0.0
    %v4621 = vadd.f32 %v4619, %v4620
    %v4622 = vsel %vm4556, %v4513, 0.0
    %v4623 = vadd.f32 %v4621, %v4622
    %v4624 = vsel %vm4556, %v4514, 0.0
    %v4625 = vadd.f32 %v4623, %v4624
    %v4626 = vsel %vm4556, %v4515, 0.0
    %v4627 = vadd.f32 %v4625, %v4626
    %v4628 = vsel %vm4556, %v4516, 0.0
    %v4629 = vadd.f32 %v4627, %v4628
    %v4630 = vsel %vm4556, %v4517, 0.0
    %v4631 = vadd.f32 %v4629, %v4630
    %v4632 = vsel %vm4556, %v4518, 0.0
    %v4633 = vadd.f32 %v4631, %v4632
    %v4634 = vsel %vm4556, %v4519, 0.0
    %v4635 = vadd.f32 %v4633, %v4634
    %v4636 = vsel %vm4556, %v4520, 0.0
    %v4637 = vadd.f32 %v4635, %v4636
    %v4638 = vsel %vm4556, %v4521, 0.0
    %v4639 = vadd.f32 %v4637, %v4638
    %v4640 = vsel %vm4556, %v4522, 0.0
    %v4641 = vadd.f32 %v4639, %v4640
    %v4642 = vsel %vm4556, %v4523, 0.0
    %v4643 = vadd.f32 %v4641, %v4642
    %v4644 = vsel %vm4556, %v4524, 0.0
    %v4645 = vadd.f32 %v4643, %v4644
    %v4646 = vsel %vm4556, %v4525, 0.0
    %v4647 = vadd.f32 %v4645, %v4646
    %v4648 = vsel %vm4556, %v4526, 0.0
    %v4649 = vadd.f32 %v4647, %v4648
    %v4650 = vsel %vm4556, %v4527, 0.0
    %v4651 = vadd.f32 %v4649, %v4650
    %v4652 = vsel %vm4556, %v4528, 0.0
    %v4653 = vadd.f32 %v4651, %v4652
    %v4654 = vsel %vm4556, %v4529, 0.0
    %v4655 = vadd.f32 %v4653, %v4654
    %v4656 = vsel %vm4556, %v4530, 0.0
    %v4657 = vadd.f32 %v4655, %v4656
    %v4658 = vsel %vm4556, %v4531, 0.0
    %v4659 = vadd.f32 %v4657, %v4658
    %v4660 = vsel %vm4556, %v4532, 0.0
    %v4661 = vadd.f32 %v4659, %v4660
    %v4662 = vsel %vm4556, %v4533, 0.0
    %v4663 = vadd.f32 %v4661, %v4662
    %v4664 = vsel %vm4556, %v4534, 0.0
    %v4665 = vadd.f32 %v4663, %v4664
    %v4666 = vsel %vm4556, %v4535, 0.0
    %v4667 = vadd.f32 %v4665, %v4666
    %v4668 = vsel %vm4556, %v4536, 0.0
    %v4669 = vadd.f32 %v4667, %v4668
    %v4670 = vsel %vm4556, %v4537, 0.0
    %v4671 = vadd.f32 %v4669, %v4670
    %v4672 = vsel %vm4556, %v4538, 0.0
    %v4673 = vadd.f32 %v4671, %v4672
    %v4674 = vsel %vm4556, %v4539, 0.0
    %v4675 = vadd.f32 %v4673, %v4674
    %v4676 = vsel %vm4556, %v4540, 0.0
    %v4677 = vadd.f32 %v4675, %v4676
    %v4678 = vsel %vm4556, %v4541, 0.0
    %v4679 = vadd.f32 %v4677, %v4678
    %v4680 = vsel %vm4556, %v4542, 0.0
    %v4681 = vadd.f32 %v4679, %v4680
    %v4682 = vsel %vm4556, %v4543, 0.0
    %v4683 = vadd.f32 %v4681, %v4682
    %v4684 = vsel %vm4556, %v4544, 0.0
    %v4685 = vadd.f32 %v4683, %v4684
    %v4686 = vsel %vm4556, %v4545, 0.0
    %v4687 = vadd.f32 %v4685, %v4686
    %v4688 = vsel %vm4556, %v4546, 0.0
    %v4689 = vadd.f32 %v4687, %v4688
    %v4690 = vsel %vm4556, %v4547, 0.0
    %v4691 = vadd.f32 %v4689, %v4690
    %v4692 = vsel %vm4556, %v4548, 0.0
    %v4693 = vadd.f32 %v4691, %v4692
    %v4694 = vsel %vm4556, %v4549, 0.0
    %v4695 = vadd.f32 %v4693, %v4694
    %v4696 = vsel %vm4556, %v4550, 0.0
    %v4697 = vadd.f32 %v4695, %v4696
    %v4698 = vsel %vm4556, %v4551, 0.0
    %v4699 = vadd.f32 %v4697, %v4698
    %v4700 = vsel %vm4556, %v4552, 0.0
    %v4701 = vadd.f32 %v4699, %v4700
    %v4702 = vsel %vm4556, %v4553, 0.0
    %v4703 = vadd.f32 %v4701, %v4702
    %v4704 = vsel %vm4556, %v4554, 0.0
    %v4705 = vadd.f32 %v4703, %v4704
    %v4706 = vrot.slane %v4705, 4
    %v4707 = vadd.f32 %v4705, %v4706
    %v4708 = vrot.slane %v4707, 2
    %v4709 = vadd.f32 %v4707, %v4708
    %v4710 = vrot.slane %v4709, 1
    %v4711 = vadd.f32 %v4709, %v4710
    %v4712 = vadd.f32 %v4555, %v4711
    %vm4713 = vcmask 0
    %4714 = vst.msk [vmem:[#allocation3] sm:$0x1] %vm4713, %v4712
    %v4715 = vld [vmem:[%s198] sm:$0xff]
    %v4716 = vld [vmem:[%s198 + $0x8] sm:$0xff]
    %v4717 = vld [vmem:[%s198 + $0x10] sm:$0xff]
    %v4718 = vld [vmem:[%s198 + $0x18] sm:$0xff]
    %v4719 = vld [vmem:[%s198 + $0x20] sm:$0xff]
    %v4720 = vld [vmem:[%s198 + $0x28] sm:$0xff]
    %v4721 = vld [vmem:[%s198 + $0x30] sm:$0xff]
    %v4722 = vld [vmem:[%s198 + $0x38] sm:$0xff]
    %v4723 = vld [vmem:[%s198 + $0x40] sm:$0xff]
    %v4724 = vld [vmem:[%s198 + $0x48] sm:$0xff]
    %v4725 = vld [vmem:[%s198 + $0x50] sm:$0xff]
    %v4726 = vld [vmem:[%s198 + $0x58] sm:$0xff]
    %v4727 = vld [vmem:[%s198 + $0x60] sm:$0xff]
    %v4728 = vld [vmem:[%s198 + $0x68] sm:$0xff]
    %v4729 = vld [vmem:[%s198 + $0x70] sm:$0xff]
    %v4730 = vld [vmem:[%s198 + $0x78] sm:$0xff]
    %v4731 = vld [vmem:[%s198 + $0x80] sm:$0xff]
    %v4732 = vld [vmem:[%s198 + $0x88] sm:$0xff]
    %v4733 = vld [vmem:[%s198 + $0x90] sm:$0xff]
    %v4734 = vld [vmem:[%s198 + $0x98] sm:$0xff]
    %v4735 = vld [vmem:[%s198 + $0xa0] sm:$0xff]
    %v4736 = vld [vmem:[%s198 + $0xa8] sm:$0xff]
    %v4737 = vld [vmem:[%s198 + $0xb0] sm:$0xff]
    %v4738 = vld [vmem:[%s198 + $0xb8] sm:$0xff]
    %v4739 = vld [vmem:[%s198 + $0xc0] sm:$0xff]
    %v4740 = vld [vmem:[%s198 + $0xc8] sm:$0xff]
    %v4741 = vld [vmem:[%s198 + $0xd0] sm:$0xff]
    %v4742 = vld [vmem:[%s198 + $0xd8] sm:$0xff]
    %v4743 = vld [vmem:[%s198 + $0xe0] sm:$0xff]
    %v4744 = vld [vmem:[%s198 + $0xe8] sm:$0xff]
    %v4745 = vld [vmem:[%s198 + $0xf0] sm:$0xff]
    %v4746 = vld [vmem:[%s198 + $0xf8] sm:$0xff]
    %v4747 = vld [vmem:[%s198 + $0x100] sm:$0xff]
    %v4748 = vld [vmem:[%s198 + $0x108] sm:$0xff]
    %v4749 = vld [vmem:[%s198 + $0x110] sm:$0xff]
    %v4750 = vld [vmem:[%s198 + $0x118] sm:$0xff]
    %v4751 = vld [vmem:[%s198 + $0x120] sm:$0xff]
    %v4752 = vld [vmem:[%s198 + $0x128] sm:$0xff]
    %v4753 = vld [vmem:[%s198 + $0x130] sm:$0xff]
    %v4754 = vld [vmem:[%s198 + $0x138] sm:$0xff]
    %v4755 = vld [vmem:[%s198 + $0x140] sm:$0xff]
    %v4756 = vld [vmem:[%s198 + $0x148] sm:$0xff]
    %v4757 = vld [vmem:[%s198 + $0x150] sm:$0xff]
    %v4758 = vld [vmem:[%s198 + $0x158] sm:$0xff]
    %v4759 = vld [vmem:[%s198 + $0x160] sm:$0xff]
    %v4760 = vld [vmem:[%s198 + $0x168] sm:$0xff]
    %v4761 = vld [vmem:[%s198 + $0x170] sm:$0xff]
    %v4762 = vld [vmem:[%s198 + $0x178] sm:$0xff]
    %v4763 = vld [vmem:[%s198 + $0x180] sm:$0xff]
    %v4764 = vld [vmem:[%s198 + $0x188] sm:$0xff]
    %v4765 = vld [vmem:[%s198 + $0x190] sm:$0xff]
    %v4766 = vld [vmem:[%s198 + $0x198] sm:$0xff]
    %v4767 = vld [vmem:[%s198 + $0x1a0] sm:$0xff]
    %v4768 = vld [vmem:[%s198 + $0x1a8] sm:$0xff]
    %v4769 = vld [vmem:[%s198 + $0x1b0] sm:$0xff]
    %v4770 = vld [vmem:[%s198 + $0x1b8] sm:$0xff]
    %v4771 = vld [vmem:[%s198 + $0x1c0] sm:$0xff]
    %v4772 = vld [vmem:[%s198 + $0x1c8] sm:$0xff]
    %v4773 = vld [vmem:[%s198 + $0x1d0] sm:$0xff]
    %v4774 = vld [vmem:[%s198 + $0x1d8] sm:$0xff]
    %v4775 = vld [vmem:[%s198 + $0x1e0] sm:$0xff]
    %v4776 = vld [vmem:[%s198 + $0x1e8] sm:$0xff]
    %v4777 = vld [vmem:[%s198 + $0x1f0] sm:$0xff]
    %v4778 = vld [vmem:[%s198 + $0x1f8] sm:$0xff]
    %v4779 = vld [vmem:[%s198 + $0x200] sm:$0xff]
    %v4780 = vld [vmem:[%s198 + $0x208] sm:$0xff]
    %v4781 = vld [vmem:[%s198 + $0x210] sm:$0xff]
    %v4782 = vld [vmem:[%s198 + $0x218] sm:$0xff]
    %v4783 = vld [vmem:[%s198 + $0x220] sm:$0xff]
    %v4784 = vld [vmem:[%s198 + $0x228] sm:$0xff]
    %v4785 = vld [vmem:[%s198 + $0x230] sm:$0xff]
    %v4786 = vld [vmem:[%s198 + $0x238] sm:$0xff]
    %v4787 = vld [vmem:[%s198 + $0x240] sm:$0xff]
    %v4788 = vld [vmem:[%s198 + $0x248] sm:$0xff]
    %v4789 = vld [vmem:[%s198 + $0x250] sm:$0xff]
    %v4790 = vld [vmem:[%s210] sm:$0xff]
    %v4791 = vld [vmem:[%s210 + $0x8] sm:$0xff]
    %v4792 = vld [vmem:[%s210 + $0x10] sm:$0xff]
    %v4793 = vld [vmem:[%s210 + $0x18] sm:$0xff]
    %v4794 = vld [vmem:[%s210 + $0x20] sm:$0xff]
    %v4795 = vld [vmem:[%s210 + $0x28] sm:$0xff]
    %v4796 = vld [vmem:[%s210 + $0x30] sm:$0xff]
    %v4797 = vld [vmem:[%s210 + $0x38] sm:$0xff]
    %v4798 = vld [vmem:[%s210 + $0x40] sm:$0xff]
    %v4799 = vld [vmem:[%s210 + $0x48] sm:$0xff]
    %v4800 = vld [vmem:[%s210 + $0x50] sm:$0xff]
    %v4801 = vld [vmem:[%s210 + $0x58] sm:$0xff]
    %v4802 = vld [vmem:[%s210 + $0x60] sm:$0xff]
    %v4803 = vld [vmem:[%s210 + $0x68] sm:$0xff]
    %v4804 = vld [vmem:[%s210 + $0x70] sm:$0xff]
    %v4805 = vld [vmem:[%s210 + $0x78] sm:$0xff]
    %v4806 = vld [vmem:[%s210 + $0x80] sm:$0xff]
    %v4807 = vld [vmem:[%s210 + $0x88] sm:$0xff]
    %v4808 = vld [vmem:[%s210 + $0x90] sm:$0xff]
    %v4809 = vld [vmem:[%s210 + $0x98] sm:$0xff]
    %v4810 = vld [vmem:[%s210 + $0xa0] sm:$0xff]
    %v4811 = vld [vmem:[%s210 + $0xa8] sm:$0xff]
    %v4812 = vld [vmem:[%s210 + $0xb0] sm:$0xff]
    %v4813 = vld [vmem:[%s210 + $0xb8] sm:$0xff]
    %v4814 = vld [vmem:[%s210 + $0xc0] sm:$0xff]
    %v4815 = vld [vmem:[%s210 + $0xc8] sm:$0xff]
    %v4816 = vld [vmem:[%s210 + $0xd0] sm:$0xff]
    %v4817 = vld [vmem:[%s210 + $0xd8] sm:$0xff]
    %v4818 = vld [vmem:[%s210 + $0xe0] sm:$0xff]
    %v4819 = vld [vmem:[%s210 + $0xe8] sm:$0xff]
    %v4820 = vld [vmem:[%s210 + $0xf0] sm:$0xff]
    %v4821 = vld [vmem:[%s210 + $0xf8] sm:$0xff]
    %v4822 = vld [vmem:[%s210 + $0x100] sm:$0xff]
    %v4823 = vld [vmem:[%s210 + $0x108] sm:$0xff]
    %v4824 = vld [vmem:[%s210 + $0x110] sm:$0xff]
    %v4825 = vld [vmem:[%s210 + $0x118] sm:$0xff]
    %v4826 = vld [vmem:[%s210 + $0x120] sm:$0xff]
    %v4827 = vld [vmem:[%s210 + $0x128] sm:$0xff]
    %v4828 = vld [vmem:[%s210 + $0x130] sm:$0xff]
    %v4829 = vld [vmem:[%s210 + $0x138] sm:$0xff]
    %v4830 = vld [vmem:[%s210 + $0x140] sm:$0xff]
    %v4831 = vld [vmem:[%s210 + $0x148] sm:$0xff]
    %v4832 = vld [vmem:[%s210 + $0x150] sm:$0xff]
    %v4833 = vld [vmem:[%s210 + $0x158] sm:$0xff]
    %v4834 = vld [vmem:[%s210 + $0x160] sm:$0xff]
    %v4835 = vld [vmem:[%s210 + $0x168] sm:$0xff]
    %v4836 = vld [vmem:[%s210 + $0x170] sm:$0xff]
    %v4837 = vld [vmem:[%s210 + $0x178] sm:$0xff]
    %v4838 = vld [vmem:[%s210 + $0x180] sm:$0xff]
    %v4839 = vld [vmem:[%s210 + $0x188] sm:$0xff]
    %v4840 = vld [vmem:[%s210 + $0x190] sm:$0xff]
    %v4841 = vld [vmem:[%s210 + $0x198] sm:$0xff]
    %v4842 = vld [vmem:[%s210 + $0x1a0] sm:$0xff]
    %v4843 = vld [vmem:[%s210 + $0x1a8] sm:$0xff]
    %v4844 = vld [vmem:[%s210 + $0x1b0] sm:$0xff]
    %v4845 = vld [vmem:[%s210 + $0x1b8] sm:$0xff]
    %v4846 = vld [vmem:[%s210 + $0x1c0] sm:$0xff]
    %v4847 = vld [vmem:[%s210 + $0x1c8] sm:$0xff]
    %v4848 = vld [vmem:[%s210 + $0x1d0] sm:$0xff]
    %v4849 = vld [vmem:[%s210 + $0x1d8] sm:$0xff]
    %v4850 = vld [vmem:[%s210 + $0x1e0] sm:$0xff]
    %v4851 = vld [vmem:[%s210 + $0x1e8] sm:$0xff]
    %v4852 = vld [vmem:[%s210 + $0x1f0] sm:$0xff]
    %v4853 = vld [vmem:[%s210 + $0x1f8] sm:$0xff]
    %v4854 = vld [vmem:[%s210 + $0x200] sm:$0xff]
    %v4855 = vld [vmem:[%s210 + $0x208] sm:$0xff]
    %v4856 = vld [vmem:[%s210 + $0x210] sm:$0xff]
    %v4857 = vld [vmem:[%s210 + $0x218] sm:$0xff]
    %v4858 = vld [vmem:[%s210 + $0x220] sm:$0xff]
    %v4859 = vld [vmem:[%s210 + $0x228] sm:$0xff]
    %v4860 = vld [vmem:[%s210 + $0x230] sm:$0xff]
    %v4861 = vld [vmem:[%s210 + $0x238] sm:$0xff]
    %v4862 = vld [vmem:[%s210 + $0x240] sm:$0xff]
    %v4863 = vld [vmem:[%s210 + $0x248] sm:$0xff]
    %v4864 = vld [vmem:[%s210 + $0x250] sm:$0xff]
    %v4865 = vsub.f32 %v4715, %v4790
    %v4866 = vsub.f32 %v4716, %v4791
    %v4867 = vsub.f32 %v4717, %v4792
    %v4868 = vsub.f32 %v4718, %v4793
    %v4869 = vsub.f32 %v4719, %v4794
    %v4870 = vsub.f32 %v4720, %v4795
    %v4871 = vsub.f32 %v4721, %v4796
    %v4872 = vsub.f32 %v4722, %v4797
    %v4873 = vsub.f32 %v4723, %v4798
    %v4874 = vsub.f32 %v4724, %v4799
    %v4875 = vsub.f32 %v4725, %v4800
    %v4876 = vsub.f32 %v4726, %v4801
    %v4877 = vsub.f32 %v4727, %v4802
    %v4878 = vsub.f32 %v4728, %v4803
    %v4879 = vsub.f32 %v4729, %v4804
    %v4880 = vsub.f32 %v4730, %v4805
    %v4881 = vsub.f32 %v4731, %v4806
    %v4882 = vsub.f32 %v4732, %v4807
    %v4883 = vsub.f32 %v4733, %v4808
    %v4884 = vsub.f32 %v4734, %v4809
    %v4885 = vsub.f32 %v4735, %v4810
    %v4886 = vsub.f32 %v4736, %v4811
    %v4887 = vsub.f32 %v4737, %v4812
    %v4888 = vsub.f32 %v4738, %v4813
    %v4889 = vsub.f32 %v4739, %v4814
    %v4890 = vsub.f32 %v4740, %v4815
    %v4891 = vsub.f32 %v4741, %v4816
    %v4892 = vsub.f32 %v4742, %v4817
    %v4893 = vsub.f32 %v4743, %v4818
    %v4894 = vsub.f32 %v4744, %v4819
    %v4895 = vsub.f32 %v4745, %v4820
    %v4896 = vsub.f32 %v4746, %v4821
    %v4897 = vsub.f32 %v4747, %v4822
    %v4898 = vsub.f32 %v4748, %v4823
    %v4899 = vsub.f32 %v4749, %v4824
    %v4900 = vsub.f32 %v4750, %v4825
    %v4901 = vsub.f32 %v4751, %v4826
    %v4902 = vsub.f32 %v4752, %v4827
    %v4903 = vsub.f32 %v4753, %v4828
    %v4904 = vsub.f32 %v4754, %v4829
    %v4905 = vsub.f32 %v4755, %v4830
    %v4906 = vsub.f32 %v4756, %v4831
    %v4907 = vsub.f32 %v4757, %v4832
    %v4908 = vsub.f32 %v4758, %v4833
    %v4909 = vsub.f32 %v4759, %v4834
    %v4910 = vsub.f32 %v4760, %v4835
    %v4911 = vsub.f32 %v4761, %v4836
    %v4912 = vsub.f32 %v4762, %v4837
    %v4913 = vsub.f32 %v4763, %v4838
    %v4914 = vsub.f32 %v4764, %v4839
    %v4915 = vsub.f32 %v4765, %v4840
    %v4916 = vsub.f32 %v4766, %v4841
    %v4917 = vsub.f32 %v4767, %v4842
    %v4918 = vsub.f32 %v4768, %v4843
    %v4919 = vsub.f32 %v4769, %v4844
    %v4920 = vsub.f32 %v4770, %v4845
    %v4921 = vsub.f32 %v4771, %v4846
    %v4922 = vsub.f32 %v4772, %v4847
    %v4923 = vsub.f32 %v4773, %v4848
    %v4924 = vsub.f32 %v4774, %v4849
    %v4925 = vsub.f32 %v4775, %v4850
    %v4926 = vsub.f32 %v4776, %v4851
    %v4927 = vsub.f32 %v4777, %v4852
    %v4928 = vsub.f32 %v4778, %v4853
    %v4929 = vsub.f32 %v4779, %v4854
    %v4930 = vsub.f32 %v4780, %v4855
    %v4931 = vsub.f32 %v4781, %v4856
    %v4932 = vsub.f32 %v4782, %v4857
    %v4933 = vsub.f32 %v4783, %v4858
    %v4934 = vsub.f32 %v4784, %v4859
    %v4935 = vsub.f32 %v4785, %v4860
    %v4936 = vsub.f32 %v4786, %v4861
    %v4937 = vsub.f32 %v4787, %v4862
    %v4938 = vsub.f32 %v4788, %v4863
    %v4939 = vsub.f32 %v4789, %v4864
    %v4940 = vand.u32 2147483647, %v4865
    %v4941 = vand.u32 2147483647, %v4866
    %v4942 = vand.u32 2147483647, %v4867
    %v4943 = vand.u32 2147483647, %v4868
    %v4944 = vand.u32 2147483647, %v4869
    %v4945 = vand.u32 2147483647, %v4870
    %v4946 = vand.u32 2147483647, %v4871
    %v4947 = vand.u32 2147483647, %v4872
    %v4948 = vand.u32 2147483647, %v4873
    %v4949 = vand.u32 2147483647, %v4874
    %v4950 = vand.u32 2147483647, %v4875
    %v4951 = vand.u32 2147483647, %v4876
    %v4952 = vand.u32 2147483647, %v4877
    %v4953 = vand.u32 2147483647, %v4878
    %v4954 = vand.u32 2147483647, %v4879
    %v4955 = vand.u32 2147483647, %v4880
    %v4956 = vand.u32 2147483647, %v4881
    %v4957 = vand.u32 2147483647, %v4882
    %v4958 = vand.u32 2147483647, %v4883
    %v4959 = vand.u32 2147483647, %v4884
    %v4960 = vand.u32 2147483647, %v4885
    %v4961 = vand.u32 2147483647, %v4886
    %v4962 = vand.u32 2147483647, %v4887
    %v4963 = vand.u32 2147483647, %v4888
    %v4964 = vand.u32 2147483647, %v4889
    %v4965 = vand.u32 2147483647, %v4890
    %v4966 = vand.u32 2147483647, %v4891
    %v4967 = vand.u32 2147483647, %v4892
    %v4968 = vand.u32 2147483647, %v4893
    %v4969 = vand.u32 2147483647, %v4894
    %v4970 = vand.u32 2147483647, %v4895
    %v4971 = vand.u32 2147483647, %v4896
    %v4972 = vand.u32 2147483647, %v4897
    %v4973 = vand.u32 2147483647, %v4898
    %v4974 = vand.u32 2147483647, %v4899
    %v4975 = vand.u32 2147483647, %v4900
    %v4976 = vand.u32 2147483647, %v4901
    %v4977 = vand.u32 2147483647, %v4902
    %v4978 = vand.u32 2147483647, %v4903
    %v4979 = vand.u32 2147483647, %v4904
    %v4980 = vand.u32 2147483647, %v4905
    %v4981 = vand.u32 2147483647, %v4906
    %v4982 = vand.u32 2147483647, %v4907
    %v4983 = vand.u32 2147483647, %v4908
    %v4984 = vand.u32 2147483647, %v4909
    %v4985 = vand.u32 2147483647, %v4910
    %v4986 = vand.u32 2147483647, %v4911
    %v4987 = vand.u32 2147483647, %v4912
    %v4988 = vand.u32 2147483647, %v4913
    %v4989 = vand.u32 2147483647, %v4914
    %v4990 = vand.u32 2147483647, %v4915
    %v4991 = vand.u32 2147483647, %v4916
    %v4992 = vand.u32 2147483647, %v4917
    %v4993 = vand.u32 2147483647, %v4918
    %v4994 = vand.u32 2147483647, %v4919
    %v4995 = vand.u32 2147483647, %v4920
    %v4996 = vand.u32 2147483647, %v4921
    %v4997 = vand.u32 2147483647, %v4922
    %v4998 = vand.u32 2147483647, %v4923
    %v4999 = vand.u32 2147483647, %v4924
    %v5000 = vand.u32 2147483647, %v4925
    %v5001 = vand.u32 2147483647, %v4926
    %v5002 = vand.u32 2147483647, %v4927
    %v5003 = vand.u32 2147483647, %v4928
    %v5004 = vand.u32 2147483647, %v4929
    %v5005 = vand.u32 2147483647, %v4930
    %v5006 = vand.u32 2147483647, %v4931
    %v5007 = vand.u32 2147483647, %v4932
    %v5008 = vand.u32 2147483647, %v4933
    %v5009 = vand.u32 2147483647, %v4934
    %v5010 = vand.u32 2147483647, %v4935
    %v5011 = vand.u32 2147483647, %v4936
    %v5012 = vand.u32 2147483647, %v4937
    %v5013 = vand.u32 2147483647, %v4938
    %v5014 = vand.u32 2147483647, %v4939
    %v5015 = vsel %vm3044, %v4940, 0.0
    %v5016 = vsel %vm3045, %v4941, 0.0
    %v5017 = vsel %vm3046, %v4942, 0.0
    %v5018 = vsel %vm3047, %v4943, 0.0
    %v5019 = vsel %vm3048, %v4944, 0.0
    %v5020 = vsel %vm3049, %v4945, 0.0
    %v5021 = vsel %vm3050, %v4946, 0.0
    %v5022 = vsel %vm3051, %v4947, 0.0
    %v5023 = vsel %vm3052, %v4948, 0.0
    %v5024 = vsel %vm3053, %v4949, 0.0
    %v5025 = vsel %vm3054, %v4950, 0.0
    %v5026 = vsel %vm3055, %v4951, 0.0
    %v5027 = vsel %vm3056, %v4952, 0.0
    %v5028 = vsel %vm3057, %v4953, 0.0
    %v5029 = vsel %vm3058, %v4954, 0.0
    %v5030 = vsel %vm3059, %v4955, 0.0
    %v5031 = vsel %vm3060, %v4956, 0.0
    %v5032 = vsel %vm3061, %v4957, 0.0
    %v5033 = vsel %vm3062, %v4958, 0.0
    %v5034 = vsel %vm3063, %v4959, 0.0
    %v5035 = vsel %vm3064, %v4960, 0.0
    %v5036 = vsel %vm3065, %v4961, 0.0
    %v5037 = vsel %vm3066, %v4962, 0.0
    %v5038 = vsel %vm3067, %v4963, 0.0
    %v5039 = vsel %vm3068, %v4964, 0.0
    %v5040 = vsel %vm3069, %v4965, 0.0
    %v5041 = vsel %vm3070, %v4966, 0.0
    %v5042 = vsel %vm3071, %v4967, 0.0
    %v5043 = vsel %vm3072, %v4968, 0.0
    %v5044 = vsel %vm3073, %v4969, 0.0
    %v5045 = vsel %vm3074, %v4970, 0.0
    %v5046 = vsel %vm3075, %v4971, 0.0
    %v5047 = vsel %vm3076, %v4972, 0.0
    %v5048 = vsel %vm3077, %v4973, 0.0
    %v5049 = vsel %vm3078, %v4974, 0.0
    %v5050 = vsel %vm3079, %v4975, 0.0
    %v5051 = vsel %vm3080, %v4976, 0.0
    %v5052 = vsel %vm3081, %v4977, 0.0
    %v5053 = vsel %vm3082, %v4978, 0.0
    %v5054 = vsel %vm3083, %v4979, 0.0
    %v5055 = vsel %vm3084, %v4980, 0.0
    %v5056 = vsel %vm3085, %v4981, 0.0
    %v5057 = vsel %vm3086, %v4982, 0.0
    %v5058 = vsel %vm3087, %v4983, 0.0
    %v5059 = vsel %vm3088, %v4984, 0.0
    %v5060 = vsel %vm3089, %v4985, 0.0
    %v5061 = vsel %vm3090, %v4986, 0.0
    %v5062 = vsel %vm3091, %v4987, 0.0
    %v5063 = vsel %vm3092, %v4988, 0.0
    %v5064 = vsel %vm3093, %v4989, 0.0
    %v5065 = vsel %vm3094, %v4990, 0.0
    %v5066 = vsel %vm3095, %v4991, 0.0
    %v5067 = vsel %vm3096, %v4992, 0.0
    %v5068 = vsel %vm3097, %v4993, 0.0
    %v5069 = vsel %vm3098, %v4994, 0.0
    %v5070 = vsel %vm3099, %v4995, 0.0
    %v5071 = vsel %vm3100, %v4996, 0.0
    %v5072 = vsel %vm3101, %v4997, 0.0
    %v5073 = vsel %vm3102, %v4998, 0.0
    %v5074 = vsel %vm3103, %v4999, 0.0
    %v5075 = vsel %vm3104, %v5000, 0.0
    %v5076 = vsel %vm3105, %v5001, 0.0
    %v5077 = vsel %vm3106, %v5002, 0.0
    %v5078 = vsel %vm3107, %v5003, 0.0
    %v5079 = vsel %vm3108, %v5004, 0.0
    %v5080 = vsel %vm3109, %v5005, 0.0
    %v5081 = vsel %vm3110, %v5006, 0.0
    %v5082 = vsel %vm3111, %v5007, 0.0
    %v5083 = vsel %vm3112, %v5008, 0.0
    %v5084 = vsel %vm3113, %v5009, 0.0
    %v5085 = vsel %vm3114, %v5010, 0.0
    %v5086 = vsel %vm3115, %v5011, 0.0
    %v5087 = vsel %vm3116, %v5012, 0.0
    %v5088 = vsel %vm3117, %v5013, 0.0
    %v5089 = vsel %vm3118, %v5014, 0.0
    %v5090 = vld [vmem:[#allocation4] sm:$0x1]
    %vm5091 = vcmask 523264
    %v5092 = vsel %vm5091, %v5015, 0.0
    %v5093 = vsel %vm5091, %v5016, 0.0
    %v5094 = vadd.f32 %v5092, %v5093
    %v5095 = vsel %vm5091, %v5017, 0.0
    %v5096 = vadd.f32 %v5094, %v5095
    %v5097 = vsel %vm5091, %v5018, 0.0
    %v5098 = vadd.f32 %v5096, %v5097
    %v5099 = vsel %vm5091, %v5019, 0.0
    %v5100 = vadd.f32 %v5098, %v5099
    %v5101 = vsel %vm5091, %v5020, 0.0
    %v5102 = vadd.f32 %v5100, %v5101
    %v5103 = vsel %vm5091, %v5021, 0.0
    %v5104 = vadd.f32 %v5102, %v5103
    %v5105 = vsel %vm5091, %v5022, 0.0
    %v5106 = vadd.f32 %v5104, %v5105
    %v5107 = vsel %vm5091, %v5023, 0.0
    %v5108 = vadd.f32 %v5106, %v5107
    %v5109 = vsel %vm5091, %v5024, 0.0
    %v5110 = vadd.f32 %v5108, %v5109
    %v5111 = vsel %vm5091, %v5025, 0.0
    %v5112 = vadd.f32 %v5110, %v5111
    %v5113 = vsel %vm5091, %v5026, 0.0
    %v5114 = vadd.f32 %v5112, %v5113
    %v5115 = vsel %vm5091, %v5027, 0.0
    %v5116 = vadd.f32 %v5114, %v5115
    %v5117 = vsel %vm5091, %v5028, 0.0
    %v5118 = vadd.f32 %v5116, %v5117
    %v5119 = vsel %vm5091, %v5029, 0.0
    %v5120 = vadd.f32 %v5118, %v5119
    %v5121 = vsel %vm5091, %v5030, 0.0
    %v5122 = vadd.f32 %v5120, %v5121
    %v5123 = vsel %vm5091, %v5031, 0.0
    %v5124 = vadd.f32 %v5122, %v5123
    %v5125 = vsel %vm5091, %v5032, 0.0
    %v5126 = vadd.f32 %v5124, %v5125
    %v5127 = vsel %vm5091, %v5033, 0.0
    %v5128 = vadd.f32 %v5126, %v5127
    %v5129 = vsel %vm5091, %v5034, 0.0
    %v5130 = vadd.f32 %v5128, %v5129
    %v5131 = vsel %vm5091, %v5035, 0.0
    %v5132 = vadd.f32 %v5130, %v5131
    %v5133 = vsel %vm5091, %v5036, 0.0
    %v5134 = vadd.f32 %v5132, %v5133
    %v5135 = vsel %vm5091, %v5037, 0.0
    %v5136 = vadd.f32 %v5134, %v5135
    %v5137 = vsel %vm5091, %v5038, 0.0
    %v5138 = vadd.f32 %v5136, %v5137
    %v5139 = vsel %vm5091, %v5039, 0.0
    %v5140 = vadd.f32 %v5138, %v5139
    %v5141 = vsel %vm5091, %v5040, 0.0
    %v5142 = vadd.f32 %v5140, %v5141
    %v5143 = vsel %vm5091, %v5041, 0.0
    %v5144 = vadd.f32 %v5142, %v5143
    %v5145 = vsel %vm5091, %v5042, 0.0
    %v5146 = vadd.f32 %v5144, %v5145
    %v5147 = vsel %vm5091, %v5043, 0.0
    %v5148 = vadd.f32 %v5146, %v5147
    %v5149 = vsel %vm5091, %v5044, 0.0
    %v5150 = vadd.f32 %v5148, %v5149
    %v5151 = vsel %vm5091, %v5045, 0.0
    %v5152 = vadd.f32 %v5150, %v5151
    %v5153 = vsel %vm5091, %v5046, 0.0
    %v5154 = vadd.f32 %v5152, %v5153
    %v5155 = vsel %vm5091, %v5047, 0.0
    %v5156 = vadd.f32 %v5154, %v5155
    %v5157 = vsel %vm5091, %v5048, 0.0
    %v5158 = vadd.f32 %v5156, %v5157
    %v5159 = vsel %vm5091, %v5049, 0.0
    %v5160 = vadd.f32 %v5158, %v5159
    %v5161 = vsel %vm5091, %v5050, 0.0
    %v5162 = vadd.f32 %v5160, %v5161
    %v5163 = vsel %vm5091, %v5051, 0.0
    %v5164 = vadd.f32 %v5162, %v5163
    %v5165 = vsel %vm5091, %v5052, 0.0
    %v5166 = vadd.f32 %v5164, %v5165
    %v5167 = vsel %vm5091, %v5053, 0.0
    %v5168 = vadd.f32 %v5166, %v5167
    %v5169 = vsel %vm5091, %v5054, 0.0
    %v5170 = vadd.f32 %v5168, %v5169
    %v5171 = vsel %vm5091, %v5055, 0.0
    %v5172 = vadd.f32 %v5170, %v5171
    %v5173 = vsel %vm5091, %v5056, 0.0
    %v5174 = vadd.f32 %v5172, %v5173
    %v5175 = vsel %vm5091, %v5057, 0.0
    %v5176 = vadd.f32 %v5174, %v5175
    %v5177 = vsel %vm5091, %v5058, 0.0
    %v5178 = vadd.f32 %v5176, %v5177
    %v5179 = vsel %vm5091, %v5059, 0.0
    %v5180 = vadd.f32 %v5178, %v5179
    %v5181 = vsel %vm5091, %v5060, 0.0
    %v5182 = vadd.f32 %v5180, %v5181
    %v5183 = vsel %vm5091, %v5061, 0.0
    %v5184 = vadd.f32 %v5182, %v5183
    %v5185 = vsel %vm5091, %v5062, 0.0
    %v5186 = vadd.f32 %v5184, %v5185
    %v5187 = vsel %vm5091, %v5063, 0.0
    %v5188 = vadd.f32 %v5186, %v5187
    %v5189 = vsel %vm5091, %v5064, 0.0
    %v5190 = vadd.f32 %v5188, %v5189
    %v5191 = vsel %vm5091, %v5065, 0.0
    %v5192 = vadd.f32 %v5190, %v5191
    %v5193 = vsel %vm5091, %v5066, 0.0
    %v5194 = vadd.f32 %v5192, %v5193
    %v5195 = vsel %vm5091, %v5067, 0.0
    %v5196 = vadd.f32 %v5194, %v5195
    %v5197 = vsel %vm5091, %v5068, 0.0
    %v5198 = vadd.f32 %v5196, %v5197
    %v5199 = vsel %vm5091, %v5069, 0.0
    %v5200 = vadd.f32 %v5198, %v5199
    %v5201 = vsel %vm5091, %v5070, 0.0
    %v5202 = vadd.f32 %v5200, %v5201
    %v5203 = vsel %vm5091, %v5071, 0.0
    %v5204 = vadd.f32 %v5202, %v5203
    %v5205 = vsel %vm5091, %v5072, 0.0
    %v5206 = vadd.f32 %v5204, %v5205
    %v5207 = vsel %vm5091, %v5073, 0.0
    %v5208 = vadd.f32 %v5206, %v5207
    %v5209 = vsel %vm5091, %v5074, 0.0
    %v5210 = vadd.f32 %v5208, %v5209
    %v5211 = vsel %vm5091, %v5075, 0.0
    %v5212 = vadd.f32 %v5210, %v5211
    %v5213 = vsel %vm5091, %v5076, 0.0
    %v5214 = vadd.f32 %v5212, %v5213
    %v5215 = vsel %vm5091, %v5077, 0.0
    %v5216 = vadd.f32 %v5214, %v5215
    %v5217 = vsel %vm5091, %v5078, 0.0
    %v5218 = vadd.f32 %v5216, %v5217
    %v5219 = vsel %vm5091, %v5079, 0.0
    %v5220 = vadd.f32 %v5218, %v5219
    %v5221 = vsel %vm5091, %v5080, 0.0
    %v5222 = vadd.f32 %v5220, %v5221
    %v5223 = vsel %vm5091, %v5081, 0.0
    %v5224 = vadd.f32 %v5222, %v5223
    %v5225 = vsel %vm5091, %v5082, 0.0
    %v5226 = vadd.f32 %v5224, %v5225
    %v5227 = vsel %vm5091, %v5083, 0.0
    %v5228 = vadd.f32 %v5226, %v5227
    %v5229 = vsel %vm5091, %v5084, 0.0
    %v5230 = vadd.f32 %v5228, %v5229
    %v5231 = vsel %vm5091, %v5085, 0.0
    %v5232 = vadd.f32 %v5230, %v5231
    %v5233 = vsel %vm5091, %v5086, 0.0
    %v5234 = vadd.f32 %v5232, %v5233
    %v5235 = vsel %vm5091, %v5087, 0.0
    %v5236 = vadd.f32 %v5234, %v5235
    %v5237 = vsel %vm5091, %v5088, 0.0
    %v5238 = vadd.f32 %v5236, %v5237
    %v5239 = vsel %vm5091, %v5089, 0.0
    %v5240 = vadd.f32 %v5238, %v5239
    %v5241 = vrot.slane %v5240, 4
    %v5242 = vadd.f32 %v5240, %v5241
    %v5243 = vrot.slane %v5242, 2
    %v5244 = vadd.f32 %v5242, %v5243
    %v5245 = vrot.slane %v5244, 1
    %v5246 = vadd.f32 %v5244, %v5245
    %v5247 = vadd.f32 %v5090, %v5246
    %vm5248 = vcmask 516096
    %5249 = vst.msk [vmem:[#allocation4] sm:$0x1] %vm5248, %v5247
  $region37: #{_fused_losses_impl.1} parent=0 // pred_fallthru
    _
  // Predicated region
  $region38: #{_fused_losses_impl.1} parent=0 // pred_check
    %p5250 = pneg %p217
  $region39: #{_fused_losses_impl.1} parent=0 // pred_check_branch
    %5252 = sbr.rel (%p5250) target = $region41
  $region40: #{_fused_losses_impl.1} parent=0 // pred_region
    %v5253 = vlaneseq
    %v5254 = vand.u32 %v5253, 127
    %v5255 = vld [vmem:[#allocation2] sm:$0x1]
    %vm5256 = vcmask 778240
    %v5257 = vsel %vm5256, %v5255, 0.0
    %5258 = vadd.xlane.f32.xlu0 %v5257
    %v5259 = vpop.xlane.xlu0 %5258
    %v5260 = vrot.slane %v5259, 4
    %v5261 = vadd.f32 %v5259, %v5260
    %v5262 = vrot.slane %v5261, 2
    %v5263 = vadd.f32 %v5261, %v5262
    %v5264 = vrot.slane %v5263, 1
    %v5265 = vadd.f32 %v5263, %v5264
    %s5266 = vtos %v5265
    %vm5267 = vcmp.eq.s32.totalorder %v5254, 0
    %v5268 = vstv %s5266
    %v5269 = vsel %vm5267, %v5268, 0.0
    %v5270 = vld [vmem:[#allocation3] sm:$0x1]
    %v5271 = vadd.f32 %v5270, 0.0
    %s5272 = vtos %v5271
    %vm5273 = vcmp.eq.s32.totalorder %v5254, 1
    %v5274 = vstv %s5272
    %v5275 = vsel %vm5273, %v5274, %v5269
    %v5276 = vld [vmem:[#allocation4] sm:$0x1]
    %vm5277 = vcmask 516096
    %v5278 = vsel %vm5277, %v5276, 0.0
    %5279 = vadd.xlane.f32.xlu0 %v5278
    %v5280 = vpop.xlane.xlu0 %5279
    %v5281 = vrot.slane %v5280, 4
    %v5282 = vadd.f32 %v5280, %v5281
    %v5283 = vrot.slane %v5282, 2
    %v5284 = vadd.f32 %v5282, %v5283
    %v5285 = vrot.slane %v5284, 1
    %v5286 = vadd.f32 %v5284, %v5285
    %s5287 = vtos %v5286
    %vm5288 = vcmp.eq.s32.totalorder %v5254, 2
    %v5289 = vstv %s5287
    %v5290 = vsel %vm5288, %v5289, %v5275
    %5291 = vst [vmem:[%s6] sm:$0xff] %v5290
  $region41: #{_fused_losses_impl.1} parent=0 // pred_fallthru
    _
  // Predicated region
  $region42: #{_fused_losses_impl.1} parent=0 // pred_check
    _
  $region43: #{_fused_losses_impl.1} parent=0 // pred_check_branch
    %5293 = sbr.rel (0) target = $region45
  $region44: #{_fused_losses_impl.1} parent=0 // pred_region
    _
  $region45: #{_fused_losses_impl.1} parent=0 // pred_fallthru
    _
  // Predicated region
  $region46: #{_fused_losses_impl.1} parent=0 // pred_check
    _
  $region47: #{_fused_losses_impl.1} parent=0 // pred_check_branch
    %5295 = sbr.rel (0) target = $region49
  $region48: #{_fused_losses_impl.1} parent=0 // pred_region
    _
  $region49: #{_fused_losses_impl.1} parent=0 // pred_fallthru
    _

</llo_original>
